<compile_context>
chip_gen: v5e
topology: v5e:2x2
jax: 0.10.0
libtpu: 0.0.40
codegen_flags: <defaults>
</compile_context>

<pallas_src>
import functools

import jax
import jax.numpy as jnp
from jax.experimental import pallas as pl
from jax.experimental.pallas import tpu as pltpu

LANE = 128  # TPU lane width; ragged feature dims are padded up to this.


def _round_up(n, m):
    return (n + m - 1) // m * m


# --------------------------- Pallas kernel ------------------------------- #
def _generator_kernel(x_ref,
                      w1_ref, b1_ref,
                      w2_ref, b2_ref, g2_ref, be2_ref,
                      w3_ref, b3_ref, g3_ref, be3_ref,
                      w4_ref, b4_ref,
                      out_ref):
    eps = jnp.float32(0.8)
    slope = jnp.float32(0.2)

    def leaky_relu(h):
        return jnp.where(h > 0, h, slope * h)

    def batchnorm_train(h, gamma, beta):
        # training-mode BatchNorm1d, single-pass stats: var = E[h^2] - mean^2
        mean = jnp.mean(h, axis=0, keepdims=True)
        mean_sq = jnp.mean(h * h, axis=0, keepdims=True)
        var = mean_sq - mean * mean
        return (h - mean) * jax.lax.rsqrt(var + eps) * gamma + beta

    def dot_bf16(a, w_ref):
        # bf16 MXU operands, f32 accumulation
        return jnp.dot(a.astype(jnp.bfloat16), w_ref[...],
                       preferred_element_type=jnp.float32)

    x = x_ref[...]  # already bf16, K padded to 128

    # block 1: Linear -> LeakyReLU (no BN)
    h1 = leaky_relu(dot_bf16(x, w1_ref) + b1_ref[...])

    # block 2: Linear -> BatchNorm1d(eps=0.8) -> LeakyReLU
    h2 = leaky_relu(batchnorm_train(dot_bf16(h1, w2_ref) + b2_ref[...],
                                    g2_ref[...], be2_ref[...]))

    # block 3: Linear -> BatchNorm1d(eps=0.8) -> LeakyReLU
    h3 = leaky_relu(batchnorm_train(dot_bf16(h2, w3_ref) + b3_ref[...],
                                    g3_ref[...], be3_ref[...]))

    # output: Linear -> Tanh (output slab lane-padded to a multiple of 128)
    out_ref[...] = jnp.tanh(dot_bf16(h3, w4_ref) + b4_ref[...])


@functools.partial(jax.jit, static_argnames=("feature_size",))
def generator_forward(gen_input, kparams, *, feature_size):
    """gen_input: (B, latent_dim + nb_classes) f32. Returns (B, feature_size) f32."""
    B, d_in = gen_input.shape
    d_in_pad = kparams["w1"].shape[0]   # 128 (padded K of layer 1)
    feat_pad = kparams["w4"].shape[1]   # feature_size padded to multiple of 128

    # lane-dense bf16 input slab: pad the ragged K dim (latent+classes) to 128
    x = jnp.pad(gen_input.astype(jnp.bfloat16), ((0, 0), (0, d_in_pad - d_in)))

    # Rough resident-VMEM estimate: the whole batch is one block because BN
    # needs full-batch statistics.
    # TODO(synk): batch-tiled grid + two-pass BN stats once this limit is hit.
    approx_vmem = (B * d_in_pad * 2 + B * feat_pad * 4          # x (bf16) + out (f32)
                   + 2 * B * (128 + 256 + 512) * 4              # f32 + bf16 intermediates
                   + 2 * 1024 * 1024)                           # weights + headroom
    assert approx_vmem < 24 * 1024 * 1024, "batch too large for single-block kernel"

    vmem_spec = pl.BlockSpec(memory_space=pltpu.MemorySpace.VMEM)
    args = (x,
            kparams["w1"], kparams["b1"],
            kparams["w2"], kparams["b2"], kparams["g2"], kparams["be2"],
            kparams["w3"], kparams["b3"], kparams["g3"], kparams["be3"],
            kparams["w4"], kparams["b4"])

    out_pad = pl.pallas_call(
        _generator_kernel,
        out_shape=jax.ShapeDtypeStruct((B, feat_pad), jnp.float32),
        in_specs=[vmem_spec] * len(args),
        out_specs=vmem_spec,
        compiler_params=pltpu.CompilerParams(vmem_limit_bytes=32 * 1024 * 1024),
    )(*args)
    return out_pad[:, :feature_size]


# --------------------------- parameter setup ----------------------------- #
def init_params(key, latent_dim, nb_classes, feature_size):
    """PyTorch-equivalent f32 params (Linear default init; BN gamma=1, beta=0)."""
    d0 = latent_dim + nb_classes
    dims = [(d0, 128), (128, 256), (256, 512), (512, feature_size)]
    keys = jax.random.split(key, 2 * len(dims))
    params = {}
    for idx, (din, dout) in enumerate(dims, start=1):
        bound = 1.0 / float(din) ** 0.5
        params[f"w{idx}"] = jax.random.uniform(keys[2 * idx - 2], (din, dout),
                                               minval=-bound, maxval=bound,
                                               dtype=jnp.float32)
        params[f"b{idx}"] = jax.random.uniform(keys[2 * idx - 1], (1, dout),
                                               minval=-bound, maxval=bound,
                                               dtype=jnp.float32)
    params["g2"] = jnp.ones((1, 256), jnp.float32)
    params["be2"] = jnp.zeros((1, 256), jnp.float32)
    params["g3"] = jnp.ones((1, 512), jnp.float32)
    params["be3"] = jnp.zeros((1, 512), jnp.float32)
    return params


def prepare_kernel_params(params, d_in, feature_size):
    """Pad ragged dims to 128 lanes and cast matmul weights to bf16."""
    d_in_pad = _round_up(d_in, LANE)
    feat_pad = _round_up(feature_size, LANE)
    kp = {}
    w1 = jnp.zeros((d_in_pad, 128), jnp.float32).at[:d_in, :].set(params["w1"])
    kp["w1"] = w1.astype(jnp.bfloat16)
    kp["b1"] = params["b1"]
    kp["w2"] = params["w2"].astype(jnp.bfloat16)
    kp["b2"] = params["b2"]
    kp["g2"], kp["be2"] = params["g2"], params["be2"]
    kp["w3"] = params["w3"].astype(jnp.bfloat16)
    kp["b3"] = params["b3"]
    kp["g3"], kp["be3"] = params["g3"], params["be3"]
    w4 = jnp.zeros((512, feat_pad), jnp.float32).at[:, :feature_size].set(params["w4"])
    b4 = jnp.zeros((1, feat_pad), jnp.float32).at[:, :feature_size].set(params["b4"])
    kp["w4"] = w4.astype(jnp.bfloat16)
    kp["b4"] = b4
    return kp


# --------------------------- references ----------------------------------- #
def reference_forward_f32(gen_input, params):
    """Exact PyTorch-semantics reference, all f32."""
    eps = 0.8

    def lrelu(h):
        return jnp.where(h > 0, h, 0.2 * h)

    def bn(h, g, b):
        m = jnp.mean(h, axis=0, keepdims=True)
        v = jnp.mean((h - m) ** 2, axis=0, keepdims=True)
        return (h - m) / jnp.sqrt(v + eps) * g + b

    h = lrelu(gen_input @ params["w1"] + params["b1"])
    h = lrelu(bn(h @ params["w2"] + params["b2"], params["g2"], params["be2"]))
    h = lrelu(bn(h @ params["w3"] + params["b3"], params["g3"], params["be3"]))
    return jnp.tanh(h @ params["w4"] + params["b4"])


def reference_forward_bf16(gen_input, kparams, d_in, feature_size):
    """Reference using the same bf16 MXU operands / padding as the kernel."""
    eps = 0.8

    def lrelu(h):
        return jnp.where(h > 0, h, 0.2 * h)

    def bn(h, g, b):
        m = jnp.mean(h, axis=0, keepdims=True)
        v = jnp.mean((h - m) ** 2, axis=0, keepdims=True)
        return (h - m) * jax.lax.rsqrt(v + eps) * g + b

    def mm(a, w):
        return jnp.dot(a.astype(jnp.bfloat16), w, preferred_element_type=jnp.float32)

    d_in_pad = kparams["w1"].shape[0]
    x = jnp.pad(gen_input.astype(jnp.bfloat16), ((0, 0), (0, d_in_pad - d_in)))
    h = lrelu(mm(x, kparams["w1"]) + kparams["b1"])
    h = lrelu(bn(mm(h, kparams["w2"]) + kparams["b2"], kparams["g2"], kparams["be2"]))
    h = lrelu(bn(mm(h, kparams["w3"]) + kparams["b3"], kparams["g3"], kparams["be3"]))
    return jnp.tanh(mm(h, kparams["w4"]) + kparams["b4"])[:, :feature_size]


# ------------------------------- main ------------------------------------ #
if __name__ == "__main__":
    latent_dim = 32
    nb_classes = 8
    feature_size = 64
    batch = 256   # >= 256 rows so each MXU pass is full (v6e/v7x); >=128 for v5e

    key = jax.random.PRNGKey(0)
    k_params, k_emb, k_noise, k_labels = jax.random.split(key, 4)

    params = init_params(k_params, latent_dim, nb_classes, feature_size)
    kparams = prepare_kernel_params(params, latent_dim + nb_classes, feature_size)

    # Embedding table (nb_classes, nb_classes), PyTorch default init N(0, 1)
    emb_table = jax.random.normal(k_emb, (nb_classes, nb_classes), jnp.float32)
    noise = jax.random.normal(k_noise, (batch, latent_dim), jnp.float32)
    labels = jax.random.randint(k_labels, (batch,), 0, nb_classes, jnp.int32)

    # glue (plain JAX): gen_input = torch.cat((label_emb(labels), noise), -1)
    # TODO(synk): fuse embedding gather + concat into the kernel via
    # PrefetchScalarGridSpec once the batch is tiled into a grid.
    gen_input = jnp.concatenate([emb_table[labels], noise], axis=-1)

    img = generator_forward(gen_input, kparams, feature_size=feature_size)
    img = jax.block_until_ready(img)
    assert img.shape == (batch, feature_size)

    # tight check vs. a JAX reference using identical bf16 MXU operands
    ref_bf16 = reference_forward_bf16(gen_input, kparams,
                                      latent_dim + nb_classes, feature_size)
    err_bf16 = float(jnp.max(jnp.abs(img - ref_bf16)))
    assert err_bf16 < 5e-3, f"mismatch vs bf16-matched reference: {err_bf16}"

    # loose sanity check vs. the exact f32 reference (bf16 quantization bound)
    ref_f32 = reference_forward_f32(gen_input, params)
    err_f32 = float(jnp.max(jnp.abs(img - ref_f32)))
    assert err_f32 < 1e-1, f"mismatch vs f32 reference: {err_f32}"

    print("KERNEL_OK")
</pallas_src>

<mosaic_0001>
module attributes {stable_mosaic.version = 11 : i64} {
  func.func @_generator_kernel(%arg0: memref<256x128xbf16, #tpu.memory_space<vmem>>, %arg1: memref<128x128xbf16, #tpu.memory_space<vmem>>, %arg2: memref<1x128xf32, #tpu.memory_space<vmem>>, %arg3: memref<128x256xbf16, #tpu.memory_space<vmem>>, %arg4: memref<1x256xf32, #tpu.memory_space<vmem>>, %arg5: memref<1x256xf32, #tpu.memory_space<vmem>>, %arg6: memref<1x256xf32, #tpu.memory_space<vmem>>, %arg7: memref<256x512xbf16, #tpu.memory_space<vmem>>, %arg8: memref<1x512xf32, #tpu.memory_space<vmem>>, %arg9: memref<1x512xf32, #tpu.memory_space<vmem>>, %arg10: memref<1x512xf32, #tpu.memory_space<vmem>>, %arg11: memref<512x128xbf16, #tpu.memory_space<vmem>>, %arg12: memref<1x128xf32, #tpu.memory_space<vmem>>, %arg13: memref<256x128xf32, #tpu.memory_space<vmem>>) attributes {dimension_semantics = [], scalar_prefetch = 0 : i64, scratch_operands = 0 : i64, tpu.core_type = #tpu.core_type<tc>} {
    %c0 = arith.constant 0 : index
    %c0_0 = arith.constant 0 : index
    %0 = vector.load %arg0[%c0, %c0_0] : memref<256x128xbf16, #tpu.memory_space<vmem>>, vector<256x128xbf16>
    %c0_1 = arith.constant 0 : index
    %c0_2 = arith.constant 0 : index
    %1 = vector.load %arg1[%c0_1, %c0_2] : memref<128x128xbf16, #tpu.memory_space<vmem>>, vector<128x128xbf16>
    %cst = arith.constant dense<0.000000e+00> : vector<256x128xf32>
    %2 = tpu.matmul %0, %1, %cst {dimension_numbers = #tpu.dot_dimension_numbers<[1], [0], [0], [1], [0, 0, 1, 1], [], []>} : vector<256x128xbf16>, vector<128x128xbf16>, vector<256x128xf32> -> vector<256x128xf32>
    %c0_3 = arith.constant 0 : index
    %c0_4 = arith.constant 0 : index
    %3 = vector.load %arg2[%c0_3, %c0_4] : memref<1x128xf32, #tpu.memory_space<vmem>>, vector<1x128xf32>
    %4 = vector.broadcast %3 : vector<1x128xf32> to vector<256x128xf32>
    %5 = arith.addf %2, %4 : vector<256x128xf32>
    %cst_5 = arith.constant 0.000000e+00 : f32
    %6 = vector.broadcast %cst_5 : f32 to vector<256x128xf32>
    %7 = arith.cmpf ogt, %5, %6 : vector<256x128xf32>
    %cst_6 = arith.constant 2.000000e-01 : f32
    %8 = vector.broadcast %cst_6 : f32 to vector<256x128xf32>
    %9 = arith.mulf %8, %5 : vector<256x128xf32>
    %10 = arith.select %7, %5, %9 : vector<256x128xi1>, vector<256x128xf32>
    %11 = arith.truncf %10 : vector<256x128xf32> to vector<256x128xbf16>
    %c0_7 = arith.constant 0 : index
    %c0_8 = arith.constant 0 : index
    %12 = vector.load %arg3[%c0_7, %c0_8] : memref<128x256xbf16, #tpu.memory_space<vmem>>, vector<128x256xbf16>
    %cst_9 = arith.constant dense<0.000000e+00> : vector<256x256xf32>
    %13 = tpu.matmul %11, %12, %cst_9 {dimension_numbers = #tpu.dot_dimension_numbers<[1], [0], [0], [1], [0, 0, 1, 1], [], []>} : vector<256x128xbf16>, vector<128x256xbf16>, vector<256x256xf32> -> vector<256x256xf32>
    %c0_10 = arith.constant 0 : index
    %c0_11 = arith.constant 0 : index
    %14 = vector.load %arg4[%c0_10, %c0_11] : memref<1x256xf32, #tpu.memory_space<vmem>>, vector<1x256xf32>
    %15 = vector.broadcast %14 : vector<1x256xf32> to vector<256x256xf32>
    %16 = arith.addf %13, %15 : vector<256x256xf32>
    %c0_12 = arith.constant 0 : index
    %c0_13 = arith.constant 0 : index
    %17 = vector.load %arg5[%c0_12, %c0_13] : memref<1x256xf32, #tpu.memory_space<vmem>>, vector<1x256xf32>
    %c0_14 = arith.constant 0 : index
    %c0_15 = arith.constant 0 : index
    %18 = vector.load %arg6[%c0_14, %c0_15] : memref<1x256xf32, #tpu.memory_space<vmem>>, vector<1x256xf32>
    %cst_16 = arith.constant dense<0.000000e+00> : vector<256xf32>
    %19 = vector.multi_reduction <add>, %16, %cst_16 [0] : vector<256x256xf32> to vector<256xf32>
    %20 = vector.shape_cast %19 : vector<256xf32> to vector<1x256xf32>
    %cst_17 = arith.constant 2.560000e+02 : f32
    %21 = vector.broadcast %cst_17 : f32 to vector<1x256xf32>
    %22 = arith.divf %20, %21 : vector<1x256xf32>
    %23 = arith.mulf %16, %16 : vector<256x256xf32>
    %cst_18 = arith.constant dense<0.000000e+00> : vector<256xf32>
    %24 = vector.multi_reduction <add>, %23, %cst_18 [0] : vector<256x256xf32> to vector<256xf32>
    %25 = vector.shape_cast %24 : vector<256xf32> to vector<1x256xf32>
    %cst_19 = arith.constant 2.560000e+02 : f32
    %26 = vector.broadcast %cst_19 : f32 to vector<1x256xf32>
    %27 = arith.divf %25, %26 : vector<1x256xf32>
    %28 = arith.mulf %22, %22 : vector<1x256xf32>
    %29 = arith.subf %27, %28 : vector<1x256xf32>
    %30 = vector.broadcast %22 : vector<1x256xf32> to vector<256x256xf32>
    %31 = arith.subf %16, %30 : vector<256x256xf32>
    %cst_20 = arith.constant 8.000000e-01 : f32
    %32 = vector.broadcast %cst_20 : f32 to vector<1x256xf32>
    %33 = arith.addf %29, %32 : vector<1x256xf32>
    %34 = math.rsqrt %33 : vector<1x256xf32>
    %35 = vector.broadcast %34 : vector<1x256xf32> to vector<256x256xf32>
    %36 = arith.mulf %31, %35 : vector<256x256xf32>
    %37 = vector.broadcast %17 : vector<1x256xf32> to vector<256x256xf32>
    %38 = arith.mulf %36, %37 : vector<256x256xf32>
    %39 = vector.broadcast %18 : vector<1x256xf32> to vector<256x256xf32>
    %40 = arith.addf %38, %39 : vector<256x256xf32>
    %cst_21 = arith.constant 0.000000e+00 : f32
    %41 = vector.broadcast %cst_21 : f32 to vector<256x256xf32>
    %42 = arith.cmpf ogt, %40, %41 : vector<256x256xf32>
    %cst_22 = arith.constant 2.000000e-01 : f32
    %43 = vector.broadcast %cst_22 : f32 to vector<256x256xf32>
    %44 = arith.mulf %43, %40 : vector<256x256xf32>
    %45 = arith.select %42, %40, %44 : vector<256x256xi1>, vector<256x256xf32>
    %46 = arith.truncf %45 : vector<256x256xf32> to vector<256x256xbf16>
    %c0_23 = arith.constant 0 : index
    %c0_24 = arith.constant 0 : index
    %47 = vector.load %arg7[%c0_23, %c0_24] : memref<256x512xbf16, #tpu.memory_space<vmem>>, vector<256x512xbf16>
    %cst_25 = arith.constant dense<0.000000e+00> : vector<256x512xf32>
    %48 = tpu.matmul %46, %47, %cst_25 {dimension_numbers = #tpu.dot_dimension_numbers<[1], [0], [0], [1], [0, 0, 1, 1], [], []>} : vector<256x256xbf16>, vector<256x512xbf16>, vector<256x512xf32> -> vector<256x512xf32>
    %c0_26 = arith.constant 0 : index
    %c0_27 = arith.constant 0 : index
    %49 = vector.load %arg8[%c0_26, %c0_27] : memref<1x512xf32, #tpu.memory_space<vmem>>, vector<1x512xf32>
    %50 = vector.broadcast %49 : vector<1x512xf32> to vector<256x512xf32>
    %51 = arith.addf %48, %50 : vector<256x512xf32>
    %c0_28 = arith.constant 0 : index
    %c0_29 = arith.constant 0 : index
    %52 = vector.load %arg9[%c0_28, %c0_29] : memref<1x512xf32, #tpu.memory_space<vmem>>, vector<1x512xf32>
    %c0_30 = arith.constant 0 : index
    %c0_31 = arith.constant 0 : index
    %53 = vector.load %arg10[%c0_30, %c0_31] : memref<1x512xf32, #tpu.memory_space<vmem>>, vector<1x512xf32>
    %cst_32 = arith.constant dense<0.000000e+00> : vector<512xf32>
    %54 = vector.multi_reduction <add>, %51, %cst_32 [0] : vector<256x512xf32> to vector<512xf32>
    %55 = vector.shape_cast %54 : vector<512xf32> to vector<1x512xf32>
    %cst_33 = arith.constant 2.560000e+02 : f32
    %56 = vector.broadcast %cst_33 : f32 to vector<1x512xf32>
    %57 = arith.divf %55, %56 : vector<1x512xf32>
    %58 = arith.mulf %51, %51 : vector<256x512xf32>
    %cst_34 = arith.constant dense<0.000000e+00> : vector<512xf32>
    %59 = vector.multi_reduction <add>, %58, %cst_34 [0] : vector<256x512xf32> to vector<512xf32>
    %60 = vector.shape_cast %59 : vector<512xf32> to vector<1x512xf32>
    %cst_35 = arith.constant 2.560000e+02 : f32
    %61 = vector.broadcast %cst_35 : f32 to vector<1x512xf32>
    %62 = arith.divf %60, %61 : vector<1x512xf32>
    %63 = arith.mulf %57, %57 : vector<1x512xf32>
    %64 = arith.subf %62, %63 : vector<1x512xf32>
    %65 = vector.broadcast %57 : vector<1x512xf32> to vector<256x512xf32>
    %66 = arith.subf %51, %65 : vector<256x512xf32>
    %cst_36 = arith.constant 8.000000e-01 : f32
    %67 = vector.broadcast %cst_36 : f32 to vector<1x512xf32>
    %68 = arith.addf %64, %67 : vector<1x512xf32>
    %69 = math.rsqrt %68 : vector<1x512xf32>
    %70 = vector.broadcast %69 : vector<1x512xf32> to vector<256x512xf32>
    %71 = arith.mulf %66, %70 : vector<256x512xf32>
    %72 = vector.broadcast %52 : vector<1x512xf32> to vector<256x512xf32>
    %73 = arith.mulf %71, %72 : vector<256x512xf32>
    %74 = vector.broadcast %53 : vector<1x512xf32> to vector<256x512xf32>
    %75 = arith.addf %73, %74 : vector<256x512xf32>
    %cst_37 = arith.constant 0.000000e+00 : f32
    %76 = vector.broadcast %cst_37 : f32 to vector<256x512xf32>
    %77 = arith.cmpf ogt, %75, %76 : vector<256x512xf32>
    %cst_38 = arith.constant 2.000000e-01 : f32
    %78 = vector.broadcast %cst_38 : f32 to vector<256x512xf32>
    %79 = arith.mulf %78, %75 : vector<256x512xf32>
    %80 = arith.select %77, %75, %79 : vector<256x512xi1>, vector<256x512xf32>
    %81 = arith.truncf %80 : vector<256x512xf32> to vector<256x512xbf16>
    %c0_39 = arith.constant 0 : index
    %c0_40 = arith.constant 0 : index
    %82 = vector.load %arg11[%c0_39, %c0_40] : memref<512x128xbf16, #tpu.memory_space<vmem>>, vector<512x128xbf16>
    %cst_41 = arith.constant dense<0.000000e+00> : vector<256x128xf32>
    %83 = tpu.matmul %81, %82, %cst_41 {dimension_numbers = #tpu.dot_dimension_numbers<[1], [0], [0], [1], [0, 0, 1, 1], [], []>} : vector<256x512xbf16>, vector<512x128xbf16>, vector<256x128xf32> -> vector<256x128xf32>
    %c0_42 = arith.constant 0 : index
    %c0_43 = arith.constant 0 : index
    %84 = vector.load %arg12[%c0_42, %c0_43] : memref<1x128xf32, #tpu.memory_space<vmem>>, vector<1x128xf32>
    %85 = vector.broadcast %84 : vector<1x128xf32> to vector<256x128xf32>
    %86 = arith.addf %83, %85 : vector<256x128xf32>
    %87 = math.tanh %86 : vector<256x128xf32>
    %c0_44 = arith.constant 0 : index
    %c0_45 = arith.constant 0 : index
    %88 = vector.load %arg13[%c0_44, %c0_45] : memref<256x128xf32, #tpu.memory_space<vmem>>, vector<256x128xf32>
    tpu.vector_store %arg13[%c0_44, %c0_45], %87 {strides = array<i32>} : memref<256x128xf32, #tpu.memory_space<vmem>>, vector<256x128xf32>,
    return
  }
}

</mosaic_0001>

<llo_original>
// kernel: generator_forward.1
$region0: #{generator_forward.1}
  #allocation0 [shape = 'u32[]', space=smem, size = 0x4, offset = 0x4, fixed_abs, tag = 'smem constant byte address 0x4 - core index']
  #allocation1 [shape = 'u32[72,128]{1,0:T(1,128)}', space=vmem, size = 0x9000, scoped, tag = 'internal scratch']
  %s0 = inlined_call_operand.vmem [shape: bf16[256,128], index: 0, kind: input, shape index: {}]
  %s1 = inlined_call_operand.hbm [shape: bf16[128,128], index: 1, kind: input, shape index: {}]
  %s2 = inlined_call_operand.vmem [shape: f32[1,128], index: 2, kind: input, shape index: {}]
  %s3 = inlined_call_operand.hbm [shape: bf16[128,256], index: 3, kind: input, shape index: {}]
  %s4 = inlined_call_operand.vmem [shape: f32[1,256], index: 4, kind: input, shape index: {}]
  %s5 = inlined_call_operand.vmem [shape: f32[1,256], index: 5, kind: input, shape index: {}]
  %s6 = inlined_call_operand.vmem [shape: f32[1,256], index: 6, kind: input, shape index: {}]
  %s7 = inlined_call_operand.vmem [shape: bf16[256,512], index: 7, kind: input, shape index: {}]
  %s8 = inlined_call_operand.vmem [shape: f32[1,512], index: 8, kind: input, shape index: {}]
  %s9 = inlined_call_operand.vmem [shape: f32[1,512], index: 9, kind: input, shape index: {}]
  %s10 = inlined_call_operand.vmem [shape: f32[1,512], index: 10, kind: input, shape index: {}]
  %s11 = inlined_call_operand.hbm [shape: bf16[512,128], index: 11, kind: input, shape index: {}]
  %s12 = inlined_call_operand.vmem [shape: f32[1,128], index: 12, kind: input, shape index: {}]
  %s13 = inlined_call_operand.vmem [shape: f32[256,128], index: 13, kind: output, shape index: {}]
  %s14 = sld [smem:[#allocation0]]
  $region74: #{generator_forward.1} parent=0
    _
  %s16 = ssub.s32 1, %s14
  %s17 = scalar_select 0, %s16, %s14
  $region1: #{generator_forward.1} parent=0
    #allocation2 [shape = 'u8[32768]{0}', space=vmem, size = 0x8000, scoped, tag = 'input window, operand 1, single buffered']
    #allocation3 [shape = 's32[1]{0}', space=sflag, size = 0x4, scoped, tag = 'scoped memory for generator_forward.1']
    #allocation4 [shape = 'u8[65536]{0}', space=vmem, size = 0x10000, scoped, tag = 'input window, operand 3, single buffered']
    #allocation5 [shape = 's32[1]{0}', space=sflag, size = 0x4, scoped, tag = 'scoped memory for generator_forward.1']
    #allocation6 [shape = 'u8[131072]{0}', space=vmem, size = 0x20000, scoped, tag = 'input window, operand 11, single buffered']
    %18 = vsyncpa [#allocation3], 0
    %19 = vsyncpa [#allocation5], 0
    // Predicated region
    $region2: #{generator_forward.1} parent=1 // pred_check
      _
    $region3: #{generator_forward.1} parent=1 // pred_check_branch
      %21 = sbr.rel (0) target = $region5
    $region4: #{generator_forward.1} parent=1 // pred_region
      _
    $region5: #{generator_forward.1} parent=1 // pred_fallthru
      _
    // Predicated region
    $region6: #{generator_forward.1} parent=1 // pred_check
      _
    $region7: #{generator_forward.1} parent=1 // pred_check_branch
      %23 = sbr.rel (0) target = $region9
    $region8: #{generator_forward.1} parent=1 // pred_region
      %25 = vsyncadd [#allocation3], 0
      %s26 = sshll.u32 %s1, 4
      %s27 = int_to_ptr.hbm [resolvable:$true] %s26
      %s28 = sshll.u32 [#allocation2], 4
      %s29 = int_to_ptr.vmem [resolvable:$true] %s28
      %34 = dma.hbm_to_vmem [thread:$0]  %s27, 1024, %s29, [#allocation3], 64, 64, 4
    $region9: #{generator_forward.1} parent=1 // pred_fallthru
      _
    // Predicated region
    $region10: #{generator_forward.1} parent=1 // pred_check
      _
    $region11: #{generator_forward.1} parent=1 // pred_check_branch
      %36 = sbr.rel (0) target = $region13
    $region12: #{generator_forward.1} parent=1 // pred_region
      _
    $region13: #{generator_forward.1} parent=1 // pred_fallthru
      _
    // Predicated region
    $region14: #{generator_forward.1} parent=1 // pred_check
      _
    $region15: #{generator_forward.1} parent=1 // pred_check_branch
      %38 = sbr.rel (0) target = $region17
    $region16: #{generator_forward.1} parent=1 // pred_region
      %40 = vsyncadd [#allocation5], 0
      %s41 = sshll.u32 %s3, 4
      %s42 = int_to_ptr.hbm [resolvable:$true] %s41
      %s43 = sshll.u32 [#allocation4], 4
      %s44 = int_to_ptr.vmem [resolvable:$true] %s43
      %49 = dma.hbm_to_vmem [thread:$0]  %s42, 2048, %s44, [#allocation5], 128, 128, 8
    $region17: #{generator_forward.1} parent=1 // pred_fallthru
      _
    // Predicated region
    $region18: #{generator_forward.1} parent=1 // pred_check
      _
    $region19: #{generator_forward.1} parent=1 // pred_check_branch
      %51 = sbr.rel (0) target = $region21
    $region20: #{generator_forward.1} parent=1 // pred_region
      _
    $region21: #{generator_forward.1} parent=1 // pred_fallthru
      _
    // Predicated region
    $region22: #{generator_forward.1} parent=1 // pred_check
      _
    $region23: #{generator_forward.1} parent=1 // pred_check_branch
      %53 = sbr.rel (0) target = $region25
    $region24: #{generator_forward.1} parent=1 // pred_region
      _
    $region25: #{generator_forward.1} parent=1 // pred_fallthru
      _
    // Predicated region
    $region26: #{generator_forward.1} parent=1 // pred_check
      _
    $region27: #{generator_forward.1} parent=1 // pred_check_branch
      %55 = sbr.rel (0) target = $region29
    $region28: #{generator_forward.1} parent=1 // pred_region
      _
    $region29: #{generator_forward.1} parent=1 // pred_fallthru
      _
    // Predicated region
    $region30: #{generator_forward.1} parent=1 // pred_check
      _
    $region31: #{generator_forward.1} parent=1 // pred_check_branch
      %57 = sbr.rel (0) target = $region33
    $region32: #{generator_forward.1} parent=1 // pred_region
      _
    $region33: #{generator_forward.1} parent=1 // pred_fallthru
      _
    // Predicated region
    $region34: #{generator_forward.1} parent=1 // pred_check
      _
    $region35: #{generator_forward.1} parent=1 // pred_check_branch
      %59 = sbr.rel (0) target = $region37
    $region36: #{generator_forward.1} parent=1 // pred_region
      _
    $region37: #{generator_forward.1} parent=1 // pred_fallthru
      _
    // Predicated region
    $region38: #{generator_forward.1} parent=1 // pred_check
      _
    $region39: #{generator_forward.1} parent=1 // pred_check_branch
      %61 = sbr.rel (0) target = $region41
    $region40: #{generator_forward.1} parent=1 // pred_region
      _
    $region41: #{generator_forward.1} parent=1 // pred_fallthru
      _
    // Predicated region
    $region42: #{generator_forward.1} parent=1 // pred_check
      _
    $region43: #{generator_forward.1} parent=1 // pred_check_branch
      %63 = sbr.rel (0) target = $region45
    $region44: #{generator_forward.1} parent=1 // pred_region
      _
    $region45: #{generator_forward.1} parent=1 // pred_fallthru
      _
    // Predicated region
    $region46: #{generator_forward.1} parent=1 // pred_check
      _
    $region47: #{generator_forward.1} parent=1 // pred_check_branch
      %65 = sbr.rel (0) target = $region49
    $region48: #{generator_forward.1} parent=1 // pred_region
      %67 = vsyncadd [#allocation5], 0
      %s68 = sshll.u32 %s11, 4
      %s69 = int_to_ptr.hbm [resolvable:$true] %s68
      %s70 = sshll.u32 [#allocation6], 4
      %s71 = int_to_ptr.vmem [resolvable:$true] %s70
      %76 = dma.hbm_to_vmem [thread:$0]  %s69, 4096, %s71, [#allocation5], 64, 64, 4
    $region49: #{generator_forward.1} parent=1 // pred_fallthru
      _
    // Predicated region
    $region50: #{generator_forward.1} parent=1 // pred_check
      _
    $region51: #{generator_forward.1} parent=1 // pred_check_branch
      %78 = sbr.rel (0) target = $region53
    $region52: #{generator_forward.1} parent=1 // pred_region
      _
    $region53: #{generator_forward.1} parent=1 // pred_fallthru
      _
    // Predicated region
    $region54: #{generator_forward.1} parent=1 // pred_check
      _
    $region55: #{generator_forward.1} parent=1 // pred_check_branch
      %80 = sbr.rel (0) target = $region57
    $region56: #{generator_forward.1} parent=1 // pred_region
      %82 = dma.done [#allocation3], 1024
    $region57: #{generator_forward.1} parent=1 // pred_fallthru
      _
    // Predicated region
    $region58: #{generator_forward.1} parent=1 // pred_check
      _
    $region59: #{generator_forward.1} parent=1 // pred_check_branch
      %84 = sbr.rel (0) target = $region61
    $region60: #{generator_forward.1} parent=1 // pred_region
      %86 = dma.done [#allocation5], 2048
    $region61: #{generator_forward.1} parent=1 // pred_fallthru
      _
    // Predicated region
    $region62: #{generator_forward.1} parent=1 // pred_check
      _
    $region63: #{generator_forward.1} parent=1 // pred_check_branch
      %88 = sbr.rel (0) target = $region65
    $region64: #{generator_forward.1} parent=1 // pred_region
      %90 = dma.done [#allocation5], 4096
    $region65: #{generator_forward.1} parent=1 // pred_fallthru
      _
    %v91 = vld [vmem:[%s0] sm:$0xf]
    %v92 = vld [vmem:[%s0 + $0x4] sm:$0xf]
    %v93 = vld [vmem:[%s0 + $0x8] sm:$0xf]
    %v94 = vld [vmem:[%s0 + $0xc] sm:$0xf]
    %v95 = vld [vmem:[%s0 + $0x10] sm:$0xf]
    %v96 = vld [vmem:[%s0 + $0x14] sm:$0xf]
    %v97 = vld [vmem:[%s0 + $0x18] sm:$0xf]
    %v98 = vld [vmem:[%s0 + $0x1c] sm:$0xf]
    %v99 = vld [vmem:[%s0 + $0x20] sm:$0xf]
    %v100 = vld [vmem:[%s0 + $0x24] sm:$0xf]
    %v101 = vld [vmem:[%s0 + $0x28] sm:$0xf]
    %v102 = vld [vmem:[%s0 + $0x2c] sm:$0xf]
    %v103 = vld [vmem:[%s0 + $0x30] sm:$0xf]
    %v104 = vld [vmem:[%s0 + $0x34] sm:$0xf]
    %v105 = vld [vmem:[%s0 + $0x38] sm:$0xf]
    %v106 = vld [vmem:[%s0 + $0x3c] sm:$0xf]
    %v107 = vld [vmem:[%s0 + $0x40] sm:$0xf]
    %v108 = vld [vmem:[%s0 + $0x44] sm:$0xf]
    %v109 = vld [vmem:[%s0 + $0x48] sm:$0xf]
    %v110 = vld [vmem:[%s0 + $0x4c] sm:$0xf]
    %v111 = vld [vmem:[%s0 + $0x50] sm:$0xf]
    %v112 = vld [vmem:[%s0 + $0x54] sm:$0xf]
    %v113 = vld [vmem:[%s0 + $0x58] sm:$0xf]
    %v114 = vld [vmem:[%s0 + $0x5c] sm:$0xf]
    %v115 = vld [vmem:[%s0 + $0x60] sm:$0xf]
    %v116 = vld [vmem:[%s0 + $0x64] sm:$0xf]
    %v117 = vld [vmem:[%s0 + $0x68] sm:$0xf]
    %v118 = vld [vmem:[%s0 + $0x6c] sm:$0xf]
    %v119 = vld [vmem:[%s0 + $0x70] sm:$0xf]
    %v120 = vld [vmem:[%s0 + $0x74] sm:$0xf]
    %v121 = vld [vmem:[%s0 + $0x78] sm:$0xf]
    %v122 = vld [vmem:[%s0 + $0x7c] sm:$0xf]
    %v123 = vld [vmem:[#allocation2] sm:$0xf]
    %v124 = vld [vmem:[#allocation2 + $0x4] sm:$0xf]
    %v125 = vld [vmem:[#allocation2 + $0x8] sm:$0xf]
    %v126 = vld [vmem:[#allocation2 + $0xc] sm:$0xf]
    %v127 = vld [vmem:[#allocation2 + $0x10] sm:$0xf]
    %v128 = vld [vmem:[#allocation2 + $0x14] sm:$0xf]
    %v129 = vld [vmem:[#allocation2 + $0x18] sm:$0xf]
    %v130 = vld [vmem:[#allocation2 + $0x1c] sm:$0xf]
    %v131 = vld [vmem:[#allocation2 + $0x20] sm:$0xf]
    %v132 = vld [vmem:[#allocation2 + $0x24] sm:$0xf]
    %v133 = vld [vmem:[#allocation2 + $0x28] sm:$0xf]
    %v134 = vld [vmem:[#allocation2 + $0x2c] sm:$0xf]
    %v135 = vld [vmem:[#allocation2 + $0x30] sm:$0xf]
    %v136 = vld [vmem:[#allocation2 + $0x34] sm:$0xf]
    %v137 = vld [vmem:[#allocation2 + $0x38] sm:$0xf]
    %v138 = vld [vmem:[#allocation2 + $0x3c] sm:$0xf]
    %v139 = vld [vmem:[%s2] sm:$0x1]
    %v141 = vperm.slane %v139, 0
    %v175 = vunpack.c.l.b16 %v91
    %v176 = vunpack.c.l.b16 %v92
    %v177 = vunpack.c.l.b16 %v93
    %v178 = vunpack.c.l.b16 %v94
    %v179 = vunpack.c.l.b16 %v95
    %v180 = vunpack.c.l.b16 %v96
    %v181 = vunpack.c.l.b16 %v97
    %v182 = vunpack.c.l.b16 %v98
    %v183 = vunpack.c.l.b16 %v99
    %v184 = vunpack.c.l.b16 %v100
    %v185 = vunpack.c.l.b16 %v101
    %v186 = vunpack.c.l.b16 %v102
    %v187 = vunpack.c.l.b16 %v103
    %v188 = vunpack.c.l.b16 %v104
    %v189 = vunpack.c.l.b16 %v105
    %v190 = vunpack.c.l.b16 %v106
    %v191 = vunpack.c.l.b16 %v107
    %v192 = vunpack.c.l.b16 %v108
    %v193 = vunpack.c.l.b16 %v109
    %v194 = vunpack.c.l.b16 %v110
    %v195 = vunpack.c.l.b16 %v111
    %v196 = vunpack.c.l.b16 %v112
    %v197 = vunpack.c.l.b16 %v113
    %v198 = vunpack.c.l.b16 %v114
    %v199 = vunpack.c.l.b16 %v115
    %v200 = vunpack.c.l.b16 %v116
    %v201 = vunpack.c.l.b16 %v117
    %v202 = vunpack.c.l.b16 %v118
    %v203 = vunpack.c.l.b16 %v119
    %v204 = vunpack.c.l.b16 %v120
    %v205 = vunpack.c.l.b16 %v121
    %v206 = vunpack.c.l.b16 %v122
    %v207 = vpack.c.b16 %v176, %v175
    %v208 = vpack.c.b16 %v178, %v177
    %v209 = vpack.c.b16 %v180, %v179
    %v210 = vpack.c.b16 %v182, %v181
    %v211 = vpack.c.b16 %v184, %v183
    %v212 = vpack.c.b16 %v186, %v185
    %v213 = vpack.c.b16 %v188, %v187
    %v214 = vpack.c.b16 %v190, %v189
    %v215 = vpack.c.b16 %v192, %v191
    %v216 = vpack.c.b16 %v194, %v193
    %v217 = vpack.c.b16 %v196, %v195
    %v218 = vpack.c.b16 %v198, %v197
    %v219 = vpack.c.b16 %v200, %v199
    %v220 = vpack.c.b16 %v202, %v201
    %v221 = vpack.c.b16 %v204, %v203
    %v222 = vpack.c.b16 %v206, %v205
    %v255 = vunpack.c.l.b16 %v123
    %v256 = vunpack.c.l.b16 %v124
    %v257 = vunpack.c.l.b16 %v125
    %v258 = vunpack.c.l.b16 %v126
    %v259 = vunpack.c.l.b16 %v127
    %v260 = vunpack.c.l.b16 %v128
    %v261 = vunpack.c.l.b16 %v129
    %v262 = vunpack.c.l.b16 %v130
    %v263 = vunpack.c.l.b16 %v131
    %v264 = vunpack.c.l.b16 %v132
    %v265 = vunpack.c.l.b16 %v133
    %v266 = vunpack.c.l.b16 %v134
    %v267 = vunpack.c.l.b16 %v135
    %v268 = vunpack.c.l.b16 %v136
    %v269 = vunpack.c.l.b16 %v137
    %v270 = vunpack.c.l.b16 %v138
    %v271 = vpack.c.b16 %v256, %v255
    %v272 = vpack.c.b16 %v258, %v257
    %v273 = vpack.c.b16 %v260, %v259
    %v274 = vpack.c.b16 %v262, %v261
    %v275 = vpack.c.b16 %v264, %v263
    %v276 = vpack.c.b16 %v266, %v265
    %v277 = vpack.c.b16 %v268, %v267
    %v278 = vpack.c.b16 %v270, %v269
    %287 = vmatpush.bf16.msra.mxu0 %v278
    %288 = vmatpush.bf16.msra.mxu0 %v277
    %289 = vmatpush.bf16.msra.mxu0 %v276
    %290 = vmatpush.bf16.msra.mxu0 %v275
    %291 = vmatpush.bf16.msra.mxu0 %v274
    %292 = vmatpush.bf16.msra.mxu0 %v273
    %293 = vmatpush.bf16.msra.mxu0 %v272
    %294 = vmatpush.bf16.msra.mxu0 %v271
    %295 = vmatmul.bf16.gmra.mxu0 %v207
    %v296 = vpop.f32.mrf.mxu0
    %v297 = vadd.f32 %v141, %v296
    %v298 = vpop.f32.mrf.mxu0
    %v299 = vadd.f32 %v141, %v298
    %300 = vmatmul.bf16.gmra.mxu0 %v208
    %v301 = vpop.f32.mrf.mxu0
    %v302 = vadd.f32 %v141, %v301
    %v303 = vpop.f32.mrf.mxu0
    %v304 = vadd.f32 %v141, %v303
    %305 = vmatmul.bf16.gmra.mxu0 %v209
    %v306 = vpop.f32.mrf.mxu0
    %v307 = vadd.f32 %v141, %v306
    %v308 = vpop.f32.mrf.mxu0
    %v309 = vadd.f32 %v141, %v308
    %310 = vmatmul.bf16.gmra.mxu0 %v210
    %v311 = vpop.f32.mrf.mxu0
    %v312 = vadd.f32 %v141, %v311
    %v313 = vpop.f32.mrf.mxu0
    %v314 = vadd.f32 %v141, %v313
    %315 = vmatmul.bf16.gmra.mxu0 %v211
    %v316 = vpop.f32.mrf.mxu0
    %v317 = vadd.f32 %v141, %v316
    %v318 = vpop.f32.mrf.mxu0
    %v319 = vadd.f32 %v141, %v318
    %320 = vmatmul.bf16.gmra.mxu0 %v212
    %v321 = vpop.f32.mrf.mxu0
    %v322 = vadd.f32 %v141, %v321
    %v323 = vpop.f32.mrf.mxu0
    %v324 = vadd.f32 %v141, %v323
    %325 = vmatmul.bf16.gmra.mxu0 %v213
    %v326 = vpop.f32.mrf.mxu0
    %v327 = vadd.f32 %v141, %v326
    %v328 = vpop.f32.mrf.mxu0
    %v329 = vadd.f32 %v141, %v328
    %330 = vmatmul.bf16.gmra.mxu0 %v214
    %v331 = vpop.f32.mrf.mxu0
    %v332 = vadd.f32 %v141, %v331
    %v333 = vpop.f32.mrf.mxu0
    %v334 = vadd.f32 %v141, %v333
    %335 = vmatmul.bf16.gmra.mxu0 %v215
    %v336 = vpop.f32.mrf.mxu0
    %v337 = vadd.f32 %v141, %v336
    %v338 = vpop.f32.mrf.mxu0
    %v339 = vadd.f32 %v141, %v338
    %340 = vmatmul.bf16.gmra.mxu0 %v216
    %v341 = vpop.f32.mrf.mxu0
    %v342 = vadd.f32 %v141, %v341
    %v343 = vpop.f32.mrf.mxu0
    %v344 = vadd.f32 %v141, %v343
    %345 = vmatmul.bf16.gmra.mxu0 %v217
    %v346 = vpop.f32.mrf.mxu0
    %v347 = vadd.f32 %v141, %v346
    %v348 = vpop.f32.mrf.mxu0
    %v349 = vadd.f32 %v141, %v348
    %350 = vmatmul.bf16.gmra.mxu0 %v218
    %v351 = vpop.f32.mrf.mxu0
    %v352 = vadd.f32 %v141, %v351
    %v353 = vpop.f32.mrf.mxu0
    %v354 = vadd.f32 %v141, %v353
    %355 = vmatmul.bf16.gmra.mxu0 %v219
    %v356 = vpop.f32.mrf.mxu0
    %v357 = vadd.f32 %v141, %v356
    %v358 = vpop.f32.mrf.mxu0
    %v359 = vadd.f32 %v141, %v358
    %360 = vmatmul.bf16.gmra.mxu0 %v220
    %v361 = vpop.f32.mrf.mxu0
    %v362 = vadd.f32 %v141, %v361
    %v363 = vpop.f32.mrf.mxu0
    %v364 = vadd.f32 %v141, %v363
    %365 = vmatmul.bf16.gmra.mxu0 %v221
    %v366 = vpop.f32.mrf.mxu0
    %v367 = vadd.f32 %v141, %v366
    %v368 = vpop.f32.mrf.mxu0
    %v369 = vadd.f32 %v141, %v368
    %370 = vmatmul.bf16.gmra.mxu0 %v222
    %v371 = vpop.f32.mrf.mxu0
    %v372 = vadd.f32 %v141, %v371
    %v373 = vpop.f32.mrf.mxu0
    %v374 = vadd.f32 %v141, %v373
    %375 = vdwg.mxu0
    %vm376 = vcmp.gt.f32.partialorder %v297, 0.0
    %vm377 = vcmp.gt.f32.partialorder %v299, 0.0
    %vm378 = vcmp.gt.f32.partialorder %v302, 0.0
    %vm379 = vcmp.gt.f32.partialorder %v304, 0.0
    %vm380 = vcmp.gt.f32.partialorder %v307, 0.0
    %vm381 = vcmp.gt.f32.partialorder %v309, 0.0
    %vm382 = vcmp.gt.f32.partialorder %v312, 0.0
    %vm383 = vcmp.gt.f32.partialorder %v314, 0.0
    %vm384 = vcmp.gt.f32.partialorder %v317, 0.0
    %vm385 = vcmp.gt.f32.partialorder %v319, 0.0
    %vm386 = vcmp.gt.f32.partialorder %v322, 0.0
    %vm387 = vcmp.gt.f32.partialorder %v324, 0.0
    %vm388 = vcmp.gt.f32.partialorder %v327, 0.0
    %vm389 = vcmp.gt.f32.partialorder %v329, 0.0
    %vm390 = vcmp.gt.f32.partialorder %v332, 0.0
    %vm391 = vcmp.gt.f32.partialorder %v334, 0.0
    %vm392 = vcmp.gt.f32.partialorder %v337, 0.0
    %vm393 = vcmp.gt.f32.partialorder %v339, 0.0
    %vm394 = vcmp.gt.f32.partialorder %v342, 0.0
    %vm395 = vcmp.gt.f32.partialorder %v344, 0.0
    %vm396 = vcmp.gt.f32.partialorder %v347, 0.0
    %vm397 = vcmp.gt.f32.partialorder %v349, 0.0
    %vm398 = vcmp.gt.f32.partialorder %v352, 0.0
    %vm399 = vcmp.gt.f32.partialorder %v354, 0.0
    %vm400 = vcmp.gt.f32.partialorder %v357, 0.0
    %vm401 = vcmp.gt.f32.partialorder %v359, 0.0
    %vm402 = vcmp.gt.f32.partialorder %v362, 0.0
    %vm403 = vcmp.gt.f32.partialorder %v364, 0.0
    %vm404 = vcmp.gt.f32.partialorder %v367, 0.0
    %vm405 = vcmp.gt.f32.partialorder %v369, 0.0
    %vm406 = vcmp.gt.f32.partialorder %v372, 0.0
    %vm407 = vcmp.gt.f32.partialorder %v374, 0.0
    %v408 = vmul.f32 %v297, 0.2
    %v409 = vmul.f32 %v299, 0.2
    %v410 = vmul.f32 %v302, 0.2
    %v411 = vmul.f32 %v304, 0.2
    %v412 = vmul.f32 %v307, 0.2
    %v413 = vmul.f32 %v309, 0.2
    %v414 = vmul.f32 %v312, 0.2
    %v415 = vmul.f32 %v314, 0.2
    %v416 = vmul.f32 %v317, 0.2
    %v417 = vmul.f32 %v319, 0.2
    %v418 = vmul.f32 %v322, 0.2
    %v419 = vmul.f32 %v324, 0.2
    %v420 = vmul.f32 %v327, 0.2
    %v421 = vmul.f32 %v329, 0.2
    %v422 = vmul.f32 %v332, 0.2
    %v423 = vmul.f32 %v334, 0.2
    %v424 = vmul.f32 %v337, 0.2
    %v425 = vmul.f32 %v339, 0.2
    %v426 = vmul.f32 %v342, 0.2
    %v427 = vmul.f32 %v344, 0.2
    %v428 = vmul.f32 %v347, 0.2
    %v429 = vmul.f32 %v349, 0.2
    %v430 = vmul.f32 %v352, 0.2
    %v431 = vmul.f32 %v354, 0.2
    %v432 = vmul.f32 %v357, 0.2
    %v433 = vmul.f32 %v359, 0.2
    %v434 = vmul.f32 %v362, 0.2
    %v435 = vmul.f32 %v364, 0.2
    %v436 = vmul.f32 %v367, 0.2
    %v437 = vmul.f32 %v369, 0.2
    %v438 = vmul.f32 %v372, 0.2
    %v439 = vmul.f32 %v374, 0.2
    %v440 = vsel %vm376, %v297, %v408
    %v441 = vsel %vm377, %v299, %v409
    %v442 = vsel %vm378, %v302, %v410
    %v443 = vsel %vm379, %v304, %v411
    %v444 = vsel %vm380, %v307, %v412
    %v445 = vsel %vm381, %v309, %v413
    %v446 = vsel %vm382, %v312, %v414
    %v447 = vsel %vm383, %v314, %v415
    %v448 = vsel %vm384, %v317, %v416
    %v449 = vsel %vm385, %v319, %v417
    %v450 = vsel %vm386, %v322, %v418
    %v451 = vsel %vm387, %v324, %v419
    %v452 = vsel %vm388, %v327, %v420
    %v453 = vsel %vm389, %v329, %v421
    %v454 = vsel %vm390, %v332, %v422
    %v455 = vsel %vm391, %v334, %v423
    %v456 = vsel %vm392, %v337, %v424
    %v457 = vsel %vm393, %v339, %v425
    %v458 = vsel %vm394, %v342, %v426
    %v459 = vsel %vm395, %v344, %v427
    %v460 = vsel %vm396, %v347, %v428
    %v461 = vsel %vm397, %v349, %v429
    %v462 = vsel %vm398, %v352, %v430
    %v463 = vsel %vm399, %v354, %v431
    %v464 = vsel %vm400, %v357, %v432
    %v465 = vsel %vm401, %v359, %v433
    %v466 = vsel %vm402, %v362, %v434
    %v467 = vsel %vm403, %v364, %v435
    %v468 = vsel %vm404, %v367, %v436
    %v469 = vsel %vm405, %v369, %v437
    %v470 = vsel %vm406, %v372, %v438
    %v471 = vsel %vm407, %v374, %v439
    %v472 = vpack.c.bf16 %v441, %v440
    %v473 = vpack.c.bf16 %v443, %v442
    %v474 = vpack.c.bf16 %v445, %v444
    %v475 = vpack.c.bf16 %v447, %v446
    %v476 = vpack.c.bf16 %v449, %v448
    %v477 = vpack.c.bf16 %v451, %v450
    %v478 = vpack.c.bf16 %v453, %v452
    %v479 = vpack.c.bf16 %v455, %v454
    %v480 = vpack.c.bf16 %v457, %v456
    %v481 = vpack.c.bf16 %v459, %v458
    %v482 = vpack.c.bf16 %v461, %v460
    %v483 = vpack.c.bf16 %v463, %v462
    %v484 = vpack.c.bf16 %v465, %v464
    %v485 = vpack.c.bf16 %v467, %v466
    %v486 = vpack.c.bf16 %v469, %v468
    %v487 = vpack.c.bf16 %v471, %v470
    %v488 = vld [vmem:[#allocation4] sm:$0xff]
    %v489 = vld [vmem:[#allocation4 + $0x8] sm:$0xff]
    %v490 = vld [vmem:[#allocation4 + $0x10] sm:$0xff]
    %v491 = vld [vmem:[#allocation4 + $0x18] sm:$0xff]
    %v492 = vld [vmem:[#allocation4 + $0x20] sm:$0xff]
    %v493 = vld [vmem:[#allocation4 + $0x28] sm:$0xff]
    %v494 = vld [vmem:[#allocation4 + $0x30] sm:$0xff]
    %v495 = vld [vmem:[#allocation4 + $0x38] sm:$0xff]
    %v496 = vld [vmem:[#allocation4 + $0x40] sm:$0xff]
    %v497 = vld [vmem:[#allocation4 + $0x48] sm:$0xff]
    %v498 = vld [vmem:[#allocation4 + $0x50] sm:$0xff]
    %v499 = vld [vmem:[#allocation4 + $0x58] sm:$0xff]
    %v500 = vld [vmem:[#allocation4 + $0x60] sm:$0xff]
    %v501 = vld [vmem:[#allocation4 + $0x68] sm:$0xff]
    %v502 = vld [vmem:[#allocation4 + $0x70] sm:$0xff]
    %v503 = vld [vmem:[#allocation4 + $0x78] sm:$0xff]
    %v504 = vld [vmem:[%s4] sm:$0x3]
    %v506 = vperm.slane %v504, 0
    %v507 = vperm.slane %v504, 1
    %v526 = vunpack.c.l.b16 %v488
    %v527 = vunpack.c.h.b16 %v488
    %v528 = vunpack.c.l.b16 %v489
    %v529 = vunpack.c.h.b16 %v489
    %v530 = vunpack.c.l.b16 %v490
    %v531 = vunpack.c.h.b16 %v490
    %v532 = vunpack.c.l.b16 %v491
    %v533 = vunpack.c.h.b16 %v491
    %v534 = vunpack.c.l.b16 %v492
    %v535 = vunpack.c.h.b16 %v492
    %v536 = vunpack.c.l.b16 %v493
    %v537 = vunpack.c.h.b16 %v493
    %v538 = vunpack.c.l.b16 %v494
    %v539 = vunpack.c.h.b16 %v494
    %v540 = vunpack.c.l.b16 %v495
    %v541 = vunpack.c.h.b16 %v495
    %v542 = vunpack.c.l.b16 %v496
    %v543 = vunpack.c.h.b16 %v496
    %v544 = vunpack.c.l.b16 %v497
    %v545 = vunpack.c.h.b16 %v497
    %v546 = vunpack.c.l.b16 %v498
    %v547 = vunpack.c.h.b16 %v498
    %v548 = vunpack.c.l.b16 %v499
    %v549 = vunpack.c.h.b16 %v499
    %v550 = vunpack.c.l.b16 %v500
    %v551 = vunpack.c.h.b16 %v500
    %v552 = vunpack.c.l.b16 %v501
    %v553 = vunpack.c.h.b16 %v501
    %v554 = vunpack.c.l.b16 %v502
    %v555 = vunpack.c.h.b16 %v502
    %v556 = vunpack.c.l.b16 %v503
    %v557 = vunpack.c.h.b16 %v503
    %v558 = vpack.c.b16 %v528, %v526
    %v559 = vpack.c.b16 %v529, %v527
    %v560 = vpack.c.b16 %v532, %v530
    %v561 = vpack.c.b16 %v533, %v531
    %v562 = vpack.c.b16 %v536, %v534
    %v563 = vpack.c.b16 %v537, %v535
    %v564 = vpack.c.b16 %v540, %v538
    %v565 = vpack.c.b16 %v541, %v539
    %v566 = vpack.c.b16 %v544, %v542
    %v567 = vpack.c.b16 %v545, %v543
    %v568 = vpack.c.b16 %v548, %v546
    %v569 = vpack.c.b16 %v549, %v547
    %v570 = vpack.c.b16 %v552, %v550
    %v571 = vpack.c.b16 %v553, %v551
    %v572 = vpack.c.b16 %v556, %v554
    %v573 = vpack.c.b16 %v557, %v555
    %590 = vmatpush.bf16.msra.mxu0 %v572
    %591 = vmatpush.bf16.msra.mxu0 %v570
    %592 = vmatpush.bf16.msra.mxu0 %v568
    %593 = vmatpush.bf16.msra.mxu0 %v566
    %594 = vmatpush.bf16.msra.mxu0 %v564
    %595 = vmatpush.bf16.msra.mxu0 %v562
    %596 = vmatpush.bf16.msra.mxu0 %v560
    %597 = vmatpush.bf16.msra.mxu0 %v558
    %598 = vmatmul.bf16.gmra.mxu0 %v472
    %v599 = vpop.f32.mrf.mxu0
    %v600 = vadd.f32 %v506, %v599
    %v601 = vpop.f32.mrf.mxu0
    %v602 = vadd.f32 %v506, %v601
    %603 = vmatmul.bf16.gmra.mxu0 %v473
    %v604 = vpop.f32.mrf.mxu0
    %v605 = vadd.f32 %v506, %v604
    %v606 = vpop.f32.mrf.mxu0
    %v607 = vadd.f32 %v506, %v606
    %608 = vmatmul.bf16.gmra.mxu0 %v474
    %v609 = vpop.f32.mrf.mxu0
    %v610 = vadd.f32 %v506, %v609
    %v611 = vpop.f32.mrf.mxu0
    %v612 = vadd.f32 %v506, %v611
    %613 = vmatmul.bf16.gmra.mxu0 %v475
    %v614 = vpop.f32.mrf.mxu0
    %v615 = vadd.f32 %v506, %v614
    %v616 = vpop.f32.mrf.mxu0
    %v617 = vadd.f32 %v506, %v616
    %618 = vmatmul.bf16.gmra.mxu0 %v476
    %v619 = vpop.f32.mrf.mxu0
    %v620 = vadd.f32 %v506, %v619
    %v621 = vpop.f32.mrf.mxu0
    %v622 = vadd.f32 %v506, %v621
    %623 = vmatmul.bf16.gmra.mxu0 %v477
    %v624 = vpop.f32.mrf.mxu0
    %v625 = vadd.f32 %v506, %v624
    %v626 = vpop.f32.mrf.mxu0
    %v627 = vadd.f32 %v506, %v626
    %628 = vmatmul.bf16.gmra.mxu0 %v478
    %v629 = vpop.f32.mrf.mxu0
    %v630 = vadd.f32 %v506, %v629
    %v631 = vpop.f32.mrf.mxu0
    %v632 = vadd.f32 %v506, %v631
    %633 = vmatmul.bf16.gmra.mxu0 %v479
    %v634 = vpop.f32.mrf.mxu0
    %v635 = vadd.f32 %v506, %v634
    %v636 = vpop.f32.mrf.mxu0
    %v637 = vadd.f32 %v506, %v636
    %638 = vmatmul.bf16.gmra.mxu0 %v480
    %v639 = vpop.f32.mrf.mxu0
    %v640 = vadd.f32 %v506, %v639
    %v641 = vpop.f32.mrf.mxu0
    %v642 = vadd.f32 %v506, %v641
    %643 = vmatmul.bf16.gmra.mxu0 %v481
    %v644 = vpop.f32.mrf.mxu0
    %v645 = vadd.f32 %v506, %v644
    %v646 = vpop.f32.mrf.mxu0
    %v647 = vadd.f32 %v506, %v646
    %648 = vmatmul.bf16.gmra.mxu0 %v482
    %v649 = vpop.f32.mrf.mxu0
    %v650 = vadd.f32 %v506, %v649
    %v651 = vpop.f32.mrf.mxu0
    %v652 = vadd.f32 %v506, %v651
    %653 = vmatmul.bf16.gmra.mxu0 %v483
    %v654 = vpop.f32.mrf.mxu0
    %v655 = vadd.f32 %v506, %v654
    %v656 = vpop.f32.mrf.mxu0
    %v657 = vadd.f32 %v506, %v656
    %658 = vmatmul.bf16.gmra.mxu0 %v484
    %v659 = vpop.f32.mrf.mxu0
    %v660 = vadd.f32 %v506, %v659
    %v661 = vpop.f32.mrf.mxu0
    %v662 = vadd.f32 %v506, %v661
    %663 = vmatmul.bf16.gmra.mxu0 %v485
    %v664 = vpop.f32.mrf.mxu0
    %v665 = vadd.f32 %v506, %v664
    %v666 = vpop.f32.mrf.mxu0
    %v667 = vadd.f32 %v506, %v666
    %668 = vmatmul.bf16.gmra.mxu0 %v486
    %v669 = vpop.f32.mrf.mxu0
    %v670 = vadd.f32 %v506, %v669
    %v671 = vpop.f32.mrf.mxu0
    %v672 = vadd.f32 %v506, %v671
    %673 = vmatmul.bf16.gmra.mxu0 %v487
    %v674 = vpop.f32.mrf.mxu0
    %v675 = vadd.f32 %v506, %v674
    %v676 = vpop.f32.mrf.mxu0
    %v677 = vadd.f32 %v506, %v676
    %678 = vdwg.mxu0
    %679 = vmatpush.bf16.msra.mxu0 %v573
    %680 = vmatpush.bf16.msra.mxu0 %v571
    %681 = vmatpush.bf16.msra.mxu0 %v569
    %682 = vmatpush.bf16.msra.mxu0 %v567
    %683 = vmatpush.bf16.msra.mxu0 %v565
    %684 = vmatpush.bf16.msra.mxu0 %v563
    %685 = vmatpush.bf16.msra.mxu0 %v561
    %686 = vmatpush.bf16.msra.mxu0 %v559
    %687 = vmatmul.bf16.gmra.mxu0 %v472
    %v688 = vpop.f32.mrf.mxu0
    %v689 = vadd.f32 %v507, %v688
    %v690 = vpop.f32.mrf.mxu0
    %v691 = vadd.f32 %v507, %v690
    %692 = vmatmul.bf16.gmra.mxu0 %v473
    %v693 = vpop.f32.mrf.mxu0
    %v694 = vadd.f32 %v507, %v693
    %v695 = vpop.f32.mrf.mxu0
    %v696 = vadd.f32 %v507, %v695
    %697 = vmatmul.bf16.gmra.mxu0 %v474
    %v698 = vpop.f32.mrf.mxu0
    %v699 = vadd.f32 %v507, %v698
    %v700 = vpop.f32.mrf.mxu0
    %v701 = vadd.f32 %v507, %v700
    %702 = vmatmul.bf16.gmra.mxu0 %v475
    %v703 = vpop.f32.mrf.mxu0
    %v704 = vadd.f32 %v507, %v703
    %v705 = vpop.f32.mrf.mxu0
    %v706 = vadd.f32 %v507, %v705
    %707 = vmatmul.bf16.gmra.mxu0 %v476
    %v708 = vpop.f32.mrf.mxu0
    %v709 = vadd.f32 %v507, %v708
    %v710 = vpop.f32.mrf.mxu0
    %v711 = vadd.f32 %v507, %v710
    %712 = vmatmul.bf16.gmra.mxu0 %v477
    %v713 = vpop.f32.mrf.mxu0
    %v714 = vadd.f32 %v507, %v713
    %v715 = vpop.f32.mrf.mxu0
    %v716 = vadd.f32 %v507, %v715
    %717 = vmatmul.bf16.gmra.mxu0 %v478
    %v718 = vpop.f32.mrf.mxu0
    %v719 = vadd.f32 %v507, %v718
    %v720 = vpop.f32.mrf.mxu0
    %v721 = vadd.f32 %v507, %v720
    %722 = vmatmul.bf16.gmra.mxu0 %v479
    %v723 = vpop.f32.mrf.mxu0
    %v724 = vadd.f32 %v507, %v723
    %v725 = vpop.f32.mrf.mxu0
    %v726 = vadd.f32 %v507, %v725
    %727 = vmatmul.bf16.gmra.mxu0 %v480
    %v728 = vpop.f32.mrf.mxu0
    %v729 = vadd.f32 %v507, %v728
    %v730 = vpop.f32.mrf.mxu0
    %v731 = vadd.f32 %v507, %v730
    %732 = vmatmul.bf16.gmra.mxu0 %v481
    %v733 = vpop.f32.mrf.mxu0
    %v734 = vadd.f32 %v507, %v733
    %v735 = vpop.f32.mrf.mxu0
    %v736 = vadd.f32 %v507, %v735
    %737 = vmatmul.bf16.gmra.mxu0 %v482
    %v738 = vpop.f32.mrf.mxu0
    %v739 = vadd.f32 %v507, %v738
    %v740 = vpop.f32.mrf.mxu0
    %v741 = vadd.f32 %v507, %v740
    %742 = vmatmul.bf16.gmra.mxu0 %v483
    %v743 = vpop.f32.mrf.mxu0
    %v744 = vadd.f32 %v507, %v743
    %v745 = vpop.f32.mrf.mxu0
    %v746 = vadd.f32 %v507, %v745
    %747 = vmatmul.bf16.gmra.mxu0 %v484
    %v748 = vpop.f32.mrf.mxu0
    %v749 = vadd.f32 %v507, %v748
    %v750 = vpop.f32.mrf.mxu0
    %v751 = vadd.f32 %v507, %v750
    %752 = vmatmul.bf16.gmra.mxu0 %v485
    %v753 = vpop.f32.mrf.mxu0
    %v754 = vadd.f32 %v507, %v753
    %v755 = vpop.f32.mrf.mxu0
    %v756 = vadd.f32 %v507, %v755
    %757 = vmatmul.bf16.gmra.mxu0 %v486
    %v758 = vpop.f32.mrf.mxu0
    %v759 = vadd.f32 %v507, %v758
    %v760 = vpop.f32.mrf.mxu0
    %v761 = vadd.f32 %v507, %v760
    %762 = vmatmul.bf16.gmra.mxu0 %v487
    %v763 = vpop.f32.mrf.mxu0
    %v764 = vadd.f32 %v507, %v763
    %v765 = vpop.f32.mrf.mxu0
    %v766 = vadd.f32 %v507, %v765
    %767 = vdwg.mxu0
    %v768 = vld [vmem:[%s5] sm:$0x3]
    %v769 = vld [vmem:[%s6] sm:$0x3]
    %v770 = vadd.f32 %v600, %v602
    %v771 = vadd.f32 %v770, %v605
    %v772 = vadd.f32 %v771, %v607
    %v773 = vadd.f32 %v772, %v610
    %v774 = vadd.f32 %v773, %v612
    %v775 = vadd.f32 %v774, %v615
    %v776 = vadd.f32 %v775, %v617
    %v777 = vadd.f32 %v776, %v620
    %v778 = vadd.f32 %v777, %v622
    %v779 = vadd.f32 %v778, %v625
    %v780 = vadd.f32 %v779, %v627
    %v781 = vadd.f32 %v780, %v630
    %v782 = vadd.f32 %v781, %v632
    %v783 = vadd.f32 %v782, %v635
    %v784 = vadd.f32 %v783, %v637
    %v785 = vadd.f32 %v784, %v640
    %v786 = vadd.f32 %v785, %v642
    %v787 = vadd.f32 %v786, %v645
    %v788 = vadd.f32 %v787, %v647
    %v789 = vadd.f32 %v788, %v650
    %v790 = vadd.f32 %v789, %v652
    %v791 = vadd.f32 %v790, %v655
    %v792 = vadd.f32 %v791, %v657
    %v793 = vadd.f32 %v792, %v660
    %v794 = vadd.f32 %v793, %v662
    %v795 = vadd.f32 %v794, %v665
    %v796 = vadd.f32 %v795, %v667
    %v797 = vadd.f32 %v796, %v670
    %v798 = vadd.f32 %v797, %v672
    %v799 = vadd.f32 %v798, %v675
    %v800 = vadd.f32 %v799, %v677
    %v801 = vrot.slane %v800, 4
    %v802 = vadd.f32 %v800, %v801
    %v803 = vrot.slane %v802, 2
    %v804 = vadd.f32 %v802, %v803
    %v805 = vrot.slane %v804, 1
    %v806 = vadd.f32 %v804, %v805
    %v807 = vadd.f32 %v689, %v691
    %v808 = vadd.f32 %v807, %v694
    %v809 = vadd.f32 %v808, %v696
    %v810 = vadd.f32 %v809, %v699
    %v811 = vadd.f32 %v810, %v701
    %v812 = vadd.f32 %v811, %v704
    %v813 = vadd.f32 %v812, %v706
    %v814 = vadd.f32 %v813, %v709
    %v815 = vadd.f32 %v814, %v711
    %v816 = vadd.f32 %v815, %v714
    %v817 = vadd.f32 %v816, %v716
    %v818 = vadd.f32 %v817, %v719
    %v819 = vadd.f32 %v818, %v721
    %v820 = vadd.f32 %v819, %v724
    %v821 = vadd.f32 %v820, %v726
    %v822 = vadd.f32 %v821, %v729
    %v823 = vadd.f32 %v822, %v731
    %v824 = vadd.f32 %v823, %v734
    %v825 = vadd.f32 %v824, %v736
    %v826 = vadd.f32 %v825, %v739
    %v827 = vadd.f32 %v826, %v741
    %v828 = vadd.f32 %v827, %v744
    %v829 = vadd.f32 %v828, %v746
    %v830 = vadd.f32 %v829, %v749
    %v831 = vadd.f32 %v830, %v751
    %v832 = vadd.f32 %v831, %v754
    %v833 = vadd.f32 %v832, %v756
    %v834 = vadd.f32 %v833, %v759
    %v835 = vadd.f32 %v834, %v761
    %v836 = vadd.f32 %v835, %v764
    %v837 = vadd.f32 %v836, %v766
    %v838 = vrot.slane %v837, 4
    %v839 = vadd.f32 %v837, %v838
    %v840 = vrot.slane %v839, 2
    %v841 = vadd.f32 %v839, %v840
    %v842 = vrot.slane %v841, 1
    %v843 = vadd.f32 %v841, %v842
    %v844 = vrcp.pop 256.0
    %v845 = vmul.f32 256.0, %v844
    %v846 = vsub.f32 1.0, %v845
    %v847 = vmul.f32 %v844, %v846
    %v848 = vadd.f32 %v844, %v847
    %vm849 = vweird.f32 %v844
    %v850 = vsel %vm849, %v844, %v848
    %v851 = vmul.f32 %v806, %v850
    %v852 = vmul.f32 %v843, %v850
    %v853 = vmul.f32 %v600, %v600
    %v854 = vmul.f32 %v689, %v689
    %v855 = vmul.f32 %v602, %v602
    %v856 = vmul.f32 %v691, %v691
    %v857 = vmul.f32 %v605, %v605
    %v858 = vmul.f32 %v694, %v694
    %v859 = vmul.f32 %v607, %v607
    %v860 = vmul.f32 %v696, %v696
    %v861 = vmul.f32 %v610, %v610
    %v862 = vmul.f32 %v699, %v699
    %v863 = vmul.f32 %v612, %v612
    %v864 = vmul.f32 %v701, %v701
    %v865 = vmul.f32 %v615, %v615
    %v866 = vmul.f32 %v704, %v704
    %v867 = vmul.f32 %v617, %v617
    %v868 = vmul.f32 %v706, %v706
    %v869 = vmul.f32 %v620, %v620
    %v870 = vmul.f32 %v709, %v709
    %v871 = vmul.f32 %v622, %v622
    %v872 = vmul.f32 %v711, %v711
    %v873 = vmul.f32 %v625, %v625
    %v874 = vmul.f32 %v714, %v714
    %v875 = vmul.f32 %v627, %v627
    %v876 = vmul.f32 %v716, %v716
    %v877 = vmul.f32 %v630, %v630
    %v878 = vmul.f32 %v719, %v719
    %v879 = vmul.f32 %v632, %v632
    %v880 = vmul.f32 %v721, %v721
    %v881 = vmul.f32 %v635, %v635
    %v882 = vmul.f32 %v724, %v724
    %v883 = vmul.f32 %v637, %v637
    %v884 = vmul.f32 %v726, %v726
    %v885 = vmul.f32 %v640, %v640
    %v886 = vmul.f32 %v729, %v729
    %v887 = vmul.f32 %v642, %v642
    %v888 = vmul.f32 %v731, %v731
    %v889 = vmul.f32 %v645, %v645
    %v890 = vmul.f32 %v734, %v734
    %v891 = vmul.f32 %v647, %v647
    %v892 = vmul.f32 %v736, %v736
    %v893 = vmul.f32 %v650, %v650
    %v894 = vmul.f32 %v739, %v739
    %v895 = vmul.f32 %v652, %v652
    %v896 = vmul.f32 %v741, %v741
    %v897 = vmul.f32 %v655, %v655
    %v898 = vmul.f32 %v744, %v744
    %v899 = vmul.f32 %v657, %v657
    %v900 = vmul.f32 %v746, %v746
    %v901 = vmul.f32 %v660, %v660
    %v902 = vmul.f32 %v749, %v749
    %v903 = vmul.f32 %v662, %v662
    %v904 = vmul.f32 %v751, %v751
    %v905 = vmul.f32 %v665, %v665
    %v906 = vmul.f32 %v754, %v754
    %v907 = vmul.f32 %v667, %v667
    %v908 = vmul.f32 %v756, %v756
    %v909 = vmul.f32 %v670, %v670
    %v910 = vmul.f32 %v759, %v759
    %v911 = vmul.f32 %v672, %v672
    %v912 = vmul.f32 %v761, %v761
    %v913 = vmul.f32 %v675, %v675
    %v914 = vmul.f32 %v764, %v764
    %v915 = vmul.f32 %v677, %v677
    %v916 = vmul.f32 %v766, %v766
    %v917 = vadd.f32 %v853, %v855
    %v918 = vadd.f32 %v917, %v857
    %v919 = vadd.f32 %v918, %v859
    %v920 = vadd.f32 %v919, %v861
    %v921 = vadd.f32 %v920, %v863
    %v922 = vadd.f32 %v921, %v865
    %v923 = vadd.f32 %v922, %v867
    %v924 = vadd.f32 %v923, %v869
    %v925 = vadd.f32 %v924, %v871
    %v926 = vadd.f32 %v925, %v873
    %v927 = vadd.f32 %v926, %v875
    %v928 = vadd.f32 %v927, %v877
    %v929 = vadd.f32 %v928, %v879
    %v930 = vadd.f32 %v929, %v881
    %v931 = vadd.f32 %v930, %v883
    %v932 = vadd.f32 %v931, %v885
    %v933 = vadd.f32 %v932, %v887
    %v934 = vadd.f32 %v933, %v889
    %v935 = vadd.f32 %v934, %v891
    %v936 = vadd.f32 %v935, %v893
    %v937 = vadd.f32 %v936, %v895
    %v938 = vadd.f32 %v937, %v897
    %v939 = vadd.f32 %v938, %v899
    %v940 = vadd.f32 %v939, %v901
    %v941 = vadd.f32 %v940, %v903
    %v942 = vadd.f32 %v941, %v905
    %v943 = vadd.f32 %v942, %v907
    %v944 = vadd.f32 %v943, %v909
    %v945 = vadd.f32 %v944, %v911
    %v946 = vadd.f32 %v945, %v913
    %v947 = vadd.f32 %v946, %v915
    %v948 = vrot.slane %v947, 4
    %v949 = vadd.f32 %v947, %v948
    %v950 = vrot.slane %v949, 2
    %v951 = vadd.f32 %v949, %v950
    %v952 = vrot.slane %v951, 1
    %v953 = vadd.f32 %v951, %v952
    %v954 = vadd.f32 %v854, %v856
    %v955 = vadd.f32 %v954, %v858
    %v956 = vadd.f32 %v955, %v860
    %v957 = vadd.f32 %v956, %v862
    %v958 = vadd.f32 %v957, %v864
    %v959 = vadd.f32 %v958, %v866
    %v960 = vadd.f32 %v959, %v868
    %v961 = vadd.f32 %v960, %v870
    %v962 = vadd.f32 %v961, %v872
    %v963 = vadd.f32 %v962, %v874
    %v964 = vadd.f32 %v963, %v876
    %v965 = vadd.f32 %v964, %v878
    %v966 = vadd.f32 %v965, %v880
    %v967 = vadd.f32 %v966, %v882
    %v968 = vadd.f32 %v967, %v884
    %v969 = vadd.f32 %v968, %v886
    %v970 = vadd.f32 %v969, %v888
    %v971 = vadd.f32 %v970, %v890
    %v972 = vadd.f32 %v971, %v892
    %v973 = vadd.f32 %v972, %v894
    %v974 = vadd.f32 %v973, %v896
    %v975 = vadd.f32 %v974, %v898
    %v976 = vadd.f32 %v975, %v900
    %v977 = vadd.f32 %v976, %v902
    %v978 = vadd.f32 %v977, %v904
    %v979 = vadd.f32 %v978, %v906
    %v980 = vadd.f32 %v979, %v908
    %v981 = vadd.f32 %v980, %v910
    %v982 = vadd.f32 %v981, %v912
    %v983 = vadd.f32 %v982, %v914
    %v984 = vadd.f32 %v983, %v916
    %v985 = vrot.slane %v984, 4
    %v986 = vadd.f32 %v984, %v985
    %v987 = vrot.slane %v986, 2
    %v988 = vadd.f32 %v986, %v987
    %v989 = vrot.slane %v988, 1
    %v990 = vadd.f32 %v988, %v989
    %v991 = vmul.f32 %v953, %v850
    %v992 = vmul.f32 %v990, %v850
    %v993 = vmul.f32 %v851, %v851
    %v994 = vmul.f32 %v852, %v852
    %v995 = vsub.f32 %v991, %v993
    %v996 = vsub.f32 %v992, %v994
    %v997 = vsub.f32 %v600, %v851
    %v998 = vsub.f32 %v689, %v852
    %v999 = vsub.f32 %v602, %v851
    %v1000 = vsub.f32 %v691, %v852
    %v1001 = vsub.f32 %v605, %v851
    %v1002 = vsub.f32 %v694, %v852
    %v1003 = vsub.f32 %v607, %v851
    %v1004 = vsub.f32 %v696, %v852
    %v1005 = vsub.f32 %v610, %v851
    %v1006 = vsub.f32 %v699, %v852
    %v1007 = vsub.f32 %v612, %v851
    %v1008 = vsub.f32 %v701, %v852
    %v1009 = vsub.f32 %v615, %v851
    %v1010 = vsub.f32 %v704, %v852
    %v1011 = vsub.f32 %v617, %v851
    %v1012 = vsub.f32 %v706, %v852
    %v1013 = vsub.f32 %v620, %v851
    %v1014 = vsub.f32 %v709, %v852
    %v1015 = vsub.f32 %v622, %v851
    %v1016 = vsub.f32 %v711, %v852
    %v1017 = vsub.f32 %v625, %v851
    %v1018 = vsub.f32 %v714, %v852
    %v1019 = vsub.f32 %v627, %v851
    %v1020 = vsub.f32 %v716, %v852
    %v1021 = vsub.f32 %v630, %v851
    %v1022 = vsub.f32 %v719, %v852
    %v1023 = vsub.f32 %v632, %v851
    %v1024 = vsub.f32 %v721, %v852
    %v1025 = vsub.f32 %v635, %v851
    %v1026 = vsub.f32 %v724, %v852
    %v1027 = vsub.f32 %v637, %v851
    %v1028 = vsub.f32 %v726, %v852
    %v1029 = vsub.f32 %v640, %v851
    %v1030 = vsub.f32 %v729, %v852
    %v1031 = vsub.f32 %v642, %v851
    %v1032 = vsub.f32 %v731, %v852
    %v1033 = vsub.f32 %v645, %v851
    %v1034 = vsub.f32 %v734, %v852
    %v1035 = vsub.f32 %v647, %v851
    %v1036 = vsub.f32 %v736, %v852
    %v1037 = vsub.f32 %v650, %v851
    %v1038 = vsub.f32 %v739, %v852
    %v1039 = vsub.f32 %v652, %v851
    %v1040 = vsub.f32 %v741, %v852
    %v1041 = vsub.f32 %v655, %v851
    %v1042 = vsub.f32 %v744, %v852
    %v1043 = vsub.f32 %v657, %v851
    %v1044 = vsub.f32 %v746, %v852
    %v1045 = vsub.f32 %v660, %v851
    %v1046 = vsub.f32 %v749, %v852
    %v1047 = vsub.f32 %v662, %v851
    %v1048 = vsub.f32 %v751, %v852
    %v1049 = vsub.f32 %v665, %v851
    %v1050 = vsub.f32 %v754, %v852
    %v1051 = vsub.f32 %v667, %v851
    %v1052 = vsub.f32 %v756, %v852
    %v1053 = vsub.f32 %v670, %v851
    %v1054 = vsub.f32 %v759, %v852
    %v1055 = vsub.f32 %v672, %v851
    %v1056 = vsub.f32 %v761, %v852
    %v1057 = vsub.f32 %v675, %v851
    %v1058 = vsub.f32 %v764, %v852
    %v1059 = vsub.f32 %v677, %v851
    %v1060 = vsub.f32 %v766, %v852
    %v1061 = vadd.f32 %v995, 0.8
    %v1062 = vadd.f32 %v996, 0.8
    %v1063 = vrsqrt.pop %v1061
    %v1064 = vmul.f32 %v1063, %v1061
    %v1065 = vmul.f32 %v1064, %v1063
    %v1066 = vmul.f32 0.5, %v1065
    %v1067 = vsub.f32 1.5, %v1066
    %v1068 = vmul.f32 %v1063, %v1067
    %vm1069 = vweird.f32 %v1061
    %vm1070 = vweird.f32 %v1063
    %vm1071 = vmor %vm1069, %vm1070
    %v1072 = vsel %vm1071, %v1063, %v1068
    %v1073 = vrsqrt.pop %v1062
    %v1074 = vmul.f32 %v1073, %v1062
    %v1075 = vmul.f32 %v1074, %v1073
    %v1076 = vmul.f32 0.5, %v1075
    %v1077 = vsub.f32 1.5, %v1076
    %v1078 = vmul.f32 %v1073, %v1077
    %vm1079 = vweird.f32 %v1062
    %vm1080 = vweird.f32 %v1073
    %vm1081 = vmor %vm1079, %vm1080
    %v1082 = vsel %vm1081, %v1073, %v1078
    %v1083 = vmul.f32 %v997, %v1072
    %v1084 = vmul.f32 %v998, %v1082
    %v1085 = vmul.f32 %v999, %v1072
    %v1086 = vmul.f32 %v1000, %v1082
    %v1087 = vmul.f32 %v1001, %v1072
    %v1088 = vmul.f32 %v1002, %v1082
    %v1089 = vmul.f32 %v1003, %v1072
    %v1090 = vmul.f32 %v1004, %v1082
    %v1091 = vmul.f32 %v1005, %v1072
    %v1092 = vmul.f32 %v1006, %v1082
    %v1093 = vmul.f32 %v1007, %v1072
    %v1094 = vmul.f32 %v1008, %v1082
    %v1095 = vmul.f32 %v1009, %v1072
    %v1096 = vmul.f32 %v1010, %v1082
    %v1097 = vmul.f32 %v1011, %v1072
    %v1098 = vmul.f32 %v1012, %v1082
    %v1099 = vmul.f32 %v1013, %v1072
    %v1100 = vmul.f32 %v1014, %v1082
    %v1101 = vmul.f32 %v1015, %v1072
    %v1102 = vmul.f32 %v1016, %v1082
    %v1103 = vmul.f32 %v1017, %v1072
    %v1104 = vmul.f32 %v1018, %v1082
    %v1105 = vmul.f32 %v1019, %v1072
    %v1106 = vmul.f32 %v1020, %v1082
    %v1107 = vmul.f32 %v1021, %v1072
    %v1108 = vmul.f32 %v1022, %v1082
    %v1109 = vmul.f32 %v1023, %v1072
    %v1110 = vmul.f32 %v1024, %v1082
    %v1111 = vmul.f32 %v1025, %v1072
    %v1112 = vmul.f32 %v1026, %v1082
    %v1113 = vmul.f32 %v1027, %v1072
    %v1114 = vmul.f32 %v1028, %v1082
    %v1115 = vmul.f32 %v1029, %v1072
    %v1116 = vmul.f32 %v1030, %v1082
    %v1117 = vmul.f32 %v1031, %v1072
    %v1118 = vmul.f32 %v1032, %v1082
    %v1119 = vmul.f32 %v1033, %v1072
    %v1120 = vmul.f32 %v1034, %v1082
    %v1121 = vmul.f32 %v1035, %v1072
    %v1122 = vmul.f32 %v1036, %v1082
    %v1123 = vmul.f32 %v1037, %v1072
    %v1124 = vmul.f32 %v1038, %v1082
    %v1125 = vmul.f32 %v1039, %v1072
    %v1126 = vmul.f32 %v1040, %v1082
    %v1127 = vmul.f32 %v1041, %v1072
    %v1128 = vmul.f32 %v1042, %v1082
    %v1129 = vmul.f32 %v1043, %v1072
    %v1130 = vmul.f32 %v1044, %v1082
    %v1131 = vmul.f32 %v1045, %v1072
    %v1132 = vmul.f32 %v1046, %v1082
    %v1133 = vmul.f32 %v1047, %v1072
    %v1134 = vmul.f32 %v1048, %v1082
    %v1135 = vmul.f32 %v1049, %v1072
    %v1136 = vmul.f32 %v1050, %v1082
    %v1137 = vmul.f32 %v1051, %v1072
    %v1138 = vmul.f32 %v1052, %v1082
    %v1139 = vmul.f32 %v1053, %v1072
    %v1140 = vmul.f32 %v1054, %v1082
    %v1141 = vmul.f32 %v1055, %v1072
    %v1142 = vmul.f32 %v1056, %v1082
    %v1143 = vmul.f32 %v1057, %v1072
    %v1144 = vmul.f32 %v1058, %v1082
    %v1145 = vmul.f32 %v1059, %v1072
    %v1146 = vmul.f32 %v1060, %v1082
    %v1148 = vperm.slane %v768, 0
    %v1149 = vperm.slane %v768, 1
    %v1152 = vmul.f32 %v1083, %v1148
    %v1153 = vmul.f32 %v1084, %v1149
    %v1154 = vmul.f32 %v1085, %v1148
    %v1155 = vmul.f32 %v1086, %v1149
    %v1156 = vmul.f32 %v1087, %v1148
    %v1157 = vmul.f32 %v1088, %v1149
    %v1158 = vmul.f32 %v1089, %v1148
    %v1159 = vmul.f32 %v1090, %v1149
    %v1160 = vmul.f32 %v1091, %v1148
    %v1161 = vmul.f32 %v1092, %v1149
    %v1162 = vmul.f32 %v1093, %v1148
    %v1163 = vmul.f32 %v1094, %v1149
    %v1164 = vmul.f32 %v1095, %v1148
    %v1165 = vmul.f32 %v1096, %v1149
    %v1166 = vmul.f32 %v1097, %v1148
    %v1167 = vmul.f32 %v1098, %v1149
    %v1168 = vmul.f32 %v1099, %v1148
    %v1169 = vmul.f32 %v1100, %v1149
    %v1170 = vmul.f32 %v1101, %v1148
    %v1171 = vmul.f32 %v1102, %v1149
    %v1172 = vmul.f32 %v1103, %v1148
    %v1173 = vmul.f32 %v1104, %v1149
    %v1174 = vmul.f32 %v1105, %v1148
    %v1175 = vmul.f32 %v1106, %v1149
    %v1176 = vmul.f32 %v1107, %v1148
    %v1177 = vmul.f32 %v1108, %v1149
    %v1178 = vmul.f32 %v1109, %v1148
    %v1179 = vmul.f32 %v1110, %v1149
    %v1180 = vmul.f32 %v1111, %v1148
    %v1181 = vmul.f32 %v1112, %v1149
    %v1182 = vmul.f32 %v1113, %v1148
    %v1183 = vmul.f32 %v1114, %v1149
    %v1184 = vmul.f32 %v1115, %v1148
    %v1185 = vmul.f32 %v1116, %v1149
    %v1186 = vmul.f32 %v1117, %v1148
    %v1187 = vmul.f32 %v1118, %v1149
    %v1188 = vmul.f32 %v1119, %v1148
    %v1189 = vmul.f32 %v1120, %v1149
    %v1190 = vmul.f32 %v1121, %v1148
    %v1191 = vmul.f32 %v1122, %v1149
    %v1192 = vmul.f32 %v1123, %v1148
    %v1193 = vmul.f32 %v1124, %v1149
    %v1194 = vmul.f32 %v1125, %v1148
    %v1195 = vmul.f32 %v1126, %v1149
    %v1196 = vmul.f32 %v1127, %v1148
    %v1197 = vmul.f32 %v1128, %v1149
    %v1198 = vmul.f32 %v1129, %v1148
    %v1199 = vmul.f32 %v1130, %v1149
    %v1200 = vmul.f32 %v1131, %v1148
    %v1201 = vmul.f32 %v1132, %v1149
    %v1202 = vmul.f32 %v1133, %v1148
    %v1203 = vmul.f32 %v1134, %v1149
    %v1204 = vmul.f32 %v1135, %v1148
    %v1205 = vmul.f32 %v1136, %v1149
    %v1206 = vmul.f32 %v1137, %v1148
    %v1207 = vmul.f32 %v1138, %v1149
    %v1208 = vmul.f32 %v1139, %v1148
    %v1209 = vmul.f32 %v1140, %v1149
    %v1210 = vmul.f32 %v1141, %v1148
    %v1211 = vmul.f32 %v1142, %v1149
    %v1212 = vmul.f32 %v1143, %v1148
    %v1213 = vmul.f32 %v1144, %v1149
    %v1214 = vmul.f32 %v1145, %v1148
    %v1215 = vmul.f32 %v1146, %v1149
    %v1217 = vperm.slane %v769, 0
    %v1218 = vperm.slane %v769, 1
    %v1221 = vadd.f32 %v1152, %v1217
    %v1222 = vadd.f32 %v1153, %v1218
    %v1223 = vadd.f32 %v1154, %v1217
    %v1224 = vadd.f32 %v1155, %v1218
    %v1225 = vadd.f32 %v1156, %v1217
    %v1226 = vadd.f32 %v1157, %v1218
    %v1227 = vadd.f32 %v1158, %v1217
    %v1228 = vadd.f32 %v1159, %v1218
    %v1229 = vadd.f32 %v1160, %v1217
    %v1230 = vadd.f32 %v1161, %v1218
    %v1231 = vadd.f32 %v1162, %v1217
    %v1232 = vadd.f32 %v1163, %v1218
    %v1233 = vadd.f32 %v1164, %v1217
    %v1234 = vadd.f32 %v1165, %v1218
    %v1235 = vadd.f32 %v1166, %v1217
    %v1236 = vadd.f32 %v1167, %v1218
    %v1237 = vadd.f32 %v1168, %v1217
    %v1238 = vadd.f32 %v1169, %v1218
    %v1239 = vadd.f32 %v1170, %v1217
    %v1240 = vadd.f32 %v1171, %v1218
    %v1241 = vadd.f32 %v1172, %v1217
    %v1242 = vadd.f32 %v1173, %v1218
    %v1243 = vadd.f32 %v1174, %v1217
    %v1244 = vadd.f32 %v1175, %v1218
    %v1245 = vadd.f32 %v1176, %v1217
    %v1246 = vadd.f32 %v1177, %v1218
    %v1247 = vadd.f32 %v1178, %v1217
    %v1248 = vadd.f32 %v1179, %v1218
    %v1249 = vadd.f32 %v1180, %v1217
    %v1250 = vadd.f32 %v1181, %v1218
    %v1251 = vadd.f32 %v1182, %v1217
    %v1252 = vadd.f32 %v1183, %v1218
    %v1253 = vadd.f32 %v1184, %v1217
    %v1254 = vadd.f32 %v1185, %v1218
    %v1255 = vadd.f32 %v1186, %v1217
    %v1256 = vadd.f32 %v1187, %v1218
    %v1257 = vadd.f32 %v1188, %v1217
    %v1258 = vadd.f32 %v1189, %v1218
    %v1259 = vadd.f32 %v1190, %v1217
    %v1260 = vadd.f32 %v1191, %v1218
    %v1261 = vadd.f32 %v1192, %v1217
    %v1262 = vadd.f32 %v1193, %v1218
    %v1263 = vadd.f32 %v1194, %v1217
    %v1264 = vadd.f32 %v1195, %v1218
    %v1265 = vadd.f32 %v1196, %v1217
    %v1266 = vadd.f32 %v1197, %v1218
    %v1267 = vadd.f32 %v1198, %v1217
    %v1268 = vadd.f32 %v1199, %v1218
    %v1269 = vadd.f32 %v1200, %v1217
    %v1270 = vadd.f32 %v1201, %v1218
    %v1271 = vadd.f32 %v1202, %v1217
    %v1272 = vadd.f32 %v1203, %v1218
    %v1273 = vadd.f32 %v1204, %v1217
    %v1274 = vadd.f32 %v1205, %v1218
    %v1275 = vadd.f32 %v1206, %v1217
    %v1276 = vadd.f32 %v1207, %v1218
    %v1277 = vadd.f32 %v1208, %v1217
    %v1278 = vadd.f32 %v1209, %v1218
    %v1279 = vadd.f32 %v1210, %v1217
    %v1280 = vadd.f32 %v1211, %v1218
    %v1281 = vadd.f32 %v1212, %v1217
    %v1282 = vadd.f32 %v1213, %v1218
    %v1283 = vadd.f32 %v1214, %v1217
    %v1284 = vadd.f32 %v1215, %v1218
    %vm1285 = vcmp.gt.f32.partialorder %v1221, 0.0
    %vm1286 = vcmp.gt.f32.partialorder %v1222, 0.0
    %vm1287 = vcmp.gt.f32.partialorder %v1223, 0.0
    %vm1288 = vcmp.gt.f32.partialorder %v1224, 0.0
    %vm1289 = vcmp.gt.f32.partialorder %v1225, 0.0
    %vm1290 = vcmp.gt.f32.partialorder %v1226, 0.0
    %vm1291 = vcmp.gt.f32.partialorder %v1227, 0.0
    %vm1292 = vcmp.gt.f32.partialorder %v1228, 0.0
    %vm1293 = vcmp.gt.f32.partialorder %v1229, 0.0
    %vm1294 = vcmp.gt.f32.partialorder %v1230, 0.0
    %vm1295 = vcmp.gt.f32.partialorder %v1231, 0.0
    %vm1296 = vcmp.gt.f32.partialorder %v1232, 0.0
    %vm1297 = vcmp.gt.f32.partialorder %v1233, 0.0
    %vm1298 = vcmp.gt.f32.partialorder %v1234, 0.0
    %vm1299 = vcmp.gt.f32.partialorder %v1235, 0.0
    %vm1300 = vcmp.gt.f32.partialorder %v1236, 0.0
    %vm1301 = vcmp.gt.f32.partialorder %v1237, 0.0
    %vm1302 = vcmp.gt.f32.partialorder %v1238, 0.0
    %vm1303 = vcmp.gt.f32.partialorder %v1239, 0.0
    %vm1304 = vcmp.gt.f32.partialorder %v1240, 0.0
    %vm1305 = vcmp.gt.f32.partialorder %v1241, 0.0
    %vm1306 = vcmp.gt.f32.partialorder %v1242, 0.0
    %vm1307 = vcmp.gt.f32.partialorder %v1243, 0.0
    %vm1308 = vcmp.gt.f32.partialorder %v1244, 0.0
    %vm1309 = vcmp.gt.f32.partialorder %v1245, 0.0
    %vm1310 = vcmp.gt.f32.partialorder %v1246, 0.0
    %vm1311 = vcmp.gt.f32.partialorder %v1247, 0.0
    %vm1312 = vcmp.gt.f32.partialorder %v1248, 0.0
    %vm1313 = vcmp.gt.f32.partialorder %v1249, 0.0
    %vm1314 = vcmp.gt.f32.partialorder %v1250, 0.0
    %vm1315 = vcmp.gt.f32.partialorder %v1251, 0.0
    %vm1316 = vcmp.gt.f32.partialorder %v1252, 0.0
    %vm1317 = vcmp.gt.f32.partialorder %v1253, 0.0
    %vm1318 = vcmp.gt.f32.partialorder %v1254, 0.0
    %vm1319 = vcmp.gt.f32.partialorder %v1255, 0.0
    %vm1320 = vcmp.gt.f32.partialorder %v1256, 0.0
    %vm1321 = vcmp.gt.f32.partialorder %v1257, 0.0
    %vm1322 = vcmp.gt.f32.partialorder %v1258, 0.0
    %vm1323 = vcmp.gt.f32.partialorder %v1259, 0.0
    %vm1324 = vcmp.gt.f32.partialorder %v1260, 0.0
    %vm1325 = vcmp.gt.f32.partialorder %v1261, 0.0
    %vm1326 = vcmp.gt.f32.partialorder %v1262, 0.0
    %vm1327 = vcmp.gt.f32.partialorder %v1263, 0.0
    %vm1328 = vcmp.gt.f32.partialorder %v1264, 0.0
    %vm1329 = vcmp.gt.f32.partialorder %v1265, 0.0
    %vm1330 = vcmp.gt.f32.partialorder %v1266, 0.0
    %vm1331 = vcmp.gt.f32.partialorder %v1267, 0.0
    %vm1332 = vcmp.gt.f32.partialorder %v1268, 0.0
    %vm1333 = vcmp.gt.f32.partialorder %v1269, 0.0
    %vm1334 = vcmp.gt.f32.partialorder %v1270, 0.0
    %vm1335 = vcmp.gt.f32.partialorder %v1271, 0.0
    %vm1336 = vcmp.gt.f32.partialorder %v1272, 0.0
    %vm1337 = vcmp.gt.f32.partialorder %v1273, 0.0
    %vm1338 = vcmp.gt.f32.partialorder %v1274, 0.0
    %vm1339 = vcmp.gt.f32.partialorder %v1275, 0.0
    %vm1340 = vcmp.gt.f32.partialorder %v1276, 0.0
    %vm1341 = vcmp.gt.f32.partialorder %v1277, 0.0
    %vm1342 = vcmp.gt.f32.partialorder %v1278, 0.0
    %vm1343 = vcmp.gt.f32.partialorder %v1279, 0.0
    %vm1344 = vcmp.gt.f32.partialorder %v1280, 0.0
    %vm1345 = vcmp.gt.f32.partialorder %v1281, 0.0
    %vm1346 = vcmp.gt.f32.partialorder %v1282, 0.0
    %vm1347 = vcmp.gt.f32.partialorder %v1283, 0.0
    %vm1348 = vcmp.gt.f32.partialorder %v1284, 0.0
    %v1349 = vmul.f32 %v1221, 0.2
    %v1350 = vmul.f32 %v1222, 0.2
    %v1351 = vmul.f32 %v1223, 0.2
    %v1352 = vmul.f32 %v1224, 0.2
    %v1353 = vmul.f32 %v1225, 0.2
    %v1354 = vmul.f32 %v1226, 0.2
    %v1355 = vmul.f32 %v1227, 0.2
    %v1356 = vmul.f32 %v1228, 0.2
    %v1357 = vmul.f32 %v1229, 0.2
    %v1358 = vmul.f32 %v1230, 0.2
    %v1359 = vmul.f32 %v1231, 0.2
    %v1360 = vmul.f32 %v1232, 0.2
    %v1361 = vmul.f32 %v1233, 0.2
    %v1362 = vmul.f32 %v1234, 0.2
    %v1363 = vmul.f32 %v1235, 0.2
    %v1364 = vmul.f32 %v1236, 0.2
    %v1365 = vmul.f32 %v1237, 0.2
    %v1366 = vmul.f32 %v1238, 0.2
    %v1367 = vmul.f32 %v1239, 0.2
    %v1368 = vmul.f32 %v1240, 0.2
    %v1369 = vmul.f32 %v1241, 0.2
    %v1370 = vmul.f32 %v1242, 0.2
    %v1371 = vmul.f32 %v1243, 0.2
    %v1372 = vmul.f32 %v1244, 0.2
    %v1373 = vmul.f32 %v1245, 0.2
    %v1374 = vmul.f32 %v1246, 0.2
    %v1375 = vmul.f32 %v1247, 0.2
    %v1376 = vmul.f32 %v1248, 0.2
    %v1377 = vmul.f32 %v1249, 0.2
    %v1378 = vmul.f32 %v1250, 0.2
    %v1379 = vmul.f32 %v1251, 0.2
    %v1380 = vmul.f32 %v1252, 0.2
    %v1381 = vmul.f32 %v1253, 0.2
    %v1382 = vmul.f32 %v1254, 0.2
    %v1383 = vmul.f32 %v1255, 0.2
    %v1384 = vmul.f32 %v1256, 0.2
    %v1385 = vmul.f32 %v1257, 0.2
    %v1386 = vmul.f32 %v1258, 0.2
    %v1387 = vmul.f32 %v1259, 0.2
    %v1388 = vmul.f32 %v1260, 0.2
    %v1389 = vmul.f32 %v1261, 0.2
    %v1390 = vmul.f32 %v1262, 0.2
    %v1391 = vmul.f32 %v1263, 0.2
    %v1392 = vmul.f32 %v1264, 0.2
    %v1393 = vmul.f32 %v1265, 0.2
    %v1394 = vmul.f32 %v1266, 0.2
    %v1395 = vmul.f32 %v1267, 0.2
    %v1396 = vmul.f32 %v1268, 0.2
    %v1397 = vmul.f32 %v1269, 0.2
    %v1398 = vmul.f32 %v1270, 0.2
    %v1399 = vmul.f32 %v1271, 0.2
    %v1400 = vmul.f32 %v1272, 0.2
    %v1401 = vmul.f32 %v1273, 0.2
    %v1402 = vmul.f32 %v1274, 0.2
    %v1403 = vmul.f32 %v1275, 0.2
    %v1404 = vmul.f32 %v1276, 0.2
    %v1405 = vmul.f32 %v1277, 0.2
    %v1406 = vmul.f32 %v1278, 0.2
    %v1407 = vmul.f32 %v1279, 0.2
    %v1408 = vmul.f32 %v1280, 0.2
    %v1409 = vmul.f32 %v1281, 0.2
    %v1410 = vmul.f32 %v1282, 0.2
    %v1411 = vmul.f32 %v1283, 0.2
    %v1412 = vmul.f32 %v1284, 0.2
    %v1413 = vsel %vm1285, %v1221, %v1349
    %v1414 = vsel %vm1286, %v1222, %v1350
    %v1415 = vsel %vm1287, %v1223, %v1351
    %v1416 = vsel %vm1288, %v1224, %v1352
    %v1417 = vsel %vm1289, %v1225, %v1353
    %v1418 = vsel %vm1290, %v1226, %v1354
    %v1419 = vsel %vm1291, %v1227, %v1355
    %v1420 = vsel %vm1292, %v1228, %v1356
    %v1421 = vsel %vm1293, %v1229, %v1357
    %v1422 = vsel %vm1294, %v1230, %v1358
    %v1423 = vsel %vm1295, %v1231, %v1359
    %v1424 = vsel %vm1296, %v1232, %v1360
    %v1425 = vsel %vm1297, %v1233, %v1361
    %v1426 = vsel %vm1298, %v1234, %v1362
    %v1427 = vsel %vm1299, %v1235, %v1363
    %v1428 = vsel %vm1300, %v1236, %v1364
    %v1429 = vsel %vm1301, %v1237, %v1365
    %v1430 = vsel %vm1302, %v1238, %v1366
    %v1431 = vsel %vm1303, %v1239, %v1367
    %v1432 = vsel %vm1304, %v1240, %v1368
    %v1433 = vsel %vm1305, %v1241, %v1369
    %v1434 = vsel %vm1306, %v1242, %v1370
    %v1435 = vsel %vm1307, %v1243, %v1371
    %v1436 = vsel %vm1308, %v1244, %v1372
    %v1437 = vsel %vm1309, %v1245, %v1373
    %v1438 = vsel %vm1310, %v1246, %v1374
    %v1439 = vsel %vm1311, %v1247, %v1375
    %v1440 = vsel %vm1312, %v1248, %v1376
    %v1441 = vsel %vm1313, %v1249, %v1377
    %v1442 = vsel %vm1314, %v1250, %v1378
    %v1443 = vsel %vm1315, %v1251, %v1379
    %v1444 = vsel %vm1316, %v1252, %v1380
    %v1445 = vsel %vm1317, %v1253, %v1381
    %v1446 = vsel %vm1318, %v1254, %v1382
    %v1447 = vsel %vm1319, %v1255, %v1383
    %v1448 = vsel %vm1320, %v1256, %v1384
    %v1449 = vsel %vm1321, %v1257, %v1385
    %v1450 = vsel %vm1322, %v1258, %v1386
    %v1451 = vsel %vm1323, %v1259, %v1387
    %v1452 = vsel %vm1324, %v1260, %v1388
    %v1453 = vsel %vm1325, %v1261, %v1389
    %v1454 = vsel %vm1326, %v1262, %v1390
    %v1455 = vsel %vm1327, %v1263, %v1391
    %v1456 = vsel %vm1328, %v1264, %v1392
    %v1457 = vsel %vm1329, %v1265, %v1393
    %v1458 = vsel %vm1330, %v1266, %v1394
    %v1459 = vsel %vm1331, %v1267, %v1395
    %v1460 = vsel %vm1332, %v1268, %v1396
    %v1461 = vsel %vm1333, %v1269, %v1397
    %v1462 = vsel %vm1334, %v1270, %v1398
    %v1463 = vsel %vm1335, %v1271, %v1399
    %v1464 = vsel %vm1336, %v1272, %v1400
    %v1465 = vsel %vm1337, %v1273, %v1401
    %v1466 = vsel %vm1338, %v1274, %v1402
    %v1467 = vsel %vm1339, %v1275, %v1403
    %v1468 = vsel %vm1340, %v1276, %v1404
    %v1469 = vsel %vm1341, %v1277, %v1405
    %v1470 = vsel %vm1342, %v1278, %v1406
    %v1471 = vsel %vm1343, %v1279, %v1407
    %v1472 = vsel %vm1344, %v1280, %v1408
    %v1473 = vsel %vm1345, %v1281, %v1409
    %v1474 = vsel %vm1346, %v1282, %v1410
    %v1475 = vsel %vm1347, %v1283, %v1411
    %v1476 = vsel %vm1348, %v1284, %v1412
    %v1477 = vpack.c.bf16 %v1415, %v1413
    %v1478 = vpack.c.bf16 %v1416, %v1414
    %v1479 = vpack.c.bf16 %v1419, %v1417
    %v1480 = vpack.c.bf16 %v1420, %v1418
    %v1481 = vpack.c.bf16 %v1423, %v1421
    %v1482 = vpack.c.bf16 %v1424, %v1422
    %v1483 = vpack.c.bf16 %v1427, %v1425
    %v1484 = vpack.c.bf16 %v1428, %v1426
    %v1485 = vpack.c.bf16 %v1431, %v1429
    %v1486 = vpack.c.bf16 %v1432, %v1430
    %v1487 = vpack.c.bf16 %v1435, %v1433
    %v1488 = vpack.c.bf16 %v1436, %v1434
    %v1489 = vpack.c.bf16 %v1439, %v1437
    %v1490 = vpack.c.bf16 %v1440, %v1438
    %v1491 = vpack.c.bf16 %v1443, %v1441
    %v1492 = vpack.c.bf16 %v1444, %v1442
    %v1493 = vpack.c.bf16 %v1447, %v1445
    %v1494 = vpack.c.bf16 %v1448, %v1446
    %v1495 = vpack.c.bf16 %v1451, %v1449
    %v1496 = vpack.c.bf16 %v1452, %v1450
    %v1497 = vpack.c.bf16 %v1455, %v1453
    %v1498 = vpack.c.bf16 %v1456, %v1454
    %v1499 = vpack.c.bf16 %v1459, %v1457
    %v1500 = vpack.c.bf16 %v1460, %v1458
    %v1501 = vpack.c.bf16 %v1463, %v1461
    %v1502 = vpack.c.bf16 %v1464, %v1462
    %v1503 = vpack.c.bf16 %v1467, %v1465
    %v1504 = vpack.c.bf16 %v1468, %v1466
    %v1505 = vpack.c.bf16 %v1471, %v1469
    %v1506 = vpack.c.bf16 %v1472, %v1470
    %v1507 = vpack.c.bf16 %v1475, %v1473
    %v1508 = vpack.c.bf16 %v1476, %v1474
    %v1509 = vld [vmem:[%s7] sm:$0xff]
    %v1510 = vld [vmem:[%s7 + $0x8] sm:$0xff]
    %v1511 = vld [vmem:[%s7 + $0x10] sm:$0xff]
    %v1512 = vld [vmem:[%s7 + $0x18] sm:$0xff]
    %v1513 = vld [vmem:[%s7 + $0x20] sm:$0xff]
    %v1514 = vld [vmem:[%s7 + $0x28] sm:$0xff]
    %v1515 = vld [vmem:[%s7 + $0x30] sm:$0xff]
    %v1516 = vld [vmem:[%s7 + $0x38] sm:$0xff]
    %v1517 = vld [vmem:[%s7 + $0x40] sm:$0xff]
    %v1518 = vld [vmem:[%s7 + $0x48] sm:$0xff]
    %v1519 = vld [vmem:[%s7 + $0x50] sm:$0xff]
    %v1520 = vld [vmem:[%s7 + $0x58] sm:$0xff]
    %v1521 = vld [vmem:[%s7 + $0x60] sm:$0xff]
    %v1522 = vld [vmem:[%s7 + $0x68] sm:$0xff]
    %v1523 = vld [vmem:[%s7 + $0x70] sm:$0xff]
    %v1524 = vld [vmem:[%s7 + $0x78] sm:$0xff]
    %v1525 = vld [vmem:[%s7 + $0x80] sm:$0xff]
    %v1526 = vld [vmem:[%s7 + $0x88] sm:$0xff]
    %v1527 = vld [vmem:[%s7 + $0x90] sm:$0xff]
    %v1528 = vld [vmem:[%s7 + $0x98] sm:$0xff]
    %v1529 = vld [vmem:[%s7 + $0xa0] sm:$0xff]
    %v1530 = vld [vmem:[%s7 + $0xa8] sm:$0xff]
    %v1531 = vld [vmem:[%s7 + $0xb0] sm:$0xff]
    %v1532 = vld [vmem:[%s7 + $0xb8] sm:$0xff]
    %v1533 = vld [vmem:[%s7 + $0xc0] sm:$0xff]
    %v1534 = vld [vmem:[%s7 + $0xc8] sm:$0xff]
    %v1535 = vld [vmem:[%s7 + $0xd0] sm:$0xff]
    %v1536 = vld [vmem:[%s7 + $0xd8] sm:$0xff]
    %v1537 = vld [vmem:[%s7 + $0xe0] sm:$0xff]
    %v1538 = vld [vmem:[%s7 + $0xe8] sm:$0xff]
    %v1539 = vld [vmem:[%s7 + $0xf0] sm:$0xff]
    %v1540 = vld [vmem:[%s7 + $0xf8] sm:$0xff]
    %v1541 = vld [vmem:[%s7 + $0x100] sm:$0xff]
    %v1542 = vld [vmem:[%s7 + $0x108] sm:$0xff]
    %v1543 = vld [vmem:[%s7 + $0x110] sm:$0xff]
    %v1544 = vld [vmem:[%s7 + $0x118] sm:$0xff]
    %v1545 = vld [vmem:[%s7 + $0x120] sm:$0xff]
    %v1546 = vld [vmem:[%s7 + $0x128] sm:$0xff]
    %v1547 = vld [vmem:[%s7 + $0x130] sm:$0xff]
    %v1548 = vld [vmem:[%s7 + $0x138] sm:$0xff]
    %v1549 = vld [vmem:[%s7 + $0x140] sm:$0xff]
    %v1550 = vld [vmem:[%s7 + $0x148] sm:$0xff]
    %v1551 = vld [vmem:[%s7 + $0x150] sm:$0xff]
    %v1552 = vld [vmem:[%s7 + $0x158] sm:$0xff]
    %v1553 = vld [vmem:[%s7 + $0x160] sm:$0xff]
    %v1554 = vld [vmem:[%s7 + $0x168] sm:$0xff]
    %v1555 = vld [vmem:[%s7 + $0x170] sm:$0xff]
    %v1556 = vld [vmem:[%s7 + $0x178] sm:$0xff]
    %v1557 = vld [vmem:[%s7 + $0x180] sm:$0xff]
    %v1558 = vld [vmem:[%s7 + $0x188] sm:$0xff]
    %v1559 = vld [vmem:[%s7 + $0x190] sm:$0xff]
    %v1560 = vld [vmem:[%s7 + $0x198] sm:$0xff]
    %v1561 = vld [vmem:[%s7 + $0x1a0] sm:$0xff]
    %v1562 = vld [vmem:[%s7 + $0x1a8] sm:$0xff]
    %v1563 = vld [vmem:[%s7 + $0x1b0] sm:$0xff]
    %v1564 = vld [vmem:[%s7 + $0x1b8] sm:$0xff]
    %v1565 = vld [vmem:[%s7 + $0x1c0] sm:$0xff]
    %v1566 = vld [vmem:[%s7 + $0x1c8] sm:$0xff]
    %v1567 = vld [vmem:[%s7 + $0x1d0] sm:$0xff]
    %v1568 = vld [vmem:[%s7 + $0x1d8] sm:$0xff]
    %v1569 = vld [vmem:[%s7 + $0x1e0] sm:$0xff]
    %v1570 = vld [vmem:[%s7 + $0x1e8] sm:$0xff]
    %v1571 = vld [vmem:[%s7 + $0x1f0] sm:$0xff]
    %v1572 = vld [vmem:[%s7 + $0x1f8] sm:$0xff]
    %v1573 = vld [vmem:[%s8] sm:$0xf]
    %v1575 = vperm.slane %v1573, 0
    %v1576 = vperm.slane %v1573, 1
    %v1577 = vperm.slane %v1573, 2
    %v1578 = vperm.slane %v1573, 3
    %v1647 = vunpack.c.l.b16 %v1509
    %v1648 = vunpack.c.h.b16 %v1509
    %v1649 = vunpack.c.l.b16 %v1510
    %v1650 = vunpack.c.h.b16 %v1510
    %v1651 = vunpack.c.l.b16 %v1511
    %v1652 = vunpack.c.h.b16 %v1511
    %v1653 = vunpack.c.l.b16 %v1512
    %v1654 = vunpack.c.h.b16 %v1512
    %v1655 = vunpack.c.l.b16 %v1513
    %v1656 = vunpack.c.h.b16 %v1513
    %v1657 = vunpack.c.l.b16 %v1514
    %v1658 = vunpack.c.h.b16 %v1514
    %v1659 = vunpack.c.l.b16 %v1515
    %v1660 = vunpack.c.h.b16 %v1515
    %v1661 = vunpack.c.l.b16 %v1516
    %v1662 = vunpack.c.h.b16 %v1516
    %v1663 = vunpack.c.l.b16 %v1517
    %v1664 = vunpack.c.h.b16 %v1517
    %v1665 = vunpack.c.l.b16 %v1518
    %v1666 = vunpack.c.h.b16 %v1518
    %v1667 = vunpack.c.l.b16 %v1519
    %v1668 = vunpack.c.h.b16 %v1519
    %v1669 = vunpack.c.l.b16 %v1520
    %v1670 = vunpack.c.h.b16 %v1520
    %v1671 = vunpack.c.l.b16 %v1521
    %v1672 = vunpack.c.h.b16 %v1521
    %v1673 = vunpack.c.l.b16 %v1522
    %v1674 = vunpack.c.h.b16 %v1522
    %v1675 = vunpack.c.l.b16 %v1523
    %v1676 = vunpack.c.h.b16 %v1523
    %v1677 = vunpack.c.l.b16 %v1524
    %v1678 = vunpack.c.h.b16 %v1524
    %v1679 = vunpack.c.l.b16 %v1525
    %v1680 = vunpack.c.h.b16 %v1525
    %v1681 = vunpack.c.l.b16 %v1526
    %v1682 = vunpack.c.h.b16 %v1526
    %v1683 = vunpack.c.l.b16 %v1527
    %v1684 = vunpack.c.h.b16 %v1527
    %v1685 = vunpack.c.l.b16 %v1528
    %v1686 = vunpack.c.h.b16 %v1528
    %v1687 = vunpack.c.l.b16 %v1529
    %v1688 = vunpack.c.h.b16 %v1529
    %v1689 = vunpack.c.l.b16 %v1530
    %v1690 = vunpack.c.h.b16 %v1530
    %v1691 = vunpack.c.l.b16 %v1531
    %v1692 = vunpack.c.h.b16 %v1531
    %v1693 = vunpack.c.l.b16 %v1532
    %v1694 = vunpack.c.h.b16 %v1532
    %v1695 = vunpack.c.l.b16 %v1533
    %v1696 = vunpack.c.h.b16 %v1533
    %v1697 = vunpack.c.l.b16 %v1534
    %v1698 = vunpack.c.h.b16 %v1534
    %v1699 = vunpack.c.l.b16 %v1535
    %v1700 = vunpack.c.h.b16 %v1535
    %v1701 = vunpack.c.l.b16 %v1536
    %v1702 = vunpack.c.h.b16 %v1536
    %v1703 = vunpack.c.l.b16 %v1537
    %v1704 = vunpack.c.h.b16 %v1537
    %v1705 = vunpack.c.l.b16 %v1538
    %v1706 = vunpack.c.h.b16 %v1538
    %v1707 = vunpack.c.l.b16 %v1539
    %v1708 = vunpack.c.h.b16 %v1539
    %v1709 = vunpack.c.l.b16 %v1540
    %v1710 = vunpack.c.h.b16 %v1540
    %v1711 = vunpack.c.l.b16 %v1541
    %v1712 = vunpack.c.h.b16 %v1541
    %v1713 = vunpack.c.l.b16 %v1542
    %v1714 = vunpack.c.h.b16 %v1542
    %v1715 = vunpack.c.l.b16 %v1543
    %v1716 = vunpack.c.h.b16 %v1543
    %v1717 = vunpack.c.l.b16 %v1544
    %v1718 = vunpack.c.h.b16 %v1544
    %v1719 = vunpack.c.l.b16 %v1545
    %v1720 = vunpack.c.h.b16 %v1545
    %v1721 = vunpack.c.l.b16 %v1546
    %v1722 = vunpack.c.h.b16 %v1546
    %v1723 = vunpack.c.l.b16 %v1547
    %v1724 = vunpack.c.h.b16 %v1547
    %v1725 = vunpack.c.l.b16 %v1548
    %v1726 = vunpack.c.h.b16 %v1548
    %v1727 = vunpack.c.l.b16 %v1549
    %v1728 = vunpack.c.h.b16 %v1549
    %v1729 = vunpack.c.l.b16 %v1550
    %v1730 = vunpack.c.h.b16 %v1550
    %v1731 = vunpack.c.l.b16 %v1551
    %v1732 = vunpack.c.h.b16 %v1551
    %v1733 = vunpack.c.l.b16 %v1552
    %v1734 = vunpack.c.h.b16 %v1552
    %v1735 = vunpack.c.l.b16 %v1553
    %v1736 = vunpack.c.h.b16 %v1553
    %v1737 = vunpack.c.l.b16 %v1554
    %v1738 = vunpack.c.h.b16 %v1554
    %v1739 = vunpack.c.l.b16 %v1555
    %v1740 = vunpack.c.h.b16 %v1555
    %v1741 = vunpack.c.l.b16 %v1556
    %v1742 = vunpack.c.h.b16 %v1556
    %v1743 = vunpack.c.l.b16 %v1557
    %v1744 = vunpack.c.h.b16 %v1557
    %v1745 = vunpack.c.l.b16 %v1558
    %v1746 = vunpack.c.h.b16 %v1558
    %v1747 = vunpack.c.l.b16 %v1559
    %v1748 = vunpack.c.h.b16 %v1559
    %v1749 = vunpack.c.l.b16 %v1560
    %v1750 = vunpack.c.h.b16 %v1560
    %v1751 = vunpack.c.l.b16 %v1561
    %v1752 = vunpack.c.h.b16 %v1561
    %v1753 = vunpack.c.l.b16 %v1562
    %v1754 = vunpack.c.h.b16 %v1562
    %v1755 = vunpack.c.l.b16 %v1563
    %v1756 = vunpack.c.h.b16 %v1563
    %v1757 = vunpack.c.l.b16 %v1564
    %v1758 = vunpack.c.h.b16 %v1564
    %v1759 = vunpack.c.l.b16 %v1565
    %v1760 = vunpack.c.h.b16 %v1565
    %v1761 = vunpack.c.l.b16 %v1566
    %v1762 = vunpack.c.h.b16 %v1566
    %v1763 = vunpack.c.l.b16 %v1567
    %v1764 = vunpack.c.h.b16 %v1567
    %v1765 = vunpack.c.l.b16 %v1568
    %v1766 = vunpack.c.h.b16 %v1568
    %v1767 = vunpack.c.l.b16 %v1569
    %v1768 = vunpack.c.h.b16 %v1569
    %v1769 = vunpack.c.l.b16 %v1570
    %v1770 = vunpack.c.h.b16 %v1570
    %v1771 = vunpack.c.l.b16 %v1571
    %v1772 = vunpack.c.h.b16 %v1571
    %v1773 = vunpack.c.l.b16 %v1572
    %v1774 = vunpack.c.h.b16 %v1572
    %v1775 = vpack.c.b16 %v1651, %v1647
    %v1776 = vpack.c.b16 %v1652, %v1648
    %v1777 = vpack.c.b16 %v1653, %v1649
    %v1778 = vpack.c.b16 %v1654, %v1650
    %v1779 = vpack.c.b16 %v1659, %v1655
    %v1780 = vpack.c.b16 %v1660, %v1656
    %v1781 = vpack.c.b16 %v1661, %v1657
    %v1782 = vpack.c.b16 %v1662, %v1658
    %v1783 = vpack.c.b16 %v1667, %v1663
    %v1784 = vpack.c.b16 %v1668, %v1664
    %v1785 = vpack.c.b16 %v1669, %v1665
    %v1786 = vpack.c.b16 %v1670, %v1666
    %v1787 = vpack.c.b16 %v1675, %v1671
    %v1788 = vpack.c.b16 %v1676, %v1672
    %v1789 = vpack.c.b16 %v1677, %v1673
    %v1790 = vpack.c.b16 %v1678, %v1674
    %v1791 = vpack.c.b16 %v1683, %v1679
    %v1792 = vpack.c.b16 %v1684, %v1680
    %v1793 = vpack.c.b16 %v1685, %v1681
    %v1794 = vpack.c.b16 %v1686, %v1682
    %v1795 = vpack.c.b16 %v1691, %v1687
    %v1796 = vpack.c.b16 %v1692, %v1688
    %v1797 = vpack.c.b16 %v1693, %v1689
    %v1798 = vpack.c.b16 %v1694, %v1690
    %v1799 = vpack.c.b16 %v1699, %v1695
    %v1800 = vpack.c.b16 %v1700, %v1696
    %v1801 = vpack.c.b16 %v1701, %v1697
    %v1802 = vpack.c.b16 %v1702, %v1698
    %v1803 = vpack.c.b16 %v1707, %v1703
    %v1804 = vpack.c.b16 %v1708, %v1704
    %v1805 = vpack.c.b16 %v1709, %v1705
    %v1806 = vpack.c.b16 %v1710, %v1706
    %v1807 = vpack.c.b16 %v1715, %v1711
    %v1808 = vpack.c.b16 %v1716, %v1712
    %v1809 = vpack.c.b16 %v1717, %v1713
    %v1810 = vpack.c.b16 %v1718, %v1714
    %v1811 = vpack.c.b16 %v1723, %v1719
    %v1812 = vpack.c.b16 %v1724, %v1720
    %v1813 = vpack.c.b16 %v1725, %v1721
    %v1814 = vpack.c.b16 %v1726, %v1722
    %v1815 = vpack.c.b16 %v1731, %v1727
    %v1816 = vpack.c.b16 %v1732, %v1728
    %v1817 = vpack.c.b16 %v1733, %v1729
    %v1818 = vpack.c.b16 %v1734, %v1730
    %v1819 = vpack.c.b16 %v1739, %v1735
    %v1820 = vpack.c.b16 %v1740, %v1736
    %v1821 = vpack.c.b16 %v1741, %v1737
    %v1822 = vpack.c.b16 %v1742, %v1738
    %v1823 = vpack.c.b16 %v1747, %v1743
    %v1824 = vpack.c.b16 %v1748, %v1744
    %v1825 = vpack.c.b16 %v1749, %v1745
    %v1826 = vpack.c.b16 %v1750, %v1746
    %v1827 = vpack.c.b16 %v1755, %v1751
    %v1828 = vpack.c.b16 %v1756, %v1752
    %v1829 = vpack.c.b16 %v1757, %v1753
    %v1830 = vpack.c.b16 %v1758, %v1754
    %v1831 = vpack.c.b16 %v1763, %v1759
    %v1832 = vpack.c.b16 %v1764, %v1760
    %v1833 = vpack.c.b16 %v1765, %v1761
    %v1834 = vpack.c.b16 %v1766, %v1762
    %v1835 = vpack.c.b16 %v1771, %v1767
    %v1836 = vpack.c.b16 %v1772, %v1768
    %v1837 = vpack.c.b16 %v1773, %v1769
    %v1838 = vpack.c.b16 %v1774, %v1770
    %1903 = vmatpush.bf16.msra.mxu0 %v1803
    %1904 = vmatpush.bf16.msra.mxu0 %v1799
    %1905 = vmatpush.bf16.msra.mxu0 %v1795
    %1906 = vmatpush.bf16.msra.mxu0 %v1791
    %1907 = vmatpush.bf16.msra.mxu0 %v1787
    %1908 = vmatpush.bf16.msra.mxu0 %v1783
    %1909 = vmatpush.bf16.msra.mxu0 %v1779
    %1910 = vmatpush.bf16.msra.mxu0 %v1775
    %1911 = vmatmul.bf16.gmra.mxu0 %v1477
    %v1912 = vpop.f32.mrf.mxu0
    %v1913 = vadd.f32 %v1575, %v1912
    %v1914 = vpop.f32.mrf.mxu0
    %v1915 = vadd.f32 %v1575, %v1914
    %1916 = vmatmul.bf16.gmra.mxu0 %v1479
    %v1917 = vpop.f32.mrf.mxu0
    %v1918 = vadd.f32 %v1575, %v1917
    %v1919 = vpop.f32.mrf.mxu0
    %v1920 = vadd.f32 %v1575, %v1919
    %1921 = vmatmul.bf16.gmra.mxu0 %v1481
    %v1922 = vpop.f32.mrf.mxu0
    %v1923 = vadd.f32 %v1575, %v1922
    %v1924 = vpop.f32.mrf.mxu0
    %v1925 = vadd.f32 %v1575, %v1924
    %1926 = vmatmul.bf16.gmra.mxu0 %v1483
    %v1927 = vpop.f32.mrf.mxu0
    %v1928 = vadd.f32 %v1575, %v1927
    %v1929 = vpop.f32.mrf.mxu0
    %v1930 = vadd.f32 %v1575, %v1929
    %1931 = vmatmul.bf16.gmra.mxu0 %v1485
    %v1932 = vpop.f32.mrf.mxu0
    %v1933 = vadd.f32 %v1575, %v1932
    %v1934 = vpop.f32.mrf.mxu0
    %v1935 = vadd.f32 %v1575, %v1934
    %1936 = vmatmul.bf16.gmra.mxu0 %v1487
    %v1937 = vpop.f32.mrf.mxu0
    %v1938 = vadd.f32 %v1575, %v1937
    %v1939 = vpop.f32.mrf.mxu0
    %v1940 = vadd.f32 %v1575, %v1939
    %1941 = vmatmul.bf16.gmra.mxu0 %v1489
    %v1942 = vpop.f32.mrf.mxu0
    %v1943 = vadd.f32 %v1575, %v1942
    %v1944 = vpop.f32.mrf.mxu0
    %v1945 = vadd.f32 %v1575, %v1944
    %1946 = vmatmul.bf16.gmra.mxu0 %v1491
    %v1947 = vpop.f32.mrf.mxu0
    %v1948 = vadd.f32 %v1575, %v1947
    %v1949 = vpop.f32.mrf.mxu0
    %v1950 = vadd.f32 %v1575, %v1949
    %1951 = vmatmul.bf16.gmra.mxu0 %v1493
    %v1952 = vpop.f32.mrf.mxu0
    %v1953 = vadd.f32 %v1575, %v1952
    %v1954 = vpop.f32.mrf.mxu0
    %v1955 = vadd.f32 %v1575, %v1954
    %1956 = vmatmul.bf16.gmra.mxu0 %v1495
    %v1957 = vpop.f32.mrf.mxu0
    %v1958 = vadd.f32 %v1575, %v1957
    %v1959 = vpop.f32.mrf.mxu0
    %v1960 = vadd.f32 %v1575, %v1959
    %1961 = vmatmul.bf16.gmra.mxu0 %v1497
    %v1962 = vpop.f32.mrf.mxu0
    %v1963 = vadd.f32 %v1575, %v1962
    %v1964 = vpop.f32.mrf.mxu0
    %v1965 = vadd.f32 %v1575, %v1964
    %1966 = vmatmul.bf16.gmra.mxu0 %v1499
    %v1967 = vpop.f32.mrf.mxu0
    %v1968 = vadd.f32 %v1575, %v1967
    %v1969 = vpop.f32.mrf.mxu0
    %v1970 = vadd.f32 %v1575, %v1969
    %1971 = vmatmul.bf16.gmra.mxu0 %v1501
    %v1972 = vpop.f32.mrf.mxu0
    %v1973 = vadd.f32 %v1575, %v1972
    %v1974 = vpop.f32.mrf.mxu0
    %v1975 = vadd.f32 %v1575, %v1974
    %1976 = vmatmul.bf16.gmra.mxu0 %v1503
    %v1977 = vpop.f32.mrf.mxu0
    %v1978 = vadd.f32 %v1575, %v1977
    %v1979 = vpop.f32.mrf.mxu0
    %v1980 = vadd.f32 %v1575, %v1979
    %1981 = vmatmul.bf16.gmra.mxu0 %v1505
    %v1982 = vpop.f32.mrf.mxu0
    %v1983 = vadd.f32 %v1575, %v1982
    %v1984 = vpop.f32.mrf.mxu0
    %v1985 = vadd.f32 %v1575, %v1984
    %1986 = vmatmul.bf16.gmra.mxu0 %v1507
    %v1987 = vpop.f32.mrf.mxu0
    %v1988 = vadd.f32 %v1575, %v1987
    %v1989 = vpop.f32.mrf.mxu0
    %v1990 = vadd.f32 %v1575, %v1989
    %1991 = vdwg.mxu0
    %1992 = vmatpush.bf16.msra.mxu0 %v1835
    %1993 = vmatpush.bf16.msra.mxu0 %v1831
    %1994 = vmatpush.bf16.msra.mxu0 %v1827
    %1995 = vmatpush.bf16.msra.mxu0 %v1823
    %1996 = vmatpush.bf16.msra.mxu0 %v1819
    %1997 = vmatpush.bf16.msra.mxu0 %v1815
    %1998 = vmatpush.bf16.msra.mxu0 %v1811
    %1999 = vmatpush.bf16.msra.mxu0 %v1807
    %2000 = vmatmul.bf16.gmra.mxu0 %v1478
    %v2001 = vpop.f32.mrf.mxu0
    %v2002 = vadd.f32 %v1913, %v2001
    %v2003 = vpop.f32.mrf.mxu0
    %v2004 = vadd.f32 %v1915, %v2003
    %2005 = vmatmul.bf16.gmra.mxu0 %v1480
    %v2006 = vpop.f32.mrf.mxu0
    %v2007 = vadd.f32 %v1918, %v2006
    %v2008 = vpop.f32.mrf.mxu0
    %v2009 = vadd.f32 %v1920, %v2008
    %2010 = vmatmul.bf16.gmra.mxu0 %v1482
    %v2011 = vpop.f32.mrf.mxu0
    %v2012 = vadd.f32 %v1923, %v2011
    %v2013 = vpop.f32.mrf.mxu0
    %v2014 = vadd.f32 %v1925, %v2013
    %2015 = vmatmul.bf16.gmra.mxu0 %v1484
    %v2016 = vpop.f32.mrf.mxu0
    %v2017 = vadd.f32 %v1928, %v2016
    %v2018 = vpop.f32.mrf.mxu0
    %v2019 = vadd.f32 %v1930, %v2018
    %2020 = vmatmul.bf16.gmra.mxu0 %v1486
    %v2021 = vpop.f32.mrf.mxu0
    %v2022 = vadd.f32 %v1933, %v2021
    %v2023 = vpop.f32.mrf.mxu0
    %v2024 = vadd.f32 %v1935, %v2023
    %2025 = vmatmul.bf16.gmra.mxu0 %v1488
    %v2026 = vpop.f32.mrf.mxu0
    %v2027 = vadd.f32 %v1938, %v2026
    %v2028 = vpop.f32.mrf.mxu0
    %v2029 = vadd.f32 %v1940, %v2028
    %2030 = vmatmul.bf16.gmra.mxu0 %v1490
    %v2031 = vpop.f32.mrf.mxu0
    %v2032 = vadd.f32 %v1943, %v2031
    %v2033 = vpop.f32.mrf.mxu0
    %v2034 = vadd.f32 %v1945, %v2033
    %2035 = vmatmul.bf16.gmra.mxu0 %v1492
    %v2036 = vpop.f32.mrf.mxu0
    %v2037 = vadd.f32 %v1948, %v2036
    %v2038 = vpop.f32.mrf.mxu0
    %v2039 = vadd.f32 %v1950, %v2038
    %2040 = vmatmul.bf16.gmra.mxu0 %v1494
    %v2041 = vpop.f32.mrf.mxu0
    %v2042 = vadd.f32 %v1953, %v2041
    %v2043 = vpop.f32.mrf.mxu0
    %v2044 = vadd.f32 %v1955, %v2043
    %2045 = vmatmul.bf16.gmra.mxu0 %v1496
    %v2046 = vpop.f32.mrf.mxu0
    %v2047 = vadd.f32 %v1958, %v2046
    %v2048 = vpop.f32.mrf.mxu0
    %v2049 = vadd.f32 %v1960, %v2048
    %2050 = vmatmul.bf16.gmra.mxu0 %v1498
    %v2051 = vpop.f32.mrf.mxu0
    %v2052 = vadd.f32 %v1963, %v2051
    %v2053 = vpop.f32.mrf.mxu0
    %v2054 = vadd.f32 %v1965, %v2053
    %2055 = vmatmul.bf16.gmra.mxu0 %v1500
    %v2056 = vpop.f32.mrf.mxu0
    %v2057 = vadd.f32 %v1968, %v2056
    %v2058 = vpop.f32.mrf.mxu0
    %v2059 = vadd.f32 %v1970, %v2058
    %2060 = vmatmul.bf16.gmra.mxu0 %v1502
    %v2061 = vpop.f32.mrf.mxu0
    %v2062 = vadd.f32 %v1973, %v2061
    %v2063 = vpop.f32.mrf.mxu0
    %v2064 = vadd.f32 %v1975, %v2063
    %2065 = vmatmul.bf16.gmra.mxu0 %v1504
    %v2066 = vpop.f32.mrf.mxu0
    %v2067 = vadd.f32 %v1978, %v2066
    %v2068 = vpop.f32.mrf.mxu0
    %v2069 = vadd.f32 %v1980, %v2068
    %2070 = vmatmul.bf16.gmra.mxu0 %v1506
    %v2071 = vpop.f32.mrf.mxu0
    %v2072 = vadd.f32 %v1983, %v2071
    %v2073 = vpop.f32.mrf.mxu0
    %v2074 = vadd.f32 %v1985, %v2073
    %2075 = vmatmul.bf16.gmra.mxu0 %v1508
    %v2076 = vpop.f32.mrf.mxu0
    %v2077 = vadd.f32 %v1988, %v2076
    %v2078 = vpop.f32.mrf.mxu0
    %v2079 = vadd.f32 %v1990, %v2078
    %2080 = vdwg.mxu0
    %2081 = vmatpush.bf16.msra.mxu0 %v1804
    %2082 = vmatpush.bf16.msra.mxu0 %v1800
    %2083 = vmatpush.bf16.msra.mxu0 %v1796
    %2084 = vmatpush.bf16.msra.mxu0 %v1792
    %2085 = vmatpush.bf16.msra.mxu0 %v1788
    %2086 = vmatpush.bf16.msra.mxu0 %v1784
    %2087 = vmatpush.bf16.msra.mxu0 %v1780
    %2088 = vmatpush.bf16.msra.mxu0 %v1776
    %2089 = vmatmul.bf16.gmra.mxu0 %v1477
    %v2090 = vpop.f32.mrf.mxu0
    %v2091 = vadd.f32 %v1576, %v2090
    %v2092 = vpop.f32.mrf.mxu0
    %v2093 = vadd.f32 %v1576, %v2092
    %2094 = vmatmul.bf16.gmra.mxu0 %v1479
    %v2095 = vpop.f32.mrf.mxu0
    %v2096 = vadd.f32 %v1576, %v2095
    %v2097 = vpop.f32.mrf.mxu0
    %v2098 = vadd.f32 %v1576, %v2097
    %2099 = vmatmul.bf16.gmra.mxu0 %v1481
    %v2100 = vpop.f32.mrf.mxu0
    %v2101 = vadd.f32 %v1576, %v2100
    %v2102 = vpop.f32.mrf.mxu0
    %v2103 = vadd.f32 %v1576, %v2102
    %2104 = vmatmul.bf16.gmra.mxu0 %v1483
    %v2105 = vpop.f32.mrf.mxu0
    %v2106 = vadd.f32 %v1576, %v2105
    %v2107 = vpop.f32.mrf.mxu0
    %v2108 = vadd.f32 %v1576, %v2107
    %2109 = vmatmul.bf16.gmra.mxu0 %v1485
    %v2110 = vpop.f32.mrf.mxu0
    %v2111 = vadd.f32 %v1576, %v2110
    %v2112 = vpop.f32.mrf.mxu0
    %v2113 = vadd.f32 %v1576, %v2112
    %2114 = vmatmul.bf16.gmra.mxu0 %v1487
    %v2115 = vpop.f32.mrf.mxu0
    %v2116 = vadd.f32 %v1576, %v2115
    %v2117 = vpop.f32.mrf.mxu0
    %v2118 = vadd.f32 %v1576, %v2117
    %2119 = vmatmul.bf16.gmra.mxu0 %v1489
    %v2120 = vpop.f32.mrf.mxu0
    %v2121 = vadd.f32 %v1576, %v2120
    %v2122 = vpop.f32.mrf.mxu0
    %v2123 = vadd.f32 %v1576, %v2122
    %2124 = vmatmul.bf16.gmra.mxu0 %v1491
    %v2125 = vpop.f32.mrf.mxu0
    %v2126 = vadd.f32 %v1576, %v2125
    %v2127 = vpop.f32.mrf.mxu0
    %v2128 = vadd.f32 %v1576, %v2127
    %2129 = vmatmul.bf16.gmra.mxu0 %v1493
    %v2130 = vpop.f32.mrf.mxu0
    %v2131 = vadd.f32 %v1576, %v2130
    %v2132 = vpop.f32.mrf.mxu0
    %v2133 = vadd.f32 %v1576, %v2132
    %2134 = vmatmul.bf16.gmra.mxu0 %v1495
    %v2135 = vpop.f32.mrf.mxu0
    %v2136 = vadd.f32 %v1576, %v2135
    %v2137 = vpop.f32.mrf.mxu0
    %v2138 = vadd.f32 %v1576, %v2137
    %2139 = vmatmul.bf16.gmra.mxu0 %v1497
    %v2140 = vpop.f32.mrf.mxu0
    %v2141 = vadd.f32 %v1576, %v2140
    %v2142 = vpop.f32.mrf.mxu0
    %v2143 = vadd.f32 %v1576, %v2142
    %2144 = vmatmul.bf16.gmra.mxu0 %v1499
    %v2145 = vpop.f32.mrf.mxu0
    %v2146 = vadd.f32 %v1576, %v2145
    %v2147 = vpop.f32.mrf.mxu0
    %v2148 = vadd.f32 %v1576, %v2147
    %2149 = vmatmul.bf16.gmra.mxu0 %v1501
    %v2150 = vpop.f32.mrf.mxu0
    %v2151 = vadd.f32 %v1576, %v2150
    %v2152 = vpop.f32.mrf.mxu0
    %v2153 = vadd.f32 %v1576, %v2152
    %2154 = vmatmul.bf16.gmra.mxu0 %v1503
    %v2155 = vpop.f32.mrf.mxu0
    %v2156 = vadd.f32 %v1576, %v2155
    %v2157 = vpop.f32.mrf.mxu0
    %v2158 = vadd.f32 %v1576, %v2157
    %2159 = vmatmul.bf16.gmra.mxu0 %v1505
    %v2160 = vpop.f32.mrf.mxu0
    %v2161 = vadd.f32 %v1576, %v2160
    %v2162 = vpop.f32.mrf.mxu0
    %v2163 = vadd.f32 %v1576, %v2162
    %2164 = vmatmul.bf16.gmra.mxu0 %v1507
    %v2165 = vpop.f32.mrf.mxu0
    %v2166 = vadd.f32 %v1576, %v2165
    %v2167 = vpop.f32.mrf.mxu0
    %v2168 = vadd.f32 %v1576, %v2167
    %2169 = vdwg.mxu0
    %2170 = vmatpush.bf16.msra.mxu0 %v1836
    %2171 = vmatpush.bf16.msra.mxu0 %v1832
    %2172 = vmatpush.bf16.msra.mxu0 %v1828
    %2173 = vmatpush.bf16.msra.mxu0 %v1824
    %2174 = vmatpush.bf16.msra.mxu0 %v1820
    %2175 = vmatpush.bf16.msra.mxu0 %v1816
    %2176 = vmatpush.bf16.msra.mxu0 %v1812
    %2177 = vmatpush.bf16.msra.mxu0 %v1808
    %2178 = vmatmul.bf16.gmra.mxu0 %v1478
    %v2179 = vpop.f32.mrf.mxu0
    %v2180 = vadd.f32 %v2091, %v2179
    %v2181 = vpop.f32.mrf.mxu0
    %v2182 = vadd.f32 %v2093, %v2181
    %2183 = vmatmul.bf16.gmra.mxu0 %v1480
    %v2184 = vpop.f32.mrf.mxu0
    %v2185 = vadd.f32 %v2096, %v2184
    %v2186 = vpop.f32.mrf.mxu0
    %v2187 = vadd.f32 %v2098, %v2186
    %2188 = vmatmul.bf16.gmra.mxu0 %v1482
    %v2189 = vpop.f32.mrf.mxu0
    %v2190 = vadd.f32 %v2101, %v2189
    %v2191 = vpop.f32.mrf.mxu0
    %v2192 = vadd.f32 %v2103, %v2191
    %2193 = vmatmul.bf16.gmra.mxu0 %v1484
    %v2194 = vpop.f32.mrf.mxu0
    %v2195 = vadd.f32 %v2106, %v2194
    %v2196 = vpop.f32.mrf.mxu0
    %v2197 = vadd.f32 %v2108, %v2196
    %2198 = vmatmul.bf16.gmra.mxu0 %v1486
    %v2199 = vpop.f32.mrf.mxu0
    %v2200 = vadd.f32 %v2111, %v2199
    %v2201 = vpop.f32.mrf.mxu0
    %v2202 = vadd.f32 %v2113, %v2201
    %2203 = vmatmul.bf16.gmra.mxu0 %v1488
    %v2204 = vpop.f32.mrf.mxu0
    %v2205 = vadd.f32 %v2116, %v2204
    %v2206 = vpop.f32.mrf.mxu0
    %v2207 = vadd.f32 %v2118, %v2206
    %2208 = vmatmul.bf16.gmra.mxu0 %v1490
    %v2209 = vpop.f32.mrf.mxu0
    %v2210 = vadd.f32 %v2121, %v2209
    %v2211 = vpop.f32.mrf.mxu0
    %v2212 = vadd.f32 %v2123, %v2211
    %2213 = vmatmul.bf16.gmra.mxu0 %v1492
    %v2214 = vpop.f32.mrf.mxu0
    %v2215 = vadd.f32 %v2126, %v2214
    %v2216 = vpop.f32.mrf.mxu0
    %v2217 = vadd.f32 %v2128, %v2216
    %2218 = vmatmul.bf16.gmra.mxu0 %v1494
    %v2219 = vpop.f32.mrf.mxu0
    %v2220 = vadd.f32 %v2131, %v2219
    %v2221 = vpop.f32.mrf.mxu0
    %v2222 = vadd.f32 %v2133, %v2221
    %2223 = vmatmul.bf16.gmra.mxu0 %v1496
    %v2224 = vpop.f32.mrf.mxu0
    %v2225 = vadd.f32 %v2136, %v2224
    %v2226 = vpop.f32.mrf.mxu0
    %v2227 = vadd.f32 %v2138, %v2226
    %2228 = vmatmul.bf16.gmra.mxu0 %v1498
    %v2229 = vpop.f32.mrf.mxu0
    %v2230 = vadd.f32 %v2141, %v2229
    %v2231 = vpop.f32.mrf.mxu0
    %v2232 = vadd.f32 %v2143, %v2231
    %2233 = vmatmul.bf16.gmra.mxu0 %v1500
    %v2234 = vpop.f32.mrf.mxu0
    %v2235 = vadd.f32 %v2146, %v2234
    %v2236 = vpop.f32.mrf.mxu0
    %v2237 = vadd.f32 %v2148, %v2236
    %2238 = vmatmul.bf16.gmra.mxu0 %v1502
    %v2239 = vpop.f32.mrf.mxu0
    %v2240 = vadd.f32 %v2151, %v2239
    %v2241 = vpop.f32.mrf.mxu0
    %v2242 = vadd.f32 %v2153, %v2241
    %2243 = vmatmul.bf16.gmra.mxu0 %v1504
    %v2244 = vpop.f32.mrf.mxu0
    %v2245 = vadd.f32 %v2156, %v2244
    %v2246 = vpop.f32.mrf.mxu0
    %v2247 = vadd.f32 %v2158, %v2246
    %2248 = vmatmul.bf16.gmra.mxu0 %v1506
    %v2249 = vpop.f32.mrf.mxu0
    %v2250 = vadd.f32 %v2161, %v2249
    %v2251 = vpop.f32.mrf.mxu0
    %v2252 = vadd.f32 %v2163, %v2251
    %2253 = vmatmul.bf16.gmra.mxu0 %v1508
    %v2254 = vpop.f32.mrf.mxu0
    %v2255 = vadd.f32 %v2166, %v2254
    %v2256 = vpop.f32.mrf.mxu0
    %v2257 = vadd.f32 %v2168, %v2256
    %2258 = vdwg.mxu0
    %2259 = vmatpush.bf16.msra.mxu0 %v1805
    %2260 = vmatpush.bf16.msra.mxu0 %v1801
    %2261 = vmatpush.bf16.msra.mxu0 %v1797
    %2262 = vmatpush.bf16.msra.mxu0 %v1793
    %2263 = vmatpush.bf16.msra.mxu0 %v1789
    %2264 = vmatpush.bf16.msra.mxu0 %v1785
    %2265 = vmatpush.bf16.msra.mxu0 %v1781
    %2266 = vmatpush.bf16.msra.mxu0 %v1777
    %2267 = vmatmul.bf16.gmra.mxu0 %v1477
    %v2268 = vpop.f32.mrf.mxu0
    %v2269 = vadd.f32 %v1577, %v2268
    %v2270 = vpop.f32.mrf.mxu0
    %v2271 = vadd.f32 %v1577, %v2270
    %2272 = vmatmul.bf16.gmra.mxu0 %v1479
    %v2273 = vpop.f32.mrf.mxu0
    %v2274 = vadd.f32 %v1577, %v2273
    %v2275 = vpop.f32.mrf.mxu0
    %v2276 = vadd.f32 %v1577, %v2275
    %2277 = vmatmul.bf16.gmra.mxu0 %v1481
    %v2278 = vpop.f32.mrf.mxu0
    %v2279 = vadd.f32 %v1577, %v2278
    %v2280 = vpop.f32.mrf.mxu0
    %v2281 = vadd.f32 %v1577, %v2280
    %2282 = vmatmul.bf16.gmra.mxu0 %v1483
    %v2283 = vpop.f32.mrf.mxu0
    %v2284 = vadd.f32 %v1577, %v2283
    %v2285 = vpop.f32.mrf.mxu0
    %v2286 = vadd.f32 %v1577, %v2285
    %2287 = vmatmul.bf16.gmra.mxu0 %v1485
    %v2288 = vpop.f32.mrf.mxu0
    %v2289 = vadd.f32 %v1577, %v2288
    %v2290 = vpop.f32.mrf.mxu0
    %v2291 = vadd.f32 %v1577, %v2290
    %2292 = vmatmul.bf16.gmra.mxu0 %v1487
    %v2293 = vpop.f32.mrf.mxu0
    %v2294 = vadd.f32 %v1577, %v2293
    %v2295 = vpop.f32.mrf.mxu0
    %v2296 = vadd.f32 %v1577, %v2295
    %2297 = vmatmul.bf16.gmra.mxu0 %v1489
    %v2298 = vpop.f32.mrf.mxu0
    %v2299 = vadd.f32 %v1577, %v2298
    %v2300 = vpop.f32.mrf.mxu0
    %v2301 = vadd.f32 %v1577, %v2300
    %2302 = vmatmul.bf16.gmra.mxu0 %v1491
    %v2303 = vpop.f32.mrf.mxu0
    %v2304 = vadd.f32 %v1577, %v2303
    %v2305 = vpop.f32.mrf.mxu0
    %v2306 = vadd.f32 %v1577, %v2305
    %2307 = vmatmul.bf16.gmra.mxu0 %v1493
    %v2308 = vpop.f32.mrf.mxu0
    %v2309 = vadd.f32 %v1577, %v2308
    %v2310 = vpop.f32.mrf.mxu0
    %v2311 = vadd.f32 %v1577, %v2310
    %2312 = vmatmul.bf16.gmra.mxu0 %v1495
    %v2313 = vpop.f32.mrf.mxu0
    %v2314 = vadd.f32 %v1577, %v2313
    %v2315 = vpop.f32.mrf.mxu0
    %v2316 = vadd.f32 %v1577, %v2315
    %2317 = vmatmul.bf16.gmra.mxu0 %v1497
    %v2318 = vpop.f32.mrf.mxu0
    %v2319 = vadd.f32 %v1577, %v2318
    %v2320 = vpop.f32.mrf.mxu0
    %v2321 = vadd.f32 %v1577, %v2320
    %2322 = vmatmul.bf16.gmra.mxu0 %v1499
    %v2323 = vpop.f32.mrf.mxu0
    %v2324 = vadd.f32 %v1577, %v2323
    %v2325 = vpop.f32.mrf.mxu0
    %v2326 = vadd.f32 %v1577, %v2325
    %2327 = vmatmul.bf16.gmra.mxu0 %v1501
    %v2328 = vpop.f32.mrf.mxu0
    %v2329 = vadd.f32 %v1577, %v2328
    %v2330 = vpop.f32.mrf.mxu0
    %v2331 = vadd.f32 %v1577, %v2330
    %2332 = vmatmul.bf16.gmra.mxu0 %v1503
    %v2333 = vpop.f32.mrf.mxu0
    %v2334 = vadd.f32 %v1577, %v2333
    %v2335 = vpop.f32.mrf.mxu0
    %v2336 = vadd.f32 %v1577, %v2335
    %2337 = vmatmul.bf16.gmra.mxu0 %v1505
    %v2338 = vpop.f32.mrf.mxu0
    %v2339 = vadd.f32 %v1577, %v2338
    %v2340 = vpop.f32.mrf.mxu0
    %v2341 = vadd.f32 %v1577, %v2340
    %2342 = vmatmul.bf16.gmra.mxu0 %v1507
    %v2343 = vpop.f32.mrf.mxu0
    %v2344 = vadd.f32 %v1577, %v2343
    %v2345 = vpop.f32.mrf.mxu0
    %v2346 = vadd.f32 %v1577, %v2345
    %2347 = vdwg.mxu0
    %2348 = vmatpush.bf16.msra.mxu0 %v1837
    %2349 = vmatpush.bf16.msra.mxu0 %v1833
    %2350 = vmatpush.bf16.msra.mxu0 %v1829
    %2351 = vmatpush.bf16.msra.mxu0 %v1825
    %2352 = vmatpush.bf16.msra.mxu0 %v1821
    %2353 = vmatpush.bf16.msra.mxu0 %v1817
    %2354 = vmatpush.bf16.msra.mxu0 %v1813
    %2355 = vmatpush.bf16.msra.mxu0 %v1809
    %2356 = vmatmul.bf16.gmra.mxu0 %v1478
    %v2357 = vpop.f32.mrf.mxu0
    %v2358 = vadd.f32 %v2269, %v2357
    %v2359 = vpop.f32.mrf.mxu0
    %v2360 = vadd.f32 %v2271, %v2359
    %2361 = vmatmul.bf16.gmra.mxu0 %v1480
    %v2362 = vpop.f32.mrf.mxu0
    %v2363 = vadd.f32 %v2274, %v2362
    %v2364 = vpop.f32.mrf.mxu0
    %v2365 = vadd.f32 %v2276, %v2364
    %2366 = vmatmul.bf16.gmra.mxu0 %v1482
    %v2367 = vpop.f32.mrf.mxu0
    %v2368 = vadd.f32 %v2279, %v2367
    %v2369 = vpop.f32.mrf.mxu0
    %v2370 = vadd.f32 %v2281, %v2369
    %2371 = vmatmul.bf16.gmra.mxu0 %v1484
    %v2372 = vpop.f32.mrf.mxu0
    %v2373 = vadd.f32 %v2284, %v2372
    %v2374 = vpop.f32.mrf.mxu0
    %v2375 = vadd.f32 %v2286, %v2374
    %2376 = vmatmul.bf16.gmra.mxu0 %v1486
    %v2377 = vpop.f32.mrf.mxu0
    %v2378 = vadd.f32 %v2289, %v2377
    %v2379 = vpop.f32.mrf.mxu0
    %v2380 = vadd.f32 %v2291, %v2379
    %2381 = vmatmul.bf16.gmra.mxu0 %v1488
    %v2382 = vpop.f32.mrf.mxu0
    %v2383 = vadd.f32 %v2294, %v2382
    %v2384 = vpop.f32.mrf.mxu0
    %v2385 = vadd.f32 %v2296, %v2384
    %2386 = vmatmul.bf16.gmra.mxu0 %v1490
    %v2387 = vpop.f32.mrf.mxu0
    %v2388 = vadd.f32 %v2299, %v2387
    %v2389 = vpop.f32.mrf.mxu0
    %v2390 = vadd.f32 %v2301, %v2389
    %2391 = vmatmul.bf16.gmra.mxu0 %v1492
    %v2392 = vpop.f32.mrf.mxu0
    %v2393 = vadd.f32 %v2304, %v2392
    %v2394 = vpop.f32.mrf.mxu0
    %v2395 = vadd.f32 %v2306, %v2394
    %2396 = vmatmul.bf16.gmra.mxu0 %v1494
    %v2397 = vpop.f32.mrf.mxu0
    %v2398 = vadd.f32 %v2309, %v2397
    %v2399 = vpop.f32.mrf.mxu0
    %v2400 = vadd.f32 %v2311, %v2399
    %2401 = vmatmul.bf16.gmra.mxu0 %v1496
    %v2402 = vpop.f32.mrf.mxu0
    %v2403 = vadd.f32 %v2314, %v2402
    %v2404 = vpop.f32.mrf.mxu0
    %v2405 = vadd.f32 %v2316, %v2404
    %2406 = vmatmul.bf16.gmra.mxu0 %v1498
    %v2407 = vpop.f32.mrf.mxu0
    %v2408 = vadd.f32 %v2319, %v2407
    %v2409 = vpop.f32.mrf.mxu0
    %v2410 = vadd.f32 %v2321, %v2409
    %2411 = vmatmul.bf16.gmra.mxu0 %v1500
    %v2412 = vpop.f32.mrf.mxu0
    %v2413 = vadd.f32 %v2324, %v2412
    %v2414 = vpop.f32.mrf.mxu0
    %v2415 = vadd.f32 %v2326, %v2414
    %2416 = vmatmul.bf16.gmra.mxu0 %v1502
    %v2417 = vpop.f32.mrf.mxu0
    %v2418 = vadd.f32 %v2329, %v2417
    %v2419 = vpop.f32.mrf.mxu0
    %v2420 = vadd.f32 %v2331, %v2419
    %2421 = vmatmul.bf16.gmra.mxu0 %v1504
    %v2422 = vpop.f32.mrf.mxu0
    %v2423 = vadd.f32 %v2334, %v2422
    %v2424 = vpop.f32.mrf.mxu0
    %v2425 = vadd.f32 %v2336, %v2424
    %2426 = vmatmul.bf16.gmra.mxu0 %v1506
    %v2427 = vpop.f32.mrf.mxu0
    %v2428 = vadd.f32 %v2339, %v2427
    %v2429 = vpop.f32.mrf.mxu0
    %v2430 = vadd.f32 %v2341, %v2429
    %2431 = vmatmul.bf16.gmra.mxu0 %v1508
    %v2432 = vpop.f32.mrf.mxu0
    %v2433 = vadd.f32 %v2344, %v2432
    %v2434 = vpop.f32.mrf.mxu0
    %v2435 = vadd.f32 %v2346, %v2434
    %2436 = vdwg.mxu0
    %2437 = vmatpush.bf16.msra.mxu0 %v1806
    %2438 = vmatpush.bf16.msra.mxu0 %v1802
    %2439 = vmatpush.bf16.msra.mxu0 %v1798
    %2440 = vmatpush.bf16.msra.mxu0 %v1794
    %2441 = vmatpush.bf16.msra.mxu0 %v1790
    %2442 = vmatpush.bf16.msra.mxu0 %v1786
    %2443 = vmatpush.bf16.msra.mxu0 %v1782
    %2444 = vmatpush.bf16.msra.mxu0 %v1778
    %2445 = vmatmul.bf16.gmra.mxu0 %v1477
    %v2446 = vpop.f32.mrf.mxu0
    %v2447 = vadd.f32 %v1578, %v2446
    %v2448 = vpop.f32.mrf.mxu0
    %v2449 = vadd.f32 %v1578, %v2448
    %2450 = vmatmul.bf16.gmra.mxu0 %v1479
    %v2451 = vpop.f32.mrf.mxu0
    %v2452 = vadd.f32 %v1578, %v2451
    %v2453 = vpop.f32.mrf.mxu0
    %v2454 = vadd.f32 %v1578, %v2453
    %2455 = vmatmul.bf16.gmra.mxu0 %v1481
    %v2456 = vpop.f32.mrf.mxu0
    %v2457 = vadd.f32 %v1578, %v2456
    %v2458 = vpop.f32.mrf.mxu0
    %v2459 = vadd.f32 %v1578, %v2458
    %2460 = vmatmul.bf16.gmra.mxu0 %v1483
    %v2461 = vpop.f32.mrf.mxu0
    %v2462 = vadd.f32 %v1578, %v2461
    %v2463 = vpop.f32.mrf.mxu0
    %v2464 = vadd.f32 %v1578, %v2463
    %2465 = vmatmul.bf16.gmra.mxu0 %v1485
    %v2466 = vpop.f32.mrf.mxu0
    %v2467 = vadd.f32 %v1578, %v2466
    %v2468 = vpop.f32.mrf.mxu0
    %v2469 = vadd.f32 %v1578, %v2468
    %2470 = vmatmul.bf16.gmra.mxu0 %v1487
    %v2471 = vpop.f32.mrf.mxu0
    %v2472 = vadd.f32 %v1578, %v2471
    %v2473 = vpop.f32.mrf.mxu0
    %v2474 = vadd.f32 %v1578, %v2473
    %2475 = vmatmul.bf16.gmra.mxu0 %v1489
    %v2476 = vpop.f32.mrf.mxu0
    %v2477 = vadd.f32 %v1578, %v2476
    %v2478 = vpop.f32.mrf.mxu0
    %v2479 = vadd.f32 %v1578, %v2478
    %2480 = vmatmul.bf16.gmra.mxu0 %v1491
    %v2481 = vpop.f32.mrf.mxu0
    %v2482 = vadd.f32 %v1578, %v2481
    %v2483 = vpop.f32.mrf.mxu0
    %v2484 = vadd.f32 %v1578, %v2483
    %2485 = vmatmul.bf16.gmra.mxu0 %v1493
    %v2486 = vpop.f32.mrf.mxu0
    %v2487 = vadd.f32 %v1578, %v2486
    %v2488 = vpop.f32.mrf.mxu0
    %v2489 = vadd.f32 %v1578, %v2488
    %2490 = vmatmul.bf16.gmra.mxu0 %v1495
    %v2491 = vpop.f32.mrf.mxu0
    %v2492 = vadd.f32 %v1578, %v2491
    %v2493 = vpop.f32.mrf.mxu0
    %v2494 = vadd.f32 %v1578, %v2493
    %2495 = vmatmul.bf16.gmra.mxu0 %v1497
    %v2496 = vpop.f32.mrf.mxu0
    %v2497 = vadd.f32 %v1578, %v2496
    %v2498 = vpop.f32.mrf.mxu0
    %v2499 = vadd.f32 %v1578, %v2498
    %2500 = vmatmul.bf16.gmra.mxu0 %v1499
    %v2501 = vpop.f32.mrf.mxu0
    %v2502 = vadd.f32 %v1578, %v2501
    %v2503 = vpop.f32.mrf.mxu0
    %v2504 = vadd.f32 %v1578, %v2503
    %2505 = vmatmul.bf16.gmra.mxu0 %v1501
    %v2506 = vpop.f32.mrf.mxu0
    %v2507 = vadd.f32 %v1578, %v2506
    %v2508 = vpop.f32.mrf.mxu0
    %v2509 = vadd.f32 %v1578, %v2508
    %2510 = vmatmul.bf16.gmra.mxu0 %v1503
    %v2511 = vpop.f32.mrf.mxu0
    %v2512 = vadd.f32 %v1578, %v2511
    %v2513 = vpop.f32.mrf.mxu0
    %v2514 = vadd.f32 %v1578, %v2513
    %2515 = vmatmul.bf16.gmra.mxu0 %v1505
    %v2516 = vpop.f32.mrf.mxu0
    %v2517 = vadd.f32 %v1578, %v2516
    %v2518 = vpop.f32.mrf.mxu0
    %v2519 = vadd.f32 %v1578, %v2518
    %2520 = vmatmul.bf16.gmra.mxu0 %v1507
    %v2521 = vpop.f32.mrf.mxu0
    %v2522 = vadd.f32 %v1578, %v2521
    %v2523 = vpop.f32.mrf.mxu0
    %v2524 = vadd.f32 %v1578, %v2523
    %2525 = vdwg.mxu0
    %2526 = vmatpush.bf16.msra.mxu0 %v1838
    %2527 = vmatpush.bf16.msra.mxu0 %v1834
    %2528 = vmatpush.bf16.msra.mxu0 %v1830
    %2529 = vmatpush.bf16.msra.mxu0 %v1826
    %2530 = vmatpush.bf16.msra.mxu0 %v1822
    %2531 = vmatpush.bf16.msra.mxu0 %v1818
    %2532 = vmatpush.bf16.msra.mxu0 %v1814
    %2533 = vmatpush.bf16.msra.mxu0 %v1810
    %2534 = vmatmul.bf16.gmra.mxu0 %v1478
    %v2535 = vpop.f32.mrf.mxu0
    %v2536 = vadd.f32 %v2447, %v2535
    %v2537 = vpop.f32.mrf.mxu0
    %v2538 = vadd.f32 %v2449, %v2537
    %2539 = vmatmul.bf16.gmra.mxu0 %v1480
    %v2540 = vpop.f32.mrf.mxu0
    %v2541 = vadd.f32 %v2452, %v2540
    %v2542 = vpop.f32.mrf.mxu0
    %v2543 = vadd.f32 %v2454, %v2542
    %2544 = vmatmul.bf16.gmra.mxu0 %v1482
    %v2545 = vpop.f32.mrf.mxu0
    %v2546 = vadd.f32 %v2457, %v2545
    %v2547 = vpop.f32.mrf.mxu0
    %v2548 = vadd.f32 %v2459, %v2547
    %2549 = vmatmul.bf16.gmra.mxu0 %v1484
    %v2550 = vpop.f32.mrf.mxu0
    %v2551 = vadd.f32 %v2462, %v2550
    %v2552 = vpop.f32.mrf.mxu0
    %v2553 = vadd.f32 %v2464, %v2552
    %2554 = vmatmul.bf16.gmra.mxu0 %v1486
    %v2555 = vpop.f32.mrf.mxu0
    %v2556 = vadd.f32 %v2467, %v2555
    %v2557 = vpop.f32.mrf.mxu0
    %v2558 = vadd.f32 %v2469, %v2557
    %2559 = vmatmul.bf16.gmra.mxu0 %v1488
    %v2560 = vpop.f32.mrf.mxu0
    %v2561 = vadd.f32 %v2472, %v2560
    %v2562 = vpop.f32.mrf.mxu0
    %v2563 = vadd.f32 %v2474, %v2562
    %2564 = vmatmul.bf16.gmra.mxu0 %v1490
    %v2565 = vpop.f32.mrf.mxu0
    %v2566 = vadd.f32 %v2477, %v2565
    %v2567 = vpop.f32.mrf.mxu0
    %v2568 = vadd.f32 %v2479, %v2567
    %2569 = vmatmul.bf16.gmra.mxu0 %v1492
    %v2570 = vpop.f32.mrf.mxu0
    %v2571 = vadd.f32 %v2482, %v2570
    %v2572 = vpop.f32.mrf.mxu0
    %v2573 = vadd.f32 %v2484, %v2572
    %2574 = vmatmul.bf16.gmra.mxu0 %v1494
    %v2575 = vpop.f32.mrf.mxu0
    %v2576 = vadd.f32 %v2487, %v2575
    %v2577 = vpop.f32.mrf.mxu0
    %v2578 = vadd.f32 %v2489, %v2577
    %2579 = vmatmul.bf16.gmra.mxu0 %v1496
    %v2580 = vpop.f32.mrf.mxu0
    %v2581 = vadd.f32 %v2492, %v2580
    %v2582 = vpop.f32.mrf.mxu0
    %v2583 = vadd.f32 %v2494, %v2582
    %2584 = vmatmul.bf16.gmra.mxu0 %v1498
    %v2585 = vpop.f32.mrf.mxu0
    %v2586 = vadd.f32 %v2497, %v2585
    %v2587 = vpop.f32.mrf.mxu0
    %v2588 = vadd.f32 %v2499, %v2587
    %2589 = vmatmul.bf16.gmra.mxu0 %v1500
    %v2590 = vpop.f32.mrf.mxu0
    %v2591 = vadd.f32 %v2502, %v2590
    %v2592 = vpop.f32.mrf.mxu0
    %v2593 = vadd.f32 %v2504, %v2592
    %2594 = vmatmul.bf16.gmra.mxu0 %v1502
    %v2595 = vpop.f32.mrf.mxu0
    %v2596 = vadd.f32 %v2507, %v2595
    %v2597 = vpop.f32.mrf.mxu0
    %v2598 = vadd.f32 %v2509, %v2597
    %2599 = vmatmul.bf16.gmra.mxu0 %v1504
    %v2600 = vpop.f32.mrf.mxu0
    %v2601 = vadd.f32 %v2512, %v2600
    %v2602 = vpop.f32.mrf.mxu0
    %v2603 = vadd.f32 %v2514, %v2602
    %2604 = vmatmul.bf16.gmra.mxu0 %v1506
    %v2605 = vpop.f32.mrf.mxu0
    %v2606 = vadd.f32 %v2517, %v2605
    %v2607 = vpop.f32.mrf.mxu0
    %v2608 = vadd.f32 %v2519, %v2607
    %2609 = vmatmul.bf16.gmra.mxu0 %v1508
    %v2610 = vpop.f32.mrf.mxu0
    %v2611 = vadd.f32 %v2522, %v2610
    %v2612 = vpop.f32.mrf.mxu0
    %v2613 = vadd.f32 %v2524, %v2612
    %2614 = vdwg.mxu0
    %v2615 = vld [vmem:[%s9] sm:$0xf]
    %v2616 = vld [vmem:[%s10] sm:$0xf]
    %v2617 = vadd.f32 %v2002, %v2004
    %v2618 = vadd.f32 %v2617, %v2007
    %v2619 = vadd.f32 %v2618, %v2009
    %v2620 = vadd.f32 %v2619, %v2012
    %v2621 = vadd.f32 %v2620, %v2014
    %v2622 = vadd.f32 %v2621, %v2017
    %v2623 = vadd.f32 %v2622, %v2019
    %v2624 = vadd.f32 %v2623, %v2022
    %v2625 = vadd.f32 %v2624, %v2024
    %v2626 = vadd.f32 %v2625, %v2027
    %v2627 = vadd.f32 %v2626, %v2029
    %v2628 = vadd.f32 %v2627, %v2032
    %v2629 = vadd.f32 %v2628, %v2034
    %v2630 = vadd.f32 %v2629, %v2037
    %v2631 = vadd.f32 %v2630, %v2039
    %v2632 = vadd.f32 %v2631, %v2042
    %v2633 = vadd.f32 %v2632, %v2044
    %v2634 = vadd.f32 %v2633, %v2047
    %v2635 = vadd.f32 %v2634, %v2049
    %v2636 = vadd.f32 %v2635, %v2052
    %v2637 = vadd.f32 %v2636, %v2054
    %v2638 = vadd.f32 %v2637, %v2057
    %v2639 = vadd.f32 %v2638, %v2059
    %v2640 = vadd.f32 %v2639, %v2062
    %v2641 = vadd.f32 %v2640, %v2064
    %v2642 = vadd.f32 %v2641, %v2067
    %v2643 = vadd.f32 %v2642, %v2069
    %v2644 = vadd.f32 %v2643, %v2072
    %v2645 = vadd.f32 %v2644, %v2074
    %v2646 = vadd.f32 %v2645, %v2077
    %v2647 = vadd.f32 %v2646, %v2079
    %v2648 = vrot.slane %v2647, 4
    %v2649 = vadd.f32 %v2647, %v2648
    %v2650 = vrot.slane %v2649, 2
    %v2651 = vadd.f32 %v2649, %v2650
    %v2652 = vrot.slane %v2651, 1
    %v2653 = vadd.f32 %v2651, %v2652
    %v2654 = vadd.f32 %v2180, %v2182
    %v2655 = vadd.f32 %v2654, %v2185
    %v2656 = vadd.f32 %v2655, %v2187
    %v2657 = vadd.f32 %v2656, %v2190
    %v2658 = vadd.f32 %v2657, %v2192
    %v2659 = vadd.f32 %v2658, %v2195
    %v2660 = vadd.f32 %v2659, %v2197
    %v2661 = vadd.f32 %v2660, %v2200
    %v2662 = vadd.f32 %v2661, %v2202
    %v2663 = vadd.f32 %v2662, %v2205
    %v2664 = vadd.f32 %v2663, %v2207
    %v2665 = vadd.f32 %v2664, %v2210
    %v2666 = vadd.f32 %v2665, %v2212
    %v2667 = vadd.f32 %v2666, %v2215
    %v2668 = vadd.f32 %v2667, %v2217
    %v2669 = vadd.f32 %v2668, %v2220
    %v2670 = vadd.f32 %v2669, %v2222
    %v2671 = vadd.f32 %v2670, %v2225
    %v2672 = vadd.f32 %v2671, %v2227
    %v2673 = vadd.f32 %v2672, %v2230
    %v2674 = vadd.f32 %v2673, %v2232
    %v2675 = vadd.f32 %v2674, %v2235
    %v2676 = vadd.f32 %v2675, %v2237
    %v2677 = vadd.f32 %v2676, %v2240
    %v2678 = vadd.f32 %v2677, %v2242
    %v2679 = vadd.f32 %v2678, %v2245
    %v2680 = vadd.f32 %v2679, %v2247
    %v2681 = vadd.f32 %v2680, %v2250
    %v2682 = vadd.f32 %v2681, %v2252
    %v2683 = vadd.f32 %v2682, %v2255
    %v2684 = vadd.f32 %v2683, %v2257
    %v2685 = vrot.slane %v2684, 4
    %v2686 = vadd.f32 %v2684, %v2685
    %v2687 = vrot.slane %v2686, 2
    %v2688 = vadd.f32 %v2686, %v2687
    %v2689 = vrot.slane %v2688, 1
    %v2690 = vadd.f32 %v2688, %v2689
    %v2691 = vadd.f32 %v2358, %v2360
    %v2692 = vadd.f32 %v2691, %v2363
    %v2693 = vadd.f32 %v2692, %v2365
    %v2694 = vadd.f32 %v2693, %v2368
    %v2695 = vadd.f32 %v2694, %v2370
    %v2696 = vadd.f32 %v2695, %v2373
    %v2697 = vadd.f32 %v2696, %v2375
    %v2698 = vadd.f32 %v2697, %v2378
    %v2699 = vadd.f32 %v2698, %v2380
    %v2700 = vadd.f32 %v2699, %v2383
    %v2701 = vadd.f32 %v2700, %v2385
    %v2702 = vadd.f32 %v2701, %v2388
    %v2703 = vadd.f32 %v2702, %v2390
    %v2704 = vadd.f32 %v2703, %v2393
    %v2705 = vadd.f32 %v2704, %v2395
    %v2706 = vadd.f32 %v2705, %v2398
    %v2707 = vadd.f32 %v2706, %v2400
    %v2708 = vadd.f32 %v2707, %v2403
    %v2709 = vadd.f32 %v2708, %v2405
    %v2710 = vadd.f32 %v2709, %v2408
    %v2711 = vadd.f32 %v2710, %v2410
    %v2712 = vadd.f32 %v2711, %v2413
    %v2713 = vadd.f32 %v2712, %v2415
    %v2714 = vadd.f32 %v2713, %v2418
    %v2715 = vadd.f32 %v2714, %v2420
    %v2716 = vadd.f32 %v2715, %v2423
    %v2717 = vadd.f32 %v2716, %v2425
    %v2718 = vadd.f32 %v2717, %v2428
    %v2719 = vadd.f32 %v2718, %v2430
    %v2720 = vadd.f32 %v2719, %v2433
    %v2721 = vadd.f32 %v2720, %v2435
    %v2722 = vrot.slane %v2721, 4
    %v2723 = vadd.f32 %v2721, %v2722
    %v2724 = vrot.slane %v2723, 2
    %v2725 = vadd.f32 %v2723, %v2724
    %v2726 = vrot.slane %v2725, 1
    %v2727 = vadd.f32 %v2725, %v2726
    %v2728 = vadd.f32 %v2536, %v2538
    %v2729 = vadd.f32 %v2728, %v2541
    %v2730 = vadd.f32 %v2729, %v2543
    %v2731 = vadd.f32 %v2730, %v2546
    %v2732 = vadd.f32 %v2731, %v2548
    %v2733 = vadd.f32 %v2732, %v2551
    %v2734 = vadd.f32 %v2733, %v2553
    %v2735 = vadd.f32 %v2734, %v2556
    %v2736 = vadd.f32 %v2735, %v2558
    %v2737 = vadd.f32 %v2736, %v2561
    %v2738 = vadd.f32 %v2737, %v2563
    %v2739 = vadd.f32 %v2738, %v2566
    %v2740 = vadd.f32 %v2739, %v2568
    %v2741 = vadd.f32 %v2740, %v2571
    %v2742 = vadd.f32 %v2741, %v2573
    %v2743 = vadd.f32 %v2742, %v2576
    %v2744 = vadd.f32 %v2743, %v2578
    %v2745 = vadd.f32 %v2744, %v2581
    %v2746 = vadd.f32 %v2745, %v2583
    %v2747 = vadd.f32 %v2746, %v2586
    %v2748 = vadd.f32 %v2747, %v2588
    %v2749 = vadd.f32 %v2748, %v2591
    %v2750 = vadd.f32 %v2749, %v2593
    %v2751 = vadd.f32 %v2750, %v2596
    %v2752 = vadd.f32 %v2751, %v2598
    %v2753 = vadd.f32 %v2752, %v2601
    %v2754 = vadd.f32 %v2753, %v2603
    %v2755 = vadd.f32 %v2754, %v2606
    %v2756 = vadd.f32 %v2755, %v2608
    %v2757 = vadd.f32 %v2756, %v2611
    %v2758 = vadd.f32 %v2757, %v2613
    %v2759 = vrot.slane %v2758, 4
    %v2760 = vadd.f32 %v2758, %v2759
    %v2761 = vrot.slane %v2760, 2
    %v2762 = vadd.f32 %v2760, %v2761
    %v2763 = vrot.slane %v2762, 1
    %v2764 = vadd.f32 %v2762, %v2763
    %v2765 = vmul.f32 %v2653, %v850
    %v2766 = vmul.f32 %v2690, %v850
    %v2767 = vmul.f32 %v2727, %v850
    %v2768 = vmul.f32 %v2764, %v850
    %v2769 = vmul.f32 %v2002, %v2002
    %v2770 = vmul.f32 %v2180, %v2180
    %v2771 = vmul.f32 %v2358, %v2358
    %v2772 = vmul.f32 %v2536, %v2536
    %v2773 = vmul.f32 %v2004, %v2004
    %v2774 = vmul.f32 %v2182, %v2182
    %v2775 = vmul.f32 %v2360, %v2360
    %v2776 = vmul.f32 %v2538, %v2538
    %v2777 = vmul.f32 %v2007, %v2007
    %v2778 = vmul.f32 %v2185, %v2185
    %v2779 = vmul.f32 %v2363, %v2363
    %v2780 = vmul.f32 %v2541, %v2541
    %v2781 = vmul.f32 %v2009, %v2009
    %v2782 = vmul.f32 %v2187, %v2187
    %v2783 = vmul.f32 %v2365, %v2365
    %v2784 = vmul.f32 %v2543, %v2543
    %v2785 = vmul.f32 %v2012, %v2012
    %v2786 = vmul.f32 %v2190, %v2190
    %v2787 = vmul.f32 %v2368, %v2368
    %v2788 = vmul.f32 %v2546, %v2546
    %v2789 = vmul.f32 %v2014, %v2014
    %v2790 = vmul.f32 %v2192, %v2192
    %v2791 = vmul.f32 %v2370, %v2370
    %v2792 = vmul.f32 %v2548, %v2548
    %v2793 = vmul.f32 %v2017, %v2017
    %v2794 = vmul.f32 %v2195, %v2195
    %v2795 = vmul.f32 %v2373, %v2373
    %v2796 = vmul.f32 %v2551, %v2551
    %v2797 = vmul.f32 %v2019, %v2019
    %v2798 = vmul.f32 %v2197, %v2197
    %v2799 = vmul.f32 %v2375, %v2375
    %v2800 = vmul.f32 %v2553, %v2553
    %v2801 = vmul.f32 %v2022, %v2022
    %v2802 = vmul.f32 %v2200, %v2200
    %v2803 = vmul.f32 %v2378, %v2378
    %v2804 = vmul.f32 %v2556, %v2556
    %v2805 = vmul.f32 %v2024, %v2024
    %v2806 = vmul.f32 %v2202, %v2202
    %v2807 = vmul.f32 %v2380, %v2380
    %v2808 = vmul.f32 %v2558, %v2558
    %v2809 = vmul.f32 %v2027, %v2027
    %v2810 = vmul.f32 %v2205, %v2205
    %v2811 = vmul.f32 %v2383, %v2383
    %v2812 = vmul.f32 %v2561, %v2561
    %v2813 = vmul.f32 %v2029, %v2029
    %v2814 = vmul.f32 %v2207, %v2207
    %v2815 = vmul.f32 %v2385, %v2385
    %v2816 = vmul.f32 %v2563, %v2563
    %v2817 = vmul.f32 %v2032, %v2032
    %v2818 = vmul.f32 %v2210, %v2210
    %v2819 = vmul.f32 %v2388, %v2388
    %v2820 = vmul.f32 %v2566, %v2566
    %v2821 = vmul.f32 %v2034, %v2034
    %v2822 = vmul.f32 %v2212, %v2212
    %v2823 = vmul.f32 %v2390, %v2390
    %v2824 = vmul.f32 %v2568, %v2568
    %v2825 = vmul.f32 %v2037, %v2037
    %v2826 = vmul.f32 %v2215, %v2215
    %v2827 = vmul.f32 %v2393, %v2393
    %v2828 = vmul.f32 %v2571, %v2571
    %v2829 = vmul.f32 %v2039, %v2039
    %v2830 = vmul.f32 %v2217, %v2217
    %v2831 = vmul.f32 %v2395, %v2395
    %v2832 = vmul.f32 %v2573, %v2573
    %v2833 = vmul.f32 %v2042, %v2042
    %v2834 = vmul.f32 %v2220, %v2220
    %v2835 = vmul.f32 %v2398, %v2398
    %v2836 = vmul.f32 %v2576, %v2576
    %v2837 = vmul.f32 %v2044, %v2044
    %v2838 = vmul.f32 %v2222, %v2222
    %v2839 = vmul.f32 %v2400, %v2400
    %v2840 = vmul.f32 %v2578, %v2578
    %v2841 = vmul.f32 %v2047, %v2047
    %v2842 = vmul.f32 %v2225, %v2225
    %v2843 = vmul.f32 %v2403, %v2403
    %v2844 = vmul.f32 %v2581, %v2581
    %v2845 = vmul.f32 %v2049, %v2049
    %v2846 = vmul.f32 %v2227, %v2227
    %v2847 = vmul.f32 %v2405, %v2405
    %v2848 = vmul.f32 %v2583, %v2583
    %v2849 = vmul.f32 %v2052, %v2052
    %v2850 = vmul.f32 %v2230, %v2230
    %v2851 = vmul.f32 %v2408, %v2408
    %v2852 = vmul.f32 %v2586, %v2586
    %v2853 = vmul.f32 %v2054, %v2054
    %v2854 = vmul.f32 %v2232, %v2232
    %v2855 = vmul.f32 %v2410, %v2410
    %v2856 = vmul.f32 %v2588, %v2588
    %v2857 = vmul.f32 %v2057, %v2057
    %v2858 = vmul.f32 %v2235, %v2235
    %v2859 = vmul.f32 %v2413, %v2413
    %v2860 = vmul.f32 %v2591, %v2591
    %v2861 = vmul.f32 %v2059, %v2059
    %v2862 = vmul.f32 %v2237, %v2237
    %v2863 = vmul.f32 %v2415, %v2415
    %v2864 = vmul.f32 %v2593, %v2593
    %v2865 = vmul.f32 %v2062, %v2062
    %v2866 = vmul.f32 %v2240, %v2240
    %v2867 = vmul.f32 %v2418, %v2418
    %v2868 = vmul.f32 %v2596, %v2596
    %v2869 = vmul.f32 %v2064, %v2064
    %v2870 = vmul.f32 %v2242, %v2242
    %v2871 = vmul.f32 %v2420, %v2420
    %v2872 = vmul.f32 %v2598, %v2598
    %v2873 = vmul.f32 %v2067, %v2067
    %v2874 = vmul.f32 %v2245, %v2245
    %v2875 = vmul.f32 %v2423, %v2423
    %v2876 = vmul.f32 %v2601, %v2601
    %v2877 = vmul.f32 %v2069, %v2069
    %v2878 = vmul.f32 %v2247, %v2247
    %v2879 = vmul.f32 %v2425, %v2425
    %v2880 = vmul.f32 %v2603, %v2603
    %v2881 = vmul.f32 %v2072, %v2072
    %v2882 = vmul.f32 %v2250, %v2250
    %v2883 = vmul.f32 %v2428, %v2428
    %v2884 = vmul.f32 %v2606, %v2606
    %v2885 = vmul.f32 %v2074, %v2074
    %v2886 = vmul.f32 %v2252, %v2252
    %v2887 = vmul.f32 %v2430, %v2430
    %v2888 = vmul.f32 %v2608, %v2608
    %v2889 = vmul.f32 %v2077, %v2077
    %v2890 = vmul.f32 %v2255, %v2255
    %v2891 = vmul.f32 %v2433, %v2433
    %v2892 = vmul.f32 %v2611, %v2611
    %v2893 = vmul.f32 %v2079, %v2079
    %v2894 = vmul.f32 %v2257, %v2257
    %v2895 = vmul.f32 %v2435, %v2435
    %v2896 = vmul.f32 %v2613, %v2613
    %v2897 = vadd.f32 %v2769, %v2773
    %v2898 = vadd.f32 %v2897, %v2777
    %v2899 = vadd.f32 %v2898, %v2781
    %v2900 = vadd.f32 %v2899, %v2785
    %v2901 = vadd.f32 %v2900, %v2789
    %v2902 = vadd.f32 %v2901, %v2793
    %v2903 = vadd.f32 %v2902, %v2797
    %v2904 = vadd.f32 %v2903, %v2801
    %v2905 = vadd.f32 %v2904, %v2805
    %v2906 = vadd.f32 %v2905, %v2809
    %v2907 = vadd.f32 %v2906, %v2813
    %v2908 = vadd.f32 %v2907, %v2817
    %v2909 = vadd.f32 %v2908, %v2821
    %v2910 = vadd.f32 %v2909, %v2825
    %v2911 = vadd.f32 %v2910, %v2829
    %v2912 = vadd.f32 %v2911, %v2833
    %v2913 = vadd.f32 %v2912, %v2837
    %v2914 = vadd.f32 %v2913, %v2841
    %v2915 = vadd.f32 %v2914, %v2845
    %v2916 = vadd.f32 %v2915, %v2849
    %v2917 = vadd.f32 %v2916, %v2853
    %v2918 = vadd.f32 %v2917, %v2857
    %v2919 = vadd.f32 %v2918, %v2861
    %v2920 = vadd.f32 %v2919, %v2865
    %v2921 = vadd.f32 %v2920, %v2869
    %v2922 = vadd.f32 %v2921, %v2873
    %v2923 = vadd.f32 %v2922, %v2877
    %v2924 = vadd.f32 %v2923, %v2881
    %v2925 = vadd.f32 %v2924, %v2885
    %v2926 = vadd.f32 %v2925, %v2889
    %v2927 = vadd.f32 %v2926, %v2893
    %v2928 = vrot.slane %v2927, 4
    %v2929 = vadd.f32 %v2927, %v2928
    %v2930 = vrot.slane %v2929, 2
    %v2931 = vadd.f32 %v2929, %v2930
    %v2932 = vrot.slane %v2931, 1
    %v2933 = vadd.f32 %v2931, %v2932
    %v2934 = vadd.f32 %v2770, %v2774
    %v2935 = vadd.f32 %v2934, %v2778
    %v2936 = vadd.f32 %v2935, %v2782
    %v2937 = vadd.f32 %v2936, %v2786
    %v2938 = vadd.f32 %v2937, %v2790
    %v2939 = vadd.f32 %v2938, %v2794
    %v2940 = vadd.f32 %v2939, %v2798
    %v2941 = vadd.f32 %v2940, %v2802
    %v2942 = vadd.f32 %v2941, %v2806
    %v2943 = vadd.f32 %v2942, %v2810
    %v2944 = vadd.f32 %v2943, %v2814
    %v2945 = vadd.f32 %v2944, %v2818
    %v2946 = vadd.f32 %v2945, %v2822
    %v2947 = vadd.f32 %v2946, %v2826
    %v2948 = vadd.f32 %v2947, %v2830
    %v2949 = vadd.f32 %v2948, %v2834
    %v2950 = vadd.f32 %v2949, %v2838
    %v2951 = vadd.f32 %v2950, %v2842
    %v2952 = vadd.f32 %v2951, %v2846
    %v2953 = vadd.f32 %v2952, %v2850
    %v2954 = vadd.f32 %v2953, %v2854
    %v2955 = vadd.f32 %v2954, %v2858
    %v2956 = vadd.f32 %v2955, %v2862
    %v2957 = vadd.f32 %v2956, %v2866
    %v2958 = vadd.f32 %v2957, %v2870
    %v2959 = vadd.f32 %v2958, %v2874
    %v2960 = vadd.f32 %v2959, %v2878
    %v2961 = vadd.f32 %v2960, %v2882
    %v2962 = vadd.f32 %v2961, %v2886
    %v2963 = vadd.f32 %v2962, %v2890
    %v2964 = vadd.f32 %v2963, %v2894
    %v2965 = vrot.slane %v2964, 4
    %v2966 = vadd.f32 %v2964, %v2965
    %v2967 = vrot.slane %v2966, 2
    %v2968 = vadd.f32 %v2966, %v2967
    %v2969 = vrot.slane %v2968, 1
    %v2970 = vadd.f32 %v2968, %v2969
    %v2971 = vadd.f32 %v2771, %v2775
    %v2972 = vadd.f32 %v2971, %v2779
    %v2973 = vadd.f32 %v2972, %v2783
    %v2974 = vadd.f32 %v2973, %v2787
    %v2975 = vadd.f32 %v2974, %v2791
    %v2976 = vadd.f32 %v2975, %v2795
    %v2977 = vadd.f32 %v2976, %v2799
    %v2978 = vadd.f32 %v2977, %v2803
    %v2979 = vadd.f32 %v2978, %v2807
    %v2980 = vadd.f32 %v2979, %v2811
    %v2981 = vadd.f32 %v2980, %v2815
    %v2982 = vadd.f32 %v2981, %v2819
    %v2983 = vadd.f32 %v2982, %v2823
    %v2984 = vadd.f32 %v2983, %v2827
    %v2985 = vadd.f32 %v2984, %v2831
    %v2986 = vadd.f32 %v2985, %v2835
    %v2987 = vadd.f32 %v2986, %v2839
    %v2988 = vadd.f32 %v2987, %v2843
    %v2989 = vadd.f32 %v2988, %v2847
    %v2990 = vadd.f32 %v2989, %v2851
    %v2991 = vadd.f32 %v2990, %v2855
    %v2992 = vadd.f32 %v2991, %v2859
    %v2993 = vadd.f32 %v2992, %v2863
    %v2994 = vadd.f32 %v2993, %v2867
    %v2995 = vadd.f32 %v2994, %v2871
    %v2996 = vadd.f32 %v2995, %v2875
    %v2997 = vadd.f32 %v2996, %v2879
    %v2998 = vadd.f32 %v2997, %v2883
    %v2999 = vadd.f32 %v2998, %v2887
    %v3000 = vadd.f32 %v2999, %v2891
    %v3001 = vadd.f32 %v3000, %v2895
    %v3002 = vrot.slane %v3001, 4
    %v3003 = vadd.f32 %v3001, %v3002
    %v3004 = vrot.slane %v3003, 2
    %v3005 = vadd.f32 %v3003, %v3004
    %v3006 = vrot.slane %v3005, 1
    %v3007 = vadd.f32 %v3005, %v3006
    %v3008 = vadd.f32 %v2772, %v2776
    %v3009 = vadd.f32 %v3008, %v2780
    %v3010 = vadd.f32 %v3009, %v2784
    %v3011 = vadd.f32 %v3010, %v2788
    %v3012 = vadd.f32 %v3011, %v2792
    %v3013 = vadd.f32 %v3012, %v2796
    %v3014 = vadd.f32 %v3013, %v2800
    %v3015 = vadd.f32 %v3014, %v2804
    %v3016 = vadd.f32 %v3015, %v2808
    %v3017 = vadd.f32 %v3016, %v2812
    %v3018 = vadd.f32 %v3017, %v2816
    %v3019 = vadd.f32 %v3018, %v2820
    %v3020 = vadd.f32 %v3019, %v2824
    %v3021 = vadd.f32 %v3020, %v2828
    %v3022 = vadd.f32 %v3021, %v2832
    %v3023 = vadd.f32 %v3022, %v2836
    %v3024 = vadd.f32 %v3023, %v2840
    %v3025 = vadd.f32 %v3024, %v2844
    %v3026 = vadd.f32 %v3025, %v2848
    %v3027 = vadd.f32 %v3026, %v2852
    %v3028 = vadd.f32 %v3027, %v2856
    %v3029 = vadd.f32 %v3028, %v2860
    %v3030 = vadd.f32 %v3029, %v2864
    %v3031 = vadd.f32 %v3030, %v2868
    %v3032 = vadd.f32 %v3031, %v2872
    %v3033 = vadd.f32 %v3032, %v2876
    %v3034 = vadd.f32 %v3033, %v2880
    %v3035 = vadd.f32 %v3034, %v2884
    %v3036 = vadd.f32 %v3035, %v2888
    %v3037 = vadd.f32 %v3036, %v2892
    %v3038 = vadd.f32 %v3037, %v2896
    %v3039 = vrot.slane %v3038, 4
    %v3040 = vadd.f32 %v3038, %v3039
    %v3041 = vrot.slane %v3040, 2
    %v3042 = vadd.f32 %v3040, %v3041
    %v3043 = vrot.slane %v3042, 1
    %v3044 = vadd.f32 %v3042, %v3043
    %v3045 = vmul.f32 %v2933, %v850
    %v3046 = vmul.f32 %v2970, %v850
    %v3047 = vmul.f32 %v3007, %v850
    %v3048 = vmul.f32 %v3044, %v850
    %v3049 = vmul.f32 %v2765, %v2765
    %v3050 = vmul.f32 %v2766, %v2766
    %v3051 = vmul.f32 %v2767, %v2767
    %v3052 = vmul.f32 %v2768, %v2768
    %v3053 = vsub.f32 %v3045, %v3049
    %v3054 = vsub.f32 %v3046, %v3050
    %v3055 = vsub.f32 %v3047, %v3051
    %v3056 = vsub.f32 %v3048, %v3052
    %v3057 = vsub.f32 %v2002, %v2765
    %v3058 = vsub.f32 %v2180, %v2766
    %v3059 = vsub.f32 %v2358, %v2767
    %v3060 = vsub.f32 %v2536, %v2768
    %v3061 = vsub.f32 %v2004, %v2765
    %v3062 = vsub.f32 %v2182, %v2766
    %v3063 = vsub.f32 %v2360, %v2767
    %v3064 = vsub.f32 %v2538, %v2768
    %v3065 = vsub.f32 %v2007, %v2765
    %v3066 = vsub.f32 %v2185, %v2766
    %v3067 = vsub.f32 %v2363, %v2767
    %v3068 = vsub.f32 %v2541, %v2768
    %v3069 = vsub.f32 %v2009, %v2765
    %v3070 = vsub.f32 %v2187, %v2766
    %v3071 = vsub.f32 %v2365, %v2767
    %v3072 = vsub.f32 %v2543, %v2768
    %v3073 = vsub.f32 %v2012, %v2765
    %v3074 = vsub.f32 %v2190, %v2766
    %v3075 = vsub.f32 %v2368, %v2767
    %v3076 = vsub.f32 %v2546, %v2768
    %v3077 = vsub.f32 %v2014, %v2765
    %v3078 = vsub.f32 %v2192, %v2766
    %v3079 = vsub.f32 %v2370, %v2767
    %v3080 = vsub.f32 %v2548, %v2768
    %v3081 = vsub.f32 %v2017, %v2765
    %v3082 = vsub.f32 %v2195, %v2766
    %v3083 = vsub.f32 %v2373, %v2767
    %v3084 = vsub.f32 %v2551, %v2768
    %v3085 = vsub.f32 %v2019, %v2765
    %v3086 = vsub.f32 %v2197, %v2766
    %v3087 = vsub.f32 %v2375, %v2767
    %v3088 = vsub.f32 %v2553, %v2768
    %v3089 = vsub.f32 %v2022, %v2765
    %v3090 = vsub.f32 %v2200, %v2766
    %v3091 = vsub.f32 %v2378, %v2767
    %v3092 = vsub.f32 %v2556, %v2768
    %v3093 = vsub.f32 %v2024, %v2765
    %v3094 = vsub.f32 %v2202, %v2766
    %v3095 = vsub.f32 %v2380, %v2767
    %v3096 = vsub.f32 %v2558, %v2768
    %v3097 = vsub.f32 %v2027, %v2765
    %v3098 = vsub.f32 %v2205, %v2766
    %v3099 = vsub.f32 %v2383, %v2767
    %v3100 = vsub.f32 %v2561, %v2768
    %v3101 = vsub.f32 %v2029, %v2765
    %v3102 = vsub.f32 %v2207, %v2766
    %v3103 = vsub.f32 %v2385, %v2767
    %v3104 = vsub.f32 %v2563, %v2768
    %v3105 = vsub.f32 %v2032, %v2765
    %v3106 = vsub.f32 %v2210, %v2766
    %v3107 = vsub.f32 %v2388, %v2767
    %v3108 = vsub.f32 %v2566, %v2768
    %v3109 = vsub.f32 %v2034, %v2765
    %v3110 = vsub.f32 %v2212, %v2766
    %v3111 = vsub.f32 %v2390, %v2767
    %v3112 = vsub.f32 %v2568, %v2768
    %v3113 = vsub.f32 %v2037, %v2765
    %v3114 = vsub.f32 %v2215, %v2766
    %v3115 = vsub.f32 %v2393, %v2767
    %v3116 = vsub.f32 %v2571, %v2768
    %v3117 = vsub.f32 %v2039, %v2765
    %v3118 = vsub.f32 %v2217, %v2766
    %v3119 = vsub.f32 %v2395, %v2767
    %v3120 = vsub.f32 %v2573, %v2768
    %v3121 = vsub.f32 %v2042, %v2765
    %v3122 = vsub.f32 %v2220, %v2766
    %v3123 = vsub.f32 %v2398, %v2767
    %v3124 = vsub.f32 %v2576, %v2768
    %v3125 = vsub.f32 %v2044, %v2765
    %v3126 = vsub.f32 %v2222, %v2766
    %v3127 = vsub.f32 %v2400, %v2767
    %v3128 = vsub.f32 %v2578, %v2768
    %v3129 = vsub.f32 %v2047, %v2765
    %v3130 = vsub.f32 %v2225, %v2766
    %v3131 = vsub.f32 %v2403, %v2767
    %v3132 = vsub.f32 %v2581, %v2768
    %v3133 = vsub.f32 %v2049, %v2765
    %v3134 = vsub.f32 %v2227, %v2766
    %v3135 = vsub.f32 %v2405, %v2767
    %v3136 = vsub.f32 %v2583, %v2768
    %v3137 = vsub.f32 %v2052, %v2765
    %v3138 = vsub.f32 %v2230, %v2766
    %v3139 = vsub.f32 %v2408, %v2767
    %v3140 = vsub.f32 %v2586, %v2768
    %v3141 = vsub.f32 %v2054, %v2765
    %v3142 = vsub.f32 %v2232, %v2766
    %v3143 = vsub.f32 %v2410, %v2767
    %v3144 = vsub.f32 %v2588, %v2768
    %v3145 = vsub.f32 %v2057, %v2765
    %v3146 = vsub.f32 %v2235, %v2766
    %v3147 = vsub.f32 %v2413, %v2767
    %v3148 = vsub.f32 %v2591, %v2768
    %v3149 = vsub.f32 %v2059, %v2765
    %v3150 = vsub.f32 %v2237, %v2766
    %v3151 = vsub.f32 %v2415, %v2767
    %v3152 = vsub.f32 %v2593, %v2768
    %v3153 = vsub.f32 %v2062, %v2765
    %v3154 = vsub.f32 %v2240, %v2766
    %v3155 = vsub.f32 %v2418, %v2767
    %v3156 = vsub.f32 %v2596, %v2768
    %v3157 = vsub.f32 %v2064, %v2765
    %v3158 = vsub.f32 %v2242, %v2766
    %v3159 = vsub.f32 %v2420, %v2767
    %v3160 = vsub.f32 %v2598, %v2768
    %v3161 = vsub.f32 %v2067, %v2765
    %v3162 = vsub.f32 %v2245, %v2766
    %v3163 = vsub.f32 %v2423, %v2767
    %v3164 = vsub.f32 %v2601, %v2768
    %v3165 = vsub.f32 %v2069, %v2765
    %v3166 = vsub.f32 %v2247, %v2766
    %v3167 = vsub.f32 %v2425, %v2767
    %v3168 = vsub.f32 %v2603, %v2768
    %v3169 = vsub.f32 %v2072, %v2765
    %v3170 = vsub.f32 %v2250, %v2766
    %v3171 = vsub.f32 %v2428, %v2767
    %v3172 = vsub.f32 %v2606, %v2768
    %v3173 = vsub.f32 %v2074, %v2765
    %v3174 = vsub.f32 %v2252, %v2766
    %v3175 = vsub.f32 %v2430, %v2767
    %v3176 = vsub.f32 %v2608, %v2768
    %v3177 = vsub.f32 %v2077, %v2765
    %v3178 = vsub.f32 %v2255, %v2766
    %v3179 = vsub.f32 %v2433, %v2767
    %v3180 = vsub.f32 %v2611, %v2768
    %v3181 = vsub.f32 %v2079, %v2765
    %v3182 = vsub.f32 %v2257, %v2766
    %v3183 = vsub.f32 %v2435, %v2767
    %v3184 = vsub.f32 %v2613, %v2768
    %v3185 = vadd.f32 %v3053, 0.8
    %v3186 = vadd.f32 %v3054, 0.8
    %v3187 = vadd.f32 %v3055, 0.8
    %v3188 = vadd.f32 %v3056, 0.8
    %v3189 = vrsqrt.pop %v3185
    %v3190 = vmul.f32 %v3189, %v3185
    %v3191 = vmul.f32 %v3190, %v3189
    %v3192 = vmul.f32 0.5, %v3191
    %v3193 = vsub.f32 1.5, %v3192
    %v3194 = vmul.f32 %v3189, %v3193
    %vm3195 = vweird.f32 %v3185
    %vm3196 = vweird.f32 %v3189
    %vm3197 = vmor %vm3195, %vm3196
    %v3198 = vsel %vm3197, %v3189, %v3194
    %v3199 = vrsqrt.pop %v3186
    %v3200 = vmul.f32 %v3199, %v3186
    %v3201 = vmul.f32 %v3200, %v3199
    %v3202 = vmul.f32 0.5, %v3201
    %v3203 = vsub.f32 1.5, %v3202
    %v3204 = vmul.f32 %v3199, %v3203
    %vm3205 = vweird.f32 %v3186
    %vm3206 = vweird.f32 %v3199
    %vm3207 = vmor %vm3205, %vm3206
    %v3208 = vsel %vm3207, %v3199, %v3204
    %v3209 = vrsqrt.pop %v3187
    %v3210 = vmul.f32 %v3209, %v3187
    %v3211 = vmul.f32 %v3210, %v3209
    %v3212 = vmul.f32 0.5, %v3211
    %v3213 = vsub.f32 1.5, %v3212
    %v3214 = vmul.f32 %v3209, %v3213
    %vm3215 = vweird.f32 %v3187
    %vm3216 = vweird.f32 %v3209
    %vm3217 = vmor %vm3215, %vm3216
    %v3218 = vsel %vm3217, %v3209, %v3214
    %v3219 = vrsqrt.pop %v3188
    %v3220 = vmul.f32 %v3219, %v3188
    %v3221 = vmul.f32 %v3220, %v3219
    %v3222 = vmul.f32 0.5, %v3221
    %v3223 = vsub.f32 1.5, %v3222
    %v3224 = vmul.f32 %v3219, %v3223
    %vm3225 = vweird.f32 %v3188
    %vm3226 = vweird.f32 %v3219
    %vm3227 = vmor %vm3225, %vm3226
    %v3228 = vsel %vm3227, %v3219, %v3224
    %v3229 = vmul.f32 %v3057, %v3198
    %v3230 = vmul.f32 %v3058, %v3208
    %v3231 = vmul.f32 %v3059, %v3218
    %v3232 = vmul.f32 %v3060, %v3228
    %v3233 = vmul.f32 %v3061, %v3198
    %v3234 = vmul.f32 %v3062, %v3208
    %v3235 = vmul.f32 %v3063, %v3218
    %v3236 = vmul.f32 %v3064, %v3228
    %v3237 = vmul.f32 %v3065, %v3198
    %v3238 = vmul.f32 %v3066, %v3208
    %v3239 = vmul.f32 %v3067, %v3218
    %v3240 = vmul.f32 %v3068, %v3228
    %v3241 = vmul.f32 %v3069, %v3198
    %v3242 = vmul.f32 %v3070, %v3208
    %v3243 = vmul.f32 %v3071, %v3218
    %v3244 = vmul.f32 %v3072, %v3228
    %v3245 = vmul.f32 %v3073, %v3198
    %v3246 = vmul.f32 %v3074, %v3208
    %v3247 = vmul.f32 %v3075, %v3218
    %v3248 = vmul.f32 %v3076, %v3228
    %v3249 = vmul.f32 %v3077, %v3198
    %v3250 = vmul.f32 %v3078, %v3208
    %v3251 = vmul.f32 %v3079, %v3218
    %v3252 = vmul.f32 %v3080, %v3228
    %v3253 = vmul.f32 %v3081, %v3198
    %v3254 = vmul.f32 %v3082, %v3208
    %v3255 = vmul.f32 %v3083, %v3218
    %v3256 = vmul.f32 %v3084, %v3228
    %v3257 = vmul.f32 %v3085, %v3198
    %v3258 = vmul.f32 %v3086, %v3208
    %v3259 = vmul.f32 %v3087, %v3218
    %v3260 = vmul.f32 %v3088, %v3228
    %v3261 = vmul.f32 %v3089, %v3198
    %v3262 = vmul.f32 %v3090, %v3208
    %v3263 = vmul.f32 %v3091, %v3218
    %v3264 = vmul.f32 %v3092, %v3228
    %v3265 = vmul.f32 %v3093, %v3198
    %v3266 = vmul.f32 %v3094, %v3208
    %v3267 = vmul.f32 %v3095, %v3218
    %v3268 = vmul.f32 %v3096, %v3228
    %v3269 = vmul.f32 %v3097, %v3198
    %v3270 = vmul.f32 %v3098, %v3208
    %v3271 = vmul.f32 %v3099, %v3218
    %v3272 = vmul.f32 %v3100, %v3228
    %v3273 = vmul.f32 %v3101, %v3198
    %v3274 = vmul.f32 %v3102, %v3208
    %v3275 = vmul.f32 %v3103, %v3218
    %v3276 = vmul.f32 %v3104, %v3228
    %v3277 = vmul.f32 %v3105, %v3198
    %v3278 = vmul.f32 %v3106, %v3208
    %v3279 = vmul.f32 %v3107, %v3218
    %v3280 = vmul.f32 %v3108, %v3228
    %v3281 = vmul.f32 %v3109, %v3198
    %v3282 = vmul.f32 %v3110, %v3208
    %v3283 = vmul.f32 %v3111, %v3218
    %v3284 = vmul.f32 %v3112, %v3228
    %v3285 = vmul.f32 %v3113, %v3198
    %v3286 = vmul.f32 %v3114, %v3208
    %v3287 = vmul.f32 %v3115, %v3218
    %v3288 = vmul.f32 %v3116, %v3228
    %v3289 = vmul.f32 %v3117, %v3198
    %v3290 = vmul.f32 %v3118, %v3208
    %v3291 = vmul.f32 %v3119, %v3218
    %v3292 = vmul.f32 %v3120, %v3228
    %v3293 = vmul.f32 %v3121, %v3198
    %v3294 = vmul.f32 %v3122, %v3208
    %v3295 = vmul.f32 %v3123, %v3218
    %v3296 = vmul.f32 %v3124, %v3228
    %v3297 = vmul.f32 %v3125, %v3198
    %v3298 = vmul.f32 %v3126, %v3208
    %v3299 = vmul.f32 %v3127, %v3218
    %v3300 = vmul.f32 %v3128, %v3228
    %v3301 = vmul.f32 %v3129, %v3198
    %v3302 = vmul.f32 %v3130, %v3208
    %v3303 = vmul.f32 %v3131, %v3218
    %v3304 = vmul.f32 %v3132, %v3228
    %v3305 = vmul.f32 %v3133, %v3198
    %v3306 = vmul.f32 %v3134, %v3208
    %v3307 = vmul.f32 %v3135, %v3218
    %v3308 = vmul.f32 %v3136, %v3228
    %v3309 = vmul.f32 %v3137, %v3198
    %v3310 = vmul.f32 %v3138, %v3208
    %v3311 = vmul.f32 %v3139, %v3218
    %v3312 = vmul.f32 %v3140, %v3228
    %v3313 = vmul.f32 %v3141, %v3198
    %v3314 = vmul.f32 %v3142, %v3208
    %v3315 = vmul.f32 %v3143, %v3218
    %v3316 = vmul.f32 %v3144, %v3228
    %v3317 = vmul.f32 %v3145, %v3198
    %v3318 = vmul.f32 %v3146, %v3208
    %v3319 = vmul.f32 %v3147, %v3218
    %v3320 = vmul.f32 %v3148, %v3228
    %v3321 = vmul.f32 %v3149, %v3198
    %v3322 = vmul.f32 %v3150, %v3208
    %v3323 = vmul.f32 %v3151, %v3218
    %v3324 = vmul.f32 %v3152, %v3228
    %v3325 = vmul.f32 %v3153, %v3198
    %v3326 = vmul.f32 %v3154, %v3208
    %v3327 = vmul.f32 %v3155, %v3218
    %v3328 = vmul.f32 %v3156, %v3228
    %v3329 = vmul.f32 %v3157, %v3198
    %v3330 = vmul.f32 %v3158, %v3208
    %v3331 = vmul.f32 %v3159, %v3218
    %v3332 = vmul.f32 %v3160, %v3228
    %v3333 = vmul.f32 %v3161, %v3198
    %v3334 = vmul.f32 %v3162, %v3208
    %v3335 = vmul.f32 %v3163, %v3218
    %v3336 = vmul.f32 %v3164, %v3228
    %v3337 = vmul.f32 %v3165, %v3198
    %v3338 = vmul.f32 %v3166, %v3208
    %v3339 = vmul.f32 %v3167, %v3218
    %v3340 = vmul.f32 %v3168, %v3228
    %v3341 = vmul.f32 %v3169, %v3198
    %v3342 = vmul.f32 %v3170, %v3208
    %v3343 = vmul.f32 %v3171, %v3218
    %v3344 = vmul.f32 %v3172, %v3228
    %v3345 = vmul.f32 %v3173, %v3198
    %v3346 = vmul.f32 %v3174, %v3208
    %v3347 = vmul.f32 %v3175, %v3218
    %v3348 = vmul.f32 %v3176, %v3228
    %v3349 = vmul.f32 %v3177, %v3198
    %v3350 = vmul.f32 %v3178, %v3208
    %v3351 = vmul.f32 %v3179, %v3218
    %v3352 = vmul.f32 %v3180, %v3228
    %v3353 = vmul.f32 %v3181, %v3198
    %v3354 = vmul.f32 %v3182, %v3208
    %v3355 = vmul.f32 %v3183, %v3218
    %v3356 = vmul.f32 %v3184, %v3228
    %v3358 = vperm.slane %v2615, 0
    %v3359 = vperm.slane %v2615, 1
    %v3360 = vperm.slane %v2615, 2
    %v3361 = vperm.slane %v2615, 3
    %v3366 = vmul.f32 %v3229, %v3358
    %v3367 = vmul.f32 %v3230, %v3359
    %v3368 = vmul.f32 %v3231, %v3360
    %v3369 = vmul.f32 %v3232, %v3361
    %v3370 = vmul.f32 %v3233, %v3358
    %v3371 = vmul.f32 %v3234, %v3359
    %v3372 = vmul.f32 %v3235, %v3360
    %v3373 = vmul.f32 %v3236, %v3361
    %v3374 = vmul.f32 %v3237, %v3358
    %v3375 = vmul.f32 %v3238, %v3359
    %v3376 = vmul.f32 %v3239, %v3360
    %v3377 = vmul.f32 %v3240, %v3361
    %v3378 = vmul.f32 %v3241, %v3358
    %v3379 = vmul.f32 %v3242, %v3359
    %v3380 = vmul.f32 %v3243, %v3360
    %v3381 = vmul.f32 %v3244, %v3361
    %v3382 = vmul.f32 %v3245, %v3358
    %v3383 = vmul.f32 %v3246, %v3359
    %v3384 = vmul.f32 %v3247, %v3360
    %v3385 = vmul.f32 %v3248, %v3361
    %v3386 = vmul.f32 %v3249, %v3358
    %v3387 = vmul.f32 %v3250, %v3359
    %v3388 = vmul.f32 %v3251, %v3360
    %v3389 = vmul.f32 %v3252, %v3361
    %v3390 = vmul.f32 %v3253, %v3358
    %v3391 = vmul.f32 %v3254, %v3359
    %v3392 = vmul.f32 %v3255, %v3360
    %v3393 = vmul.f32 %v3256, %v3361
    %v3394 = vmul.f32 %v3257, %v3358
    %v3395 = vmul.f32 %v3258, %v3359
    %v3396 = vmul.f32 %v3259, %v3360
    %v3397 = vmul.f32 %v3260, %v3361
    %v3398 = vmul.f32 %v3261, %v3358
    %v3399 = vmul.f32 %v3262, %v3359
    %v3400 = vmul.f32 %v3263, %v3360
    %v3401 = vmul.f32 %v3264, %v3361
    %v3402 = vmul.f32 %v3265, %v3358
    %v3403 = vmul.f32 %v3266, %v3359
    %v3404 = vmul.f32 %v3267, %v3360
    %v3405 = vmul.f32 %v3268, %v3361
    %v3406 = vmul.f32 %v3269, %v3358
    %v3407 = vmul.f32 %v3270, %v3359
    %v3408 = vmul.f32 %v3271, %v3360
    %v3409 = vmul.f32 %v3272, %v3361
    %v3410 = vmul.f32 %v3273, %v3358
    %v3411 = vmul.f32 %v3274, %v3359
    %v3412 = vmul.f32 %v3275, %v3360
    %v3413 = vmul.f32 %v3276, %v3361
    %v3414 = vmul.f32 %v3277, %v3358
    %v3415 = vmul.f32 %v3278, %v3359
    %v3416 = vmul.f32 %v3279, %v3360
    %v3417 = vmul.f32 %v3280, %v3361
    %v3418 = vmul.f32 %v3281, %v3358
    %v3419 = vmul.f32 %v3282, %v3359
    %v3420 = vmul.f32 %v3283, %v3360
    %v3421 = vmul.f32 %v3284, %v3361
    %v3422 = vmul.f32 %v3285, %v3358
    %v3423 = vmul.f32 %v3286, %v3359
    %v3424 = vmul.f32 %v3287, %v3360
    %v3425 = vmul.f32 %v3288, %v3361
    %v3426 = vmul.f32 %v3289, %v3358
    %v3427 = vmul.f32 %v3290, %v3359
    %v3428 = vmul.f32 %v3291, %v3360
    %v3429 = vmul.f32 %v3292, %v3361
    %v3430 = vmul.f32 %v3293, %v3358
    %v3431 = vmul.f32 %v3294, %v3359
    %v3432 = vmul.f32 %v3295, %v3360
    %v3433 = vmul.f32 %v3296, %v3361
    %v3434 = vmul.f32 %v3297, %v3358
    %v3435 = vmul.f32 %v3298, %v3359
    %v3436 = vmul.f32 %v3299, %v3360
    %v3437 = vmul.f32 %v3300, %v3361
    %v3438 = vmul.f32 %v3301, %v3358
    %v3439 = vmul.f32 %v3302, %v3359
    %v3440 = vmul.f32 %v3303, %v3360
    %v3441 = vmul.f32 %v3304, %v3361
    %v3442 = vmul.f32 %v3305, %v3358
    %v3443 = vmul.f32 %v3306, %v3359
    %v3444 = vmul.f32 %v3307, %v3360
    %v3445 = vmul.f32 %v3308, %v3361
    %v3446 = vmul.f32 %v3309, %v3358
    %v3447 = vmul.f32 %v3310, %v3359
    %v3448 = vmul.f32 %v3311, %v3360
    %v3449 = vmul.f32 %v3312, %v3361
    %v3450 = vmul.f32 %v3313, %v3358
    %v3451 = vmul.f32 %v3314, %v3359
    %v3452 = vmul.f32 %v3315, %v3360
    %v3453 = vmul.f32 %v3316, %v3361
    %v3454 = vmul.f32 %v3317, %v3358
    %v3455 = vmul.f32 %v3318, %v3359
    %v3456 = vmul.f32 %v3319, %v3360
    %v3457 = vmul.f32 %v3320, %v3361
    %v3458 = vmul.f32 %v3321, %v3358
    %v3459 = vmul.f32 %v3322, %v3359
    %v3460 = vmul.f32 %v3323, %v3360
    %v3461 = vmul.f32 %v3324, %v3361
    %v3462 = vmul.f32 %v3325, %v3358
    %v3463 = vmul.f32 %v3326, %v3359
    %v3464 = vmul.f32 %v3327, %v3360
    %v3465 = vmul.f32 %v3328, %v3361
    %v3466 = vmul.f32 %v3329, %v3358
    %v3467 = vmul.f32 %v3330, %v3359
    %v3468 = vmul.f32 %v3331, %v3360
    %v3469 = vmul.f32 %v3332, %v3361
    %v3470 = vmul.f32 %v3333, %v3358
    %v3471 = vmul.f32 %v3334, %v3359
    %v3472 = vmul.f32 %v3335, %v3360
    %v3473 = vmul.f32 %v3336, %v3361
    %v3474 = vmul.f32 %v3337, %v3358
    %v3475 = vmul.f32 %v3338, %v3359
    %v3476 = vmul.f32 %v3339, %v3360
    %v3477 = vmul.f32 %v3340, %v3361
    %v3478 = vmul.f32 %v3341, %v3358
    %v3479 = vmul.f32 %v3342, %v3359
    %v3480 = vmul.f32 %v3343, %v3360
    %v3481 = vmul.f32 %v3344, %v3361
    %v3482 = vmul.f32 %v3345, %v3358
    %v3483 = vmul.f32 %v3346, %v3359
    %v3484 = vmul.f32 %v3347, %v3360
    %v3485 = vmul.f32 %v3348, %v3361
    %v3486 = vmul.f32 %v3349, %v3358
    %v3487 = vmul.f32 %v3350, %v3359
    %v3488 = vmul.f32 %v3351, %v3360
    %v3489 = vmul.f32 %v3352, %v3361
    %v3490 = vmul.f32 %v3353, %v3358
    %v3491 = vmul.f32 %v3354, %v3359
    %v3492 = vmul.f32 %v3355, %v3360
    %v3493 = vmul.f32 %v3356, %v3361
    %v3495 = vperm.slane %v2616, 0
    %v3496 = vperm.slane %v2616, 1
    %v3497 = vperm.slane %v2616, 2
    %v3498 = vperm.slane %v2616, 3
    %v3503 = vadd.f32 %v3366, %v3495
    %v3504 = vadd.f32 %v3367, %v3496
    %v3505 = vadd.f32 %v3368, %v3497
    %v3506 = vadd.f32 %v3369, %v3498
    %v3507 = vadd.f32 %v3370, %v3495
    %v3508 = vadd.f32 %v3371, %v3496
    %v3509 = vadd.f32 %v3372, %v3497
    %v3510 = vadd.f32 %v3373, %v3498
    %v3511 = vadd.f32 %v3374, %v3495
    %v3512 = vadd.f32 %v3375, %v3496
    %v3513 = vadd.f32 %v3376, %v3497
    %v3514 = vadd.f32 %v3377, %v3498
    %v3515 = vadd.f32 %v3378, %v3495
    %v3516 = vadd.f32 %v3379, %v3496
    %v3517 = vadd.f32 %v3380, %v3497
    %v3518 = vadd.f32 %v3381, %v3498
    %v3519 = vadd.f32 %v3382, %v3495
    %v3520 = vadd.f32 %v3383, %v3496
    %v3521 = vadd.f32 %v3384, %v3497
    %v3522 = vadd.f32 %v3385, %v3498
    %v3523 = vadd.f32 %v3386, %v3495
    %v3524 = vadd.f32 %v3387, %v3496
    %v3525 = vadd.f32 %v3388, %v3497
    %v3526 = vadd.f32 %v3389, %v3498
    %v3527 = vadd.f32 %v3390, %v3495
    %v3528 = vadd.f32 %v3391, %v3496
    %v3529 = vadd.f32 %v3392, %v3497
    %v3530 = vadd.f32 %v3393, %v3498
    %v3531 = vadd.f32 %v3394, %v3495
    %v3532 = vadd.f32 %v3395, %v3496
    %v3533 = vadd.f32 %v3396, %v3497
    %v3534 = vadd.f32 %v3397, %v3498
    %v3535 = vadd.f32 %v3398, %v3495
    %v3536 = vadd.f32 %v3399, %v3496
    %v3537 = vadd.f32 %v3400, %v3497
    %v3538 = vadd.f32 %v3401, %v3498
    %v3539 = vadd.f32 %v3402, %v3495
    %v3540 = vadd.f32 %v3403, %v3496
    %v3541 = vadd.f32 %v3404, %v3497
    %v3542 = vadd.f32 %v3405, %v3498
    %v3543 = vadd.f32 %v3406, %v3495
    %v3544 = vadd.f32 %v3407, %v3496
    %v3545 = vadd.f32 %v3408, %v3497
    %v3546 = vadd.f32 %v3409, %v3498
    %v3547 = vadd.f32 %v3410, %v3495
    %v3548 = vadd.f32 %v3411, %v3496
    %v3549 = vadd.f32 %v3412, %v3497
    %v3550 = vadd.f32 %v3413, %v3498
    %v3551 = vadd.f32 %v3414, %v3495
    %v3552 = vadd.f32 %v3415, %v3496
    %v3553 = vadd.f32 %v3416, %v3497
    %v3554 = vadd.f32 %v3417, %v3498
    %v3555 = vadd.f32 %v3418, %v3495
    %v3556 = vadd.f32 %v3419, %v3496
    %v3557 = vadd.f32 %v3420, %v3497
    %v3558 = vadd.f32 %v3421, %v3498
    %v3559 = vadd.f32 %v3422, %v3495
    %v3560 = vadd.f32 %v3423, %v3496
    %v3561 = vadd.f32 %v3424, %v3497
    %v3562 = vadd.f32 %v3425, %v3498
    %v3563 = vadd.f32 %v3426, %v3495
    %v3564 = vadd.f32 %v3427, %v3496
    %v3565 = vadd.f32 %v3428, %v3497
    %v3566 = vadd.f32 %v3429, %v3498
    %v3567 = vadd.f32 %v3430, %v3495
    %v3568 = vadd.f32 %v3431, %v3496
    %v3569 = vadd.f32 %v3432, %v3497
    %v3570 = vadd.f32 %v3433, %v3498
    %v3571 = vadd.f32 %v3434, %v3495
    %v3572 = vadd.f32 %v3435, %v3496
    %v3573 = vadd.f32 %v3436, %v3497
    %v3574 = vadd.f32 %v3437, %v3498
    %v3575 = vadd.f32 %v3438, %v3495
    %v3576 = vadd.f32 %v3439, %v3496
    %v3577 = vadd.f32 %v3440, %v3497
    %v3578 = vadd.f32 %v3441, %v3498
    %v3579 = vadd.f32 %v3442, %v3495
    %v3580 = vadd.f32 %v3443, %v3496
    %v3581 = vadd.f32 %v3444, %v3497
    %v3582 = vadd.f32 %v3445, %v3498
    %v3583 = vadd.f32 %v3446, %v3495
    %v3584 = vadd.f32 %v3447, %v3496
    %v3585 = vadd.f32 %v3448, %v3497
    %v3586 = vadd.f32 %v3449, %v3498
    %v3587 = vadd.f32 %v3450, %v3495
    %v3588 = vadd.f32 %v3451, %v3496
    %v3589 = vadd.f32 %v3452, %v3497
    %v3590 = vadd.f32 %v3453, %v3498
    %v3591 = vadd.f32 %v3454, %v3495
    %v3592 = vadd.f32 %v3455, %v3496
    %v3593 = vadd.f32 %v3456, %v3497
    %v3594 = vadd.f32 %v3457, %v3498
    %v3595 = vadd.f32 %v3458, %v3495
    %v3596 = vadd.f32 %v3459, %v3496
    %v3597 = vadd.f32 %v3460, %v3497
    %v3598 = vadd.f32 %v3461, %v3498
    %v3599 = vadd.f32 %v3462, %v3495
    %v3600 = vadd.f32 %v3463, %v3496
    %v3601 = vadd.f32 %v3464, %v3497
    %v3602 = vadd.f32 %v3465, %v3498
    %v3603 = vadd.f32 %v3466, %v3495
    %v3604 = vadd.f32 %v3467, %v3496
    %v3605 = vadd.f32 %v3468, %v3497
    %v3606 = vadd.f32 %v3469, %v3498
    %v3607 = vadd.f32 %v3470, %v3495
    %v3608 = vadd.f32 %v3471, %v3496
    %v3609 = vadd.f32 %v3472, %v3497
    %v3610 = vadd.f32 %v3473, %v3498
    %v3611 = vadd.f32 %v3474, %v3495
    %v3612 = vadd.f32 %v3475, %v3496
    %v3613 = vadd.f32 %v3476, %v3497
    %v3614 = vadd.f32 %v3477, %v3498
    %v3615 = vadd.f32 %v3478, %v3495
    %v3616 = vadd.f32 %v3479, %v3496
    %v3617 = vadd.f32 %v3480, %v3497
    %v3618 = vadd.f32 %v3481, %v3498
    %v3619 = vadd.f32 %v3482, %v3495
    %v3620 = vadd.f32 %v3483, %v3496
    %v3621 = vadd.f32 %v3484, %v3497
    %v3622 = vadd.f32 %v3485, %v3498
    %v3623 = vadd.f32 %v3486, %v3495
    %v3624 = vadd.f32 %v3487, %v3496
    %v3625 = vadd.f32 %v3488, %v3497
    %v3626 = vadd.f32 %v3489, %v3498
    %v3627 = vadd.f32 %v3490, %v3495
    %v3628 = vadd.f32 %v3491, %v3496
    %v3629 = vadd.f32 %v3492, %v3497
    %v3630 = vadd.f32 %v3493, %v3498
    %vm3631 = vcmp.gt.f32.partialorder %v3503, 0.0
    %vm3632 = vcmp.gt.f32.partialorder %v3504, 0.0
    %vm3633 = vcmp.gt.f32.partialorder %v3505, 0.0
    %vm3634 = vcmp.gt.f32.partialorder %v3506, 0.0
    %vm3635 = vcmp.gt.f32.partialorder %v3507, 0.0
    %vm3636 = vcmp.gt.f32.partialorder %v3508, 0.0
    %vm3637 = vcmp.gt.f32.partialorder %v3509, 0.0
    %vm3638 = vcmp.gt.f32.partialorder %v3510, 0.0
    %vm3639 = vcmp.gt.f32.partialorder %v3511, 0.0
    %vm3640 = vcmp.gt.f32.partialorder %v3512, 0.0
    %vm3641 = vcmp.gt.f32.partialorder %v3513, 0.0
    %vm3642 = vcmp.gt.f32.partialorder %v3514, 0.0
    %vm3643 = vcmp.gt.f32.partialorder %v3515, 0.0
    %vm3644 = vcmp.gt.f32.partialorder %v3516, 0.0
    %vm3645 = vcmp.gt.f32.partialorder %v3517, 0.0
    %vm3646 = vcmp.gt.f32.partialorder %v3518, 0.0
    %vm3647 = vcmp.gt.f32.partialorder %v3519, 0.0
    %vm3648 = vcmp.gt.f32.partialorder %v3520, 0.0
    %vm3649 = vcmp.gt.f32.partialorder %v3521, 0.0
    %vm3650 = vcmp.gt.f32.partialorder %v3522, 0.0
    %vm3651 = vcmp.gt.f32.partialorder %v3523, 0.0
    %vm3652 = vcmp.gt.f32.partialorder %v3524, 0.0
    %vm3653 = vcmp.gt.f32.partialorder %v3525, 0.0
    %vm3654 = vcmp.gt.f32.partialorder %v3526, 0.0
    %vm3655 = vcmp.gt.f32.partialorder %v3527, 0.0
    %vm3656 = vcmp.gt.f32.partialorder %v3528, 0.0
    %vm3657 = vcmp.gt.f32.partialorder %v3529, 0.0
    %vm3658 = vcmp.gt.f32.partialorder %v3530, 0.0
    %vm3659 = vcmp.gt.f32.partialorder %v3531, 0.0
    %vm3660 = vcmp.gt.f32.partialorder %v3532, 0.0
    %vm3661 = vcmp.gt.f32.partialorder %v3533, 0.0
    %vm3662 = vcmp.gt.f32.partialorder %v3534, 0.0
    %vm3663 = vcmp.gt.f32.partialorder %v3535, 0.0
    %vm3664 = vcmp.gt.f32.partialorder %v3536, 0.0
    %vm3665 = vcmp.gt.f32.partialorder %v3537, 0.0
    %vm3666 = vcmp.gt.f32.partialorder %v3538, 0.0
    %vm3667 = vcmp.gt.f32.partialorder %v3539, 0.0
    %vm3668 = vcmp.gt.f32.partialorder %v3540, 0.0
    %vm3669 = vcmp.gt.f32.partialorder %v3541, 0.0
    %vm3670 = vcmp.gt.f32.partialorder %v3542, 0.0
    %vm3671 = vcmp.gt.f32.partialorder %v3543, 0.0
    %vm3672 = vcmp.gt.f32.partialorder %v3544, 0.0
    %vm3673 = vcmp.gt.f32.partialorder %v3545, 0.0
    %vm3674 = vcmp.gt.f32.partialorder %v3546, 0.0
    %vm3675 = vcmp.gt.f32.partialorder %v3547, 0.0
    %vm3676 = vcmp.gt.f32.partialorder %v3548, 0.0
    %vm3677 = vcmp.gt.f32.partialorder %v3549, 0.0
    %vm3678 = vcmp.gt.f32.partialorder %v3550, 0.0
    %vm3679 = vcmp.gt.f32.partialorder %v3551, 0.0
    %vm3680 = vcmp.gt.f32.partialorder %v3552, 0.0
    %vm3681 = vcmp.gt.f32.partialorder %v3553, 0.0
    %vm3682 = vcmp.gt.f32.partialorder %v3554, 0.0
    %vm3683 = vcmp.gt.f32.partialorder %v3555, 0.0
    %vm3684 = vcmp.gt.f32.partialorder %v3556, 0.0
    %vm3685 = vcmp.gt.f32.partialorder %v3557, 0.0
    %vm3686 = vcmp.gt.f32.partialorder %v3558, 0.0
    %vm3687 = vcmp.gt.f32.partialorder %v3559, 0.0
    %vm3688 = vcmp.gt.f32.partialorder %v3560, 0.0
    %vm3689 = vcmp.gt.f32.partialorder %v3561, 0.0
    %vm3690 = vcmp.gt.f32.partialorder %v3562, 0.0
    %vm3691 = vcmp.gt.f32.partialorder %v3563, 0.0
    %vm3692 = vcmp.gt.f32.partialorder %v3564, 0.0
    %vm3693 = vcmp.gt.f32.partialorder %v3565, 0.0
    %vm3694 = vcmp.gt.f32.partialorder %v3566, 0.0
    %vm3695 = vcmp.gt.f32.partialorder %v3567, 0.0
    %vm3696 = vcmp.gt.f32.partialorder %v3568, 0.0
    %vm3697 = vcmp.gt.f32.partialorder %v3569, 0.0
    %vm3698 = vcmp.gt.f32.partialorder %v3570, 0.0
    %vm3699 = vcmp.gt.f32.partialorder %v3571, 0.0
    %vm3700 = vcmp.gt.f32.partialorder %v3572, 0.0
    %vm3701 = vcmp.gt.f32.partialorder %v3573, 0.0
    %vm3702 = vcmp.gt.f32.partialorder %v3574, 0.0
    %vm3703 = vcmp.gt.f32.partialorder %v3575, 0.0
    %vm3704 = vcmp.gt.f32.partialorder %v3576, 0.0
    %vm3705 = vcmp.gt.f32.partialorder %v3577, 0.0
    %vm3706 = vcmp.gt.f32.partialorder %v3578, 0.0
    %vm3707 = vcmp.gt.f32.partialorder %v3579, 0.0
    %vm3708 = vcmp.gt.f32.partialorder %v3580, 0.0
    %vm3709 = vcmp.gt.f32.partialorder %v3581, 0.0
    %vm3710 = vcmp.gt.f32.partialorder %v3582, 0.0
    %vm3711 = vcmp.gt.f32.partialorder %v3583, 0.0
    %vm3712 = vcmp.gt.f32.partialorder %v3584, 0.0
    %vm3713 = vcmp.gt.f32.partialorder %v3585, 0.0
    %vm3714 = vcmp.gt.f32.partialorder %v3586, 0.0
    %vm3715 = vcmp.gt.f32.partialorder %v3587, 0.0
    %vm3716 = vcmp.gt.f32.partialorder %v3588, 0.0
    %vm3717 = vcmp.gt.f32.partialorder %v3589, 0.0
    %vm3718 = vcmp.gt.f32.partialorder %v3590, 0.0
    %vm3719 = vcmp.gt.f32.partialorder %v3591, 0.0
    %vm3720 = vcmp.gt.f32.partialorder %v3592, 0.0
    %vm3721 = vcmp.gt.f32.partialorder %v3593, 0.0
    %vm3722 = vcmp.gt.f32.partialorder %v3594, 0.0
    %vm3723 = vcmp.gt.f32.partialorder %v3595, 0.0
    %vm3724 = vcmp.gt.f32.partialorder %v3596, 0.0
    %vm3725 = vcmp.gt.f32.partialorder %v3597, 0.0
    %vm3726 = vcmp.gt.f32.partialorder %v3598, 0.0
    %vm3727 = vcmp.gt.f32.partialorder %v3599, 0.0
    %vm3728 = vcmp.gt.f32.partialorder %v3600, 0.0
    %vm3729 = vcmp.gt.f32.partialorder %v3601, 0.0
    %vm3730 = vcmp.gt.f32.partialorder %v3602, 0.0
    %vm3731 = vcmp.gt.f32.partialorder %v3603, 0.0
    %vm3732 = vcmp.gt.f32.partialorder %v3604, 0.0
    %vm3733 = vcmp.gt.f32.partialorder %v3605, 0.0
    %vm3734 = vcmp.gt.f32.partialorder %v3606, 0.0
    %vm3735 = vcmp.gt.f32.partialorder %v3607, 0.0
    %vm3736 = vcmp.gt.f32.partialorder %v3608, 0.0
    %vm3737 = vcmp.gt.f32.partialorder %v3609, 0.0
    %vm3738 = vcmp.gt.f32.partialorder %v3610, 0.0
    %vm3739 = vcmp.gt.f32.partialorder %v3611, 0.0
    %vm3740 = vcmp.gt.f32.partialorder %v3612, 0.0
    %vm3741 = vcmp.gt.f32.partialorder %v3613, 0.0
    %vm3742 = vcmp.gt.f32.partialorder %v3614, 0.0
    %vm3743 = vcmp.gt.f32.partialorder %v3615, 0.0
    %vm3744 = vcmp.gt.f32.partialorder %v3616, 0.0
    %vm3745 = vcmp.gt.f32.partialorder %v3617, 0.0
    %vm3746 = vcmp.gt.f32.partialorder %v3618, 0.0
    %vm3747 = vcmp.gt.f32.partialorder %v3619, 0.0
    %vm3748 = vcmp.gt.f32.partialorder %v3620, 0.0
    %vm3749 = vcmp.gt.f32.partialorder %v3621, 0.0
    %vm3750 = vcmp.gt.f32.partialorder %v3622, 0.0
    %vm3751 = vcmp.gt.f32.partialorder %v3623, 0.0
    %vm3752 = vcmp.gt.f32.partialorder %v3624, 0.0
    %vm3753 = vcmp.gt.f32.partialorder %v3625, 0.0
    %vm3754 = vcmp.gt.f32.partialorder %v3626, 0.0
    %vm3755 = vcmp.gt.f32.partialorder %v3627, 0.0
    %vm3756 = vcmp.gt.f32.partialorder %v3628, 0.0
    %vm3757 = vcmp.gt.f32.partialorder %v3629, 0.0
    %vm3758 = vcmp.gt.f32.partialorder %v3630, 0.0
    %v3759 = vmul.f32 %v3503, 0.2
    %v3760 = vmul.f32 %v3504, 0.2
    %v3761 = vmul.f32 %v3505, 0.2
    %v3762 = vmul.f32 %v3506, 0.2
    %v3763 = vmul.f32 %v3507, 0.2
    %v3764 = vmul.f32 %v3508, 0.2
    %v3765 = vmul.f32 %v3509, 0.2
    %v3766 = vmul.f32 %v3510, 0.2
    %v3767 = vmul.f32 %v3511, 0.2
    %v3768 = vmul.f32 %v3512, 0.2
    %v3769 = vmul.f32 %v3513, 0.2
    %v3770 = vmul.f32 %v3514, 0.2
    %v3771 = vmul.f32 %v3515, 0.2
    %v3772 = vmul.f32 %v3516, 0.2
    %v3773 = vmul.f32 %v3517, 0.2
    %v3774 = vmul.f32 %v3518, 0.2
    %v3775 = vmul.f32 %v3519, 0.2
    %v3776 = vmul.f32 %v3520, 0.2
    %v3777 = vmul.f32 %v3521, 0.2
    %v3778 = vmul.f32 %v3522, 0.2
    %v3779 = vmul.f32 %v3523, 0.2
    %v3780 = vmul.f32 %v3524, 0.2
    %v3781 = vmul.f32 %v3525, 0.2
    %v3782 = vmul.f32 %v3526, 0.2
    %v3783 = vmul.f32 %v3527, 0.2
    %v3784 = vmul.f32 %v3528, 0.2
    %v3785 = vmul.f32 %v3529, 0.2
    %v3786 = vmul.f32 %v3530, 0.2
    %v3787 = vmul.f32 %v3531, 0.2
    %v3788 = vmul.f32 %v3532, 0.2
    %v3789 = vmul.f32 %v3533, 0.2
    %v3790 = vmul.f32 %v3534, 0.2
    %v3791 = vmul.f32 %v3535, 0.2
    %v3792 = vmul.f32 %v3536, 0.2
    %v3793 = vmul.f32 %v3537, 0.2
    %v3794 = vmul.f32 %v3538, 0.2
    %v3795 = vmul.f32 %v3539, 0.2
    %v3796 = vmul.f32 %v3540, 0.2
    %v3797 = vmul.f32 %v3541, 0.2
    %v3798 = vmul.f32 %v3542, 0.2
    %v3799 = vmul.f32 %v3543, 0.2
    %v3800 = vmul.f32 %v3544, 0.2
    %v3801 = vmul.f32 %v3545, 0.2
    %v3802 = vmul.f32 %v3546, 0.2
    %v3803 = vmul.f32 %v3547, 0.2
    %v3804 = vmul.f32 %v3548, 0.2
    %v3805 = vmul.f32 %v3549, 0.2
    %v3806 = vmul.f32 %v3550, 0.2
    %v3807 = vmul.f32 %v3551, 0.2
    %v3808 = vmul.f32 %v3552, 0.2
    %v3809 = vmul.f32 %v3553, 0.2
    %v3810 = vmul.f32 %v3554, 0.2
    %v3811 = vmul.f32 %v3555, 0.2
    %v3812 = vmul.f32 %v3556, 0.2
    %v3813 = vmul.f32 %v3557, 0.2
    %v3814 = vmul.f32 %v3558, 0.2
    %v3815 = vmul.f32 %v3559, 0.2
    %v3816 = vmul.f32 %v3560, 0.2
    %v3817 = vmul.f32 %v3561, 0.2
    %v3818 = vmul.f32 %v3562, 0.2
    %v3819 = vmul.f32 %v3563, 0.2
    %v3820 = vmul.f32 %v3564, 0.2
    %v3821 = vmul.f32 %v3565, 0.2
    %v3822 = vmul.f32 %v3566, 0.2
    %v3823 = vmul.f32 %v3567, 0.2
    %v3824 = vmul.f32 %v3568, 0.2
    %v3825 = vmul.f32 %v3569, 0.2
    %v3826 = vmul.f32 %v3570, 0.2
    %v3827 = vmul.f32 %v3571, 0.2
    %v3828 = vmul.f32 %v3572, 0.2
    %v3829 = vmul.f32 %v3573, 0.2
    %v3830 = vmul.f32 %v3574, 0.2
    %v3831 = vmul.f32 %v3575, 0.2
    %v3832 = vmul.f32 %v3576, 0.2
    %v3833 = vmul.f32 %v3577, 0.2
    %v3834 = vmul.f32 %v3578, 0.2
    %v3835 = vmul.f32 %v3579, 0.2
    %v3836 = vmul.f32 %v3580, 0.2
    %v3837 = vmul.f32 %v3581, 0.2
    %v3838 = vmul.f32 %v3582, 0.2
    %v3839 = vmul.f32 %v3583, 0.2
    %v3840 = vmul.f32 %v3584, 0.2
    %v3841 = vmul.f32 %v3585, 0.2
    %v3842 = vmul.f32 %v3586, 0.2
    %v3843 = vmul.f32 %v3587, 0.2
    %v3844 = vmul.f32 %v3588, 0.2
    %v3845 = vmul.f32 %v3589, 0.2
    %v3846 = vmul.f32 %v3590, 0.2
    %v3847 = vmul.f32 %v3591, 0.2
    %v3848 = vmul.f32 %v3592, 0.2
    %v3849 = vmul.f32 %v3593, 0.2
    %v3850 = vmul.f32 %v3594, 0.2
    %v3851 = vmul.f32 %v3595, 0.2
    %v3852 = vmul.f32 %v3596, 0.2
    %v3853 = vmul.f32 %v3597, 0.2
    %v3854 = vmul.f32 %v3598, 0.2
    %v3855 = vmul.f32 %v3599, 0.2
    %v3856 = vmul.f32 %v3600, 0.2
    %v3857 = vmul.f32 %v3601, 0.2
    %v3858 = vmul.f32 %v3602, 0.2
    %v3859 = vmul.f32 %v3603, 0.2
    %v3860 = vmul.f32 %v3604, 0.2
    %v3861 = vmul.f32 %v3605, 0.2
    %v3862 = vmul.f32 %v3606, 0.2
    %v3863 = vmul.f32 %v3607, 0.2
    %v3864 = vmul.f32 %v3608, 0.2
    %v3865 = vmul.f32 %v3609, 0.2
    %v3866 = vmul.f32 %v3610, 0.2
    %v3867 = vmul.f32 %v3611, 0.2
    %v3868 = vmul.f32 %v3612, 0.2
    %v3869 = vmul.f32 %v3613, 0.2
    %v3870 = vmul.f32 %v3614, 0.2
    %v3871 = vmul.f32 %v3615, 0.2
    %v3872 = vmul.f32 %v3616, 0.2
    %v3873 = vmul.f32 %v3617, 0.2
    %v3874 = vmul.f32 %v3618, 0.2
    %v3875 = vmul.f32 %v3619, 0.2
    %v3876 = vmul.f32 %v3620, 0.2
    %v3877 = vmul.f32 %v3621, 0.2
    %v3878 = vmul.f32 %v3622, 0.2
    %v3879 = vmul.f32 %v3623, 0.2
    %v3880 = vmul.f32 %v3624, 0.2
    %v3881 = vmul.f32 %v3625, 0.2
    %v3882 = vmul.f32 %v3626, 0.2
    %v3883 = vmul.f32 %v3627, 0.2
    %v3884 = vmul.f32 %v3628, 0.2
    %v3885 = vmul.f32 %v3629, 0.2
    %v3886 = vmul.f32 %v3630, 0.2
    %v3887 = vsel %vm3631, %v3503, %v3759
    %v3888 = vsel %vm3632, %v3504, %v3760
    %v3889 = vsel %vm3633, %v3505, %v3761
    %v3890 = vsel %vm3634, %v3506, %v3762
    %v3891 = vsel %vm3635, %v3507, %v3763
    %v3892 = vsel %vm3636, %v3508, %v3764
    %v3893 = vsel %vm3637, %v3509, %v3765
    %v3894 = vsel %vm3638, %v3510, %v3766
    %v3895 = vsel %vm3639, %v3511, %v3767
    %v3896 = vsel %vm3640, %v3512, %v3768
    %v3897 = vsel %vm3641, %v3513, %v3769
    %v3898 = vsel %vm3642, %v3514, %v3770
    %v3899 = vsel %vm3643, %v3515, %v3771
    %v3900 = vsel %vm3644, %v3516, %v3772
    %v3901 = vsel %vm3645, %v3517, %v3773
    %v3902 = vsel %vm3646, %v3518, %v3774
    %v3903 = vsel %vm3647, %v3519, %v3775
    %v3904 = vsel %vm3648, %v3520, %v3776
    %v3905 = vsel %vm3649, %v3521, %v3777
    %v3906 = vsel %vm3650, %v3522, %v3778
    %v3907 = vsel %vm3651, %v3523, %v3779
    %v3908 = vsel %vm3652, %v3524, %v3780
    %v3909 = vsel %vm3653, %v3525, %v3781
    %v3910 = vsel %vm3654, %v3526, %v3782
    %v3911 = vsel %vm3655, %v3527, %v3783
    %v3912 = vsel %vm3656, %v3528, %v3784
    %v3913 = vsel %vm3657, %v3529, %v3785
    %v3914 = vsel %vm3658, %v3530, %v3786
    %v3915 = vsel %vm3659, %v3531, %v3787
    %v3916 = vsel %vm3660, %v3532, %v3788
    %v3917 = vsel %vm3661, %v3533, %v3789
    %v3918 = vsel %vm3662, %v3534, %v3790
    %v3919 = vsel %vm3663, %v3535, %v3791
    %v3920 = vsel %vm3664, %v3536, %v3792
    %v3921 = vsel %vm3665, %v3537, %v3793
    %v3922 = vsel %vm3666, %v3538, %v3794
    %v3923 = vsel %vm3667, %v3539, %v3795
    %v3924 = vsel %vm3668, %v3540, %v3796
    %v3925 = vsel %vm3669, %v3541, %v3797
    %v3926 = vsel %vm3670, %v3542, %v3798
    %v3927 = vsel %vm3671, %v3543, %v3799
    %v3928 = vsel %vm3672, %v3544, %v3800
    %v3929 = vsel %vm3673, %v3545, %v3801
    %v3930 = vsel %vm3674, %v3546, %v3802
    %v3931 = vsel %vm3675, %v3547, %v3803
    %v3932 = vsel %vm3676, %v3548, %v3804
    %v3933 = vsel %vm3677, %v3549, %v3805
    %v3934 = vsel %vm3678, %v3550, %v3806
    %v3935 = vsel %vm3679, %v3551, %v3807
    %v3936 = vsel %vm3680, %v3552, %v3808
    %v3937 = vsel %vm3681, %v3553, %v3809
    %v3938 = vsel %vm3682, %v3554, %v3810
    %v3939 = vsel %vm3683, %v3555, %v3811
    %v3940 = vsel %vm3684, %v3556, %v3812
    %v3941 = vsel %vm3685, %v3557, %v3813
    %v3942 = vsel %vm3686, %v3558, %v3814
    %v3943 = vsel %vm3687, %v3559, %v3815
    %v3944 = vsel %vm3688, %v3560, %v3816
    %v3945 = vsel %vm3689, %v3561, %v3817
    %v3946 = vsel %vm3690, %v3562, %v3818
    %v3947 = vsel %vm3691, %v3563, %v3819
    %v3948 = vsel %vm3692, %v3564, %v3820
    %v3949 = vsel %vm3693, %v3565, %v3821
    %v3950 = vsel %vm3694, %v3566, %v3822
    %v3951 = vsel %vm3695, %v3567, %v3823
    %v3952 = vsel %vm3696, %v3568, %v3824
    %v3953 = vsel %vm3697, %v3569, %v3825
    %v3954 = vsel %vm3698, %v3570, %v3826
    %v3955 = vsel %vm3699, %v3571, %v3827
    %v3956 = vsel %vm3700, %v3572, %v3828
    %v3957 = vsel %vm3701, %v3573, %v3829
    %v3958 = vsel %vm3702, %v3574, %v3830
    %v3959 = vsel %vm3703, %v3575, %v3831
    %v3960 = vsel %vm3704, %v3576, %v3832
    %v3961 = vsel %vm3705, %v3577, %v3833
    %v3962 = vsel %vm3706, %v3578, %v3834
    %v3963 = vsel %vm3707, %v3579, %v3835
    %v3964 = vsel %vm3708, %v3580, %v3836
    %v3965 = vsel %vm3709, %v3581, %v3837
    %v3966 = vsel %vm3710, %v3582, %v3838
    %v3967 = vsel %vm3711, %v3583, %v3839
    %v3968 = vsel %vm3712, %v3584, %v3840
    %v3969 = vsel %vm3713, %v3585, %v3841
    %v3970 = vsel %vm3714, %v3586, %v3842
    %v3971 = vsel %vm3715, %v3587, %v3843
    %v3972 = vsel %vm3716, %v3588, %v3844
    %v3973 = vsel %vm3717, %v3589, %v3845
    %v3974 = vsel %vm3718, %v3590, %v3846
    %v3975 = vsel %vm3719, %v3591, %v3847
    %v3976 = vsel %vm3720, %v3592, %v3848
    %v3977 = vsel %vm3721, %v3593, %v3849
    %v3978 = vsel %vm3722, %v3594, %v3850
    %v3979 = vsel %vm3723, %v3595, %v3851
    %v3980 = vsel %vm3724, %v3596, %v3852
    %v3981 = vsel %vm3725, %v3597, %v3853
    %v3982 = vsel %vm3726, %v3598, %v3854
    %v3983 = vsel %vm3727, %v3599, %v3855
    %v3984 = vsel %vm3728, %v3600, %v3856
    %v3985 = vsel %vm3729, %v3601, %v3857
    %v3986 = vsel %vm3730, %v3602, %v3858
    %v3987 = vsel %vm3731, %v3603, %v3859
    %v3988 = vsel %vm3732, %v3604, %v3860
    %v3989 = vsel %vm3733, %v3605, %v3861
    %v3990 = vsel %vm3734, %v3606, %v3862
    %v3991 = vsel %vm3735, %v3607, %v3863
    %v3992 = vsel %vm3736, %v3608, %v3864
    %v3993 = vsel %vm3737, %v3609, %v3865
    %v3994 = vsel %vm3738, %v3610, %v3866
    %v3995 = vsel %vm3739, %v3611, %v3867
    %v3996 = vsel %vm3740, %v3612, %v3868
    %v3997 = vsel %vm3741, %v3613, %v3869
    %v3998 = vsel %vm3742, %v3614, %v3870
    %v3999 = vsel %vm3743, %v3615, %v3871
    %v4000 = vsel %vm3744, %v3616, %v3872
    %v4001 = vsel %vm3745, %v3617, %v3873
    %v4002 = vsel %vm3746, %v3618, %v3874
    %v4003 = vsel %vm3747, %v3619, %v3875
    %v4004 = vsel %vm3748, %v3620, %v3876
    %v4005 = vsel %vm3749, %v3621, %v3877
    %v4006 = vsel %vm3750, %v3622, %v3878
    %v4007 = vsel %vm3751, %v3623, %v3879
    %v4008 = vsel %vm3752, %v3624, %v3880
    %v4009 = vsel %vm3753, %v3625, %v3881
    %v4010 = vsel %vm3754, %v3626, %v3882
    %v4011 = vsel %vm3755, %v3627, %v3883
    %v4012 = vsel %vm3756, %v3628, %v3884
    %v4013 = vsel %vm3757, %v3629, %v3885
    %v4014 = vsel %vm3758, %v3630, %v3886
    %v4015 = vpack.c.bf16 %v3891, %v3887
    %v4016 = vpack.c.bf16 %v3892, %v3888
    %v4017 = vpack.c.bf16 %v3893, %v3889
    %v4018 = vpack.c.bf16 %v3894, %v3890
    %v4019 = vpack.c.bf16 %v3899, %v3895
    %v4020 = vpack.c.bf16 %v3900, %v3896
    %v4021 = vpack.c.bf16 %v3901, %v3897
    %v4022 = vpack.c.bf16 %v3902, %v3898
    %v4023 = vpack.c.bf16 %v3907, %v3903
    %v4024 = vpack.c.bf16 %v3908, %v3904
    %v4025 = vpack.c.bf16 %v3909, %v3905
    %v4026 = vpack.c.bf16 %v3910, %v3906
    %v4027 = vpack.c.bf16 %v3915, %v3911
    %v4028 = vpack.c.bf16 %v3916, %v3912
    %v4029 = vpack.c.bf16 %v3917, %v3913
    %v4030 = vpack.c.bf16 %v3918, %v3914
    %v4031 = vpack.c.bf16 %v3923, %v3919
    %v4032 = vpack.c.bf16 %v3924, %v3920
    %v4033 = vpack.c.bf16 %v3925, %v3921
    %v4034 = vpack.c.bf16 %v3926, %v3922
    %v4035 = vpack.c.bf16 %v3931, %v3927
    %v4036 = vpack.c.bf16 %v3932, %v3928
    %v4037 = vpack.c.bf16 %v3933, %v3929
    %v4038 = vpack.c.bf16 %v3934, %v3930
    %v4039 = vpack.c.bf16 %v3939, %v3935
    %v4040 = vpack.c.bf16 %v3940, %v3936
    %v4041 = vpack.c.bf16 %v3941, %v3937
    %v4042 = vpack.c.bf16 %v3942, %v3938
    %v4043 = vpack.c.bf16 %v3947, %v3943
    %v4044 = vpack.c.bf16 %v3948, %v3944
    %v4045 = vpack.c.bf16 %v3949, %v3945
    %v4046 = vpack.c.bf16 %v3950, %v3946
    %v4047 = vpack.c.bf16 %v3955, %v3951
    %v4048 = vpack.c.bf16 %v3956, %v3952
    %v4049 = vpack.c.bf16 %v3957, %v3953
    %v4050 = vpack.c.bf16 %v3958, %v3954
    %v4051 = vpack.c.bf16 %v3963, %v3959
    %v4052 = vpack.c.bf16 %v3964, %v3960
    %v4053 = vpack.c.bf16 %v3965, %v3961
    %v4054 = vpack.c.bf16 %v3966, %v3962
    %v4055 = vpack.c.bf16 %v3971, %v3967
    %v4056 = vpack.c.bf16 %v3972, %v3968
    %v4057 = vpack.c.bf16 %v3973, %v3969
    %v4058 = vpack.c.bf16 %v3974, %v3970
    %v4059 = vpack.c.bf16 %v3979, %v3975
    %v4060 = vpack.c.bf16 %v3980, %v3976
    %v4061 = vpack.c.bf16 %v3981, %v3977
    %v4062 = vpack.c.bf16 %v3982, %v3978
    %v4063 = vpack.c.bf16 %v3987, %v3983
    %v4064 = vpack.c.bf16 %v3988, %v3984
    %v4065 = vpack.c.bf16 %v3989, %v3985
    %v4066 = vpack.c.bf16 %v3990, %v3986
    %v4067 = vpack.c.bf16 %v3995, %v3991
    %v4068 = vpack.c.bf16 %v3996, %v3992
    %v4069 = vpack.c.bf16 %v3997, %v3993
    %v4070 = vpack.c.bf16 %v3998, %v3994
    %v4071 = vpack.c.bf16 %v4003, %v3999
    %v4072 = vpack.c.bf16 %v4004, %v4000
    %v4073 = vpack.c.bf16 %v4005, %v4001
    %v4074 = vpack.c.bf16 %v4006, %v4002
    %v4075 = vpack.c.bf16 %v4011, %v4007
    %v4076 = vpack.c.bf16 %v4012, %v4008
    %v4077 = vpack.c.bf16 %v4013, %v4009
    %v4078 = vpack.c.bf16 %v4014, %v4010
    %v4079 = vld [vmem:[#allocation6] sm:$0xf]
    %v4080 = vld [vmem:[#allocation6 + $0x4] sm:$0xf]
    %v4081 = vld [vmem:[#allocation6 + $0x8] sm:$0xf]
    %v4082 = vld [vmem:[#allocation6 + $0xc] sm:$0xf]
    %v4083 = vld [vmem:[#allocation6 + $0x10] sm:$0xf]
    %v4084 = vld [vmem:[#allocation6 + $0x14] sm:$0xf]
    %v4085 = vld [vmem:[#allocation6 + $0x18] sm:$0xf]
    %v4086 = vld [vmem:[#allocation6 + $0x1c] sm:$0xf]
    %v4087 = vld [vmem:[#allocation6 + $0x20] sm:$0xf]
    %v4088 = vld [vmem:[#allocation6 + $0x24] sm:$0xf]
    %v4089 = vld [vmem:[#allocation6 + $0x28] sm:$0xf]
    %v4090 = vld [vmem:[#allocation6 + $0x2c] sm:$0xf]
    %v4091 = vld [vmem:[#allocation6 + $0x30] sm:$0xf]
    %v4092 = vld [vmem:[#allocation6 + $0x34] sm:$0xf]
    %v4093 = vld [vmem:[#allocation6 + $0x38] sm:$0xf]
    %v4094 = vld [vmem:[#allocation6 + $0x3c] sm:$0xf]
    %v4095 = vld [vmem:[#allocation6 + $0x40] sm:$0xf]
    %v4096 = vld [vmem:[#allocation6 + $0x44] sm:$0xf]
    %v4097 = vld [vmem:[#allocation6 + $0x48] sm:$0xf]
    %v4098 = vld [vmem:[#allocation6 + $0x4c] sm:$0xf]
    %v4099 = vld [vmem:[#allocation6 + $0x50] sm:$0xf]
    %v4100 = vld [vmem:[#allocation6 + $0x54] sm:$0xf]
    %v4101 = vld [vmem:[#allocation6 + $0x58] sm:$0xf]
    %v4102 = vld [vmem:[#allocation6 + $0x5c] sm:$0xf]
    %v4103 = vld [vmem:[#allocation6 + $0x60] sm:$0xf]
    %v4104 = vld [vmem:[#allocation6 + $0x64] sm:$0xf]
    %v4105 = vld [vmem:[#allocation6 + $0x68] sm:$0xf]
    %v4106 = vld [vmem:[#allocation6 + $0x6c] sm:$0xf]
    %v4107 = vld [vmem:[#allocation6 + $0x70] sm:$0xf]
    %v4108 = vld [vmem:[#allocation6 + $0x74] sm:$0xf]
    %v4109 = vld [vmem:[#allocation6 + $0x78] sm:$0xf]
    %v4110 = vld [vmem:[#allocation6 + $0x7c] sm:$0xf]
    %v4111 = vld [vmem:[#allocation6 + $0x80] sm:$0xf]
    %v4112 = vld [vmem:[#allocation6 + $0x84] sm:$0xf]
    %v4113 = vld [vmem:[#allocation6 + $0x88] sm:$0xf]
    %v4114 = vld [vmem:[#allocation6 + $0x8c] sm:$0xf]
    %v4115 = vld [vmem:[#allocation6 + $0x90] sm:$0xf]
    %v4116 = vld [vmem:[#allocation6 + $0x94] sm:$0xf]
    %v4117 = vld [vmem:[#allocation6 + $0x98] sm:$0xf]
    %v4118 = vld [vmem:[#allocation6 + $0x9c] sm:$0xf]
    %v4119 = vld [vmem:[#allocation6 + $0xa0] sm:$0xf]
    %v4120 = vld [vmem:[#allocation6 + $0xa4] sm:$0xf]
    %v4121 = vld [vmem:[#allocation6 + $0xa8] sm:$0xf]
    %v4122 = vld [vmem:[#allocation6 + $0xac] sm:$0xf]
    %v4123 = vld [vmem:[#allocation6 + $0xb0] sm:$0xf]
    %v4124 = vld [vmem:[#allocation6 + $0xb4] sm:$0xf]
    %v4125 = vld [vmem:[#allocation6 + $0xb8] sm:$0xf]
    %v4126 = vld [vmem:[#allocation6 + $0xbc] sm:$0xf]
    %v4127 = vld [vmem:[#allocation6 + $0xc0] sm:$0xf]
    %v4128 = vld [vmem:[#allocation6 + $0xc4] sm:$0xf]
    %v4129 = vld [vmem:[#allocation6 + $0xc8] sm:$0xf]
    %v4130 = vld [vmem:[#allocation6 + $0xcc] sm:$0xf]
    %v4131 = vld [vmem:[#allocation6 + $0xd0] sm:$0xf]
    %v4132 = vld [vmem:[#allocation6 + $0xd4] sm:$0xf]
    %v4133 = vld [vmem:[#allocation6 + $0xd8] sm:$0xf]
    %v4134 = vld [vmem:[#allocation6 + $0xdc] sm:$0xf]
    %v4135 = vld [vmem:[#allocation6 + $0xe0] sm:$0xf]
    %v4136 = vld [vmem:[#allocation6 + $0xe4] sm:$0xf]
    %v4137 = vld [vmem:[#allocation6 + $0xe8] sm:$0xf]
    %v4138 = vld [vmem:[#allocation6 + $0xec] sm:$0xf]
    %v4139 = vld [vmem:[#allocation6 + $0xf0] sm:$0xf]
    %v4140 = vld [vmem:[#allocation6 + $0xf4] sm:$0xf]
    %v4141 = vld [vmem:[#allocation6 + $0xf8] sm:$0xf]
    %v4142 = vld [vmem:[#allocation6 + $0xfc] sm:$0xf]
    %v4143 = vld [vmem:[%s12] sm:$0x1]
    %v4145 = vperm.slane %v4143, 0
    %v4211 = vunpack.c.l.b16 %v4079
    %v4212 = vunpack.c.l.b16 %v4080
    %v4213 = vunpack.c.l.b16 %v4081
    %v4214 = vunpack.c.l.b16 %v4082
    %v4215 = vunpack.c.l.b16 %v4083
    %v4216 = vunpack.c.l.b16 %v4084
    %v4217 = vunpack.c.l.b16 %v4085
    %v4218 = vunpack.c.l.b16 %v4086
    %v4219 = vunpack.c.l.b16 %v4087
    %v4220 = vunpack.c.l.b16 %v4088
    %v4221 = vunpack.c.l.b16 %v4089
    %v4222 = vunpack.c.l.b16 %v4090
    %v4223 = vunpack.c.l.b16 %v4091
    %v4224 = vunpack.c.l.b16 %v4092
    %v4225 = vunpack.c.l.b16 %v4093
    %v4226 = vunpack.c.l.b16 %v4094
    %v4227 = vunpack.c.l.b16 %v4095
    %v4228 = vunpack.c.l.b16 %v4096
    %v4229 = vunpack.c.l.b16 %v4097
    %v4230 = vunpack.c.l.b16 %v4098
    %v4231 = vunpack.c.l.b16 %v4099
    %v4232 = vunpack.c.l.b16 %v4100
    %v4233 = vunpack.c.l.b16 %v4101
    %v4234 = vunpack.c.l.b16 %v4102
    %v4235 = vunpack.c.l.b16 %v4103
    %v4236 = vunpack.c.l.b16 %v4104
    %v4237 = vunpack.c.l.b16 %v4105
    %v4238 = vunpack.c.l.b16 %v4106
    %v4239 = vunpack.c.l.b16 %v4107
    %v4240 = vunpack.c.l.b16 %v4108
    %v4241 = vunpack.c.l.b16 %v4109
    %v4242 = vunpack.c.l.b16 %v4110
    %v4243 = vunpack.c.l.b16 %v4111
    %v4244 = vunpack.c.l.b16 %v4112
    %v4245 = vunpack.c.l.b16 %v4113
    %v4246 = vunpack.c.l.b16 %v4114
    %v4247 = vunpack.c.l.b16 %v4115
    %v4248 = vunpack.c.l.b16 %v4116
    %v4249 = vunpack.c.l.b16 %v4117
    %v4250 = vunpack.c.l.b16 %v4118
    %v4251 = vunpack.c.l.b16 %v4119
    %v4252 = vunpack.c.l.b16 %v4120
    %v4253 = vunpack.c.l.b16 %v4121
    %v4254 = vunpack.c.l.b16 %v4122
    %v4255 = vunpack.c.l.b16 %v4123
    %v4256 = vunpack.c.l.b16 %v4124
    %v4257 = vunpack.c.l.b16 %v4125
    %v4258 = vunpack.c.l.b16 %v4126
    %v4259 = vunpack.c.l.b16 %v4127
    %v4260 = vunpack.c.l.b16 %v4128
    %v4261 = vunpack.c.l.b16 %v4129
    %v4262 = vunpack.c.l.b16 %v4130
    %v4263 = vunpack.c.l.b16 %v4131
    %v4264 = vunpack.c.l.b16 %v4132
    %v4265 = vunpack.c.l.b16 %v4133
    %v4266 = vunpack.c.l.b16 %v4134
    %v4267 = vunpack.c.l.b16 %v4135
    %v4268 = vunpack.c.l.b16 %v4136
    %v4269 = vunpack.c.l.b16 %v4137
    %v4270 = vunpack.c.l.b16 %v4138
    %v4271 = vunpack.c.l.b16 %v4139
    %v4272 = vunpack.c.l.b16 %v4140
    %v4273 = vunpack.c.l.b16 %v4141
    %v4274 = vunpack.c.l.b16 %v4142
    %v4275 = vpack.c.b16 %v4212, %v4211
    %v4276 = vpack.c.b16 %v4214, %v4213
    %v4277 = vpack.c.b16 %v4216, %v4215
    %v4278 = vpack.c.b16 %v4218, %v4217
    %v4279 = vpack.c.b16 %v4220, %v4219
    %v4280 = vpack.c.b16 %v4222, %v4221
    %v4281 = vpack.c.b16 %v4224, %v4223
    %v4282 = vpack.c.b16 %v4226, %v4225
    %v4283 = vpack.c.b16 %v4228, %v4227
    %v4284 = vpack.c.b16 %v4230, %v4229
    %v4285 = vpack.c.b16 %v4232, %v4231
    %v4286 = vpack.c.b16 %v4234, %v4233
    %v4287 = vpack.c.b16 %v4236, %v4235
    %v4288 = vpack.c.b16 %v4238, %v4237
    %v4289 = vpack.c.b16 %v4240, %v4239
    %v4290 = vpack.c.b16 %v4242, %v4241
    %v4291 = vpack.c.b16 %v4244, %v4243
    %v4292 = vpack.c.b16 %v4246, %v4245
    %v4293 = vpack.c.b16 %v4248, %v4247
    %v4294 = vpack.c.b16 %v4250, %v4249
    %v4295 = vpack.c.b16 %v4252, %v4251
    %v4296 = vpack.c.b16 %v4254, %v4253
    %v4297 = vpack.c.b16 %v4256, %v4255
    %v4298 = vpack.c.b16 %v4258, %v4257
    %v4299 = vpack.c.b16 %v4260, %v4259
    %v4300 = vpack.c.b16 %v4262, %v4261
    %v4301 = vpack.c.b16 %v4264, %v4263
    %v4302 = vpack.c.b16 %v4266, %v4265
    %v4303 = vpack.c.b16 %v4268, %v4267
    %v4304 = vpack.c.b16 %v4270, %v4269
    %v4305 = vpack.c.b16 %v4272, %v4271
    %v4306 = vpack.c.b16 %v4274, %v4273
    %4339 = vmatpush.bf16.msra.mxu0 %v4282
    %4340 = vmatpush.bf16.msra.mxu0 %v4281
    %4341 = vmatpush.bf16.msra.mxu0 %v4280
    %4342 = vmatpush.bf16.msra.mxu0 %v4279
    %4343 = vmatpush.bf16.msra.mxu0 %v4278
    %4344 = vmatpush.bf16.msra.mxu0 %v4277
    %4345 = vmatpush.bf16.msra.mxu0 %v4276
    %4346 = vmatpush.bf16.msra.mxu0 %v4275
    %4347 = vmatmul.bf16.gmra.mxu0 %v4015
    %v4348 = vpop.f32.mrf.mxu0
    %v4349 = vadd.f32 %v4145, %v4348
    %v4350 = vpop.f32.mrf.mxu0
    %v4351 = vadd.f32 %v4145, %v4350
    %4352 = vmatmul.bf16.gmra.mxu0 %v4019
    %v4353 = vpop.f32.mrf.mxu0
    %v4354 = vadd.f32 %v4145, %v4353
    %v4355 = vpop.f32.mrf.mxu0
    %v4356 = vadd.f32 %v4145, %v4355
    %4357 = vmatmul.bf16.gmra.mxu0 %v4023
    %v4358 = vpop.f32.mrf.mxu0
    %v4359 = vadd.f32 %v4145, %v4358
    %v4360 = vpop.f32.mrf.mxu0
    %v4361 = vadd.f32 %v4145, %v4360
    %4362 = vmatmul.bf16.gmra.mxu0 %v4027
    %v4363 = vpop.f32.mrf.mxu0
    %v4364 = vadd.f32 %v4145, %v4363
    %v4365 = vpop.f32.mrf.mxu0
    %v4366 = vadd.f32 %v4145, %v4365
    %4367 = vmatmul.bf16.gmra.mxu0 %v4031
    %v4368 = vpop.f32.mrf.mxu0
    %v4369 = vadd.f32 %v4145, %v4368
    %v4370 = vpop.f32.mrf.mxu0
    %v4371 = vadd.f32 %v4145, %v4370
    %4372 = vmatmul.bf16.gmra.mxu0 %v4035
    %v4373 = vpop.f32.mrf.mxu0
    %v4374 = vadd.f32 %v4145, %v4373
    %v4375 = vpop.f32.mrf.mxu0
    %v4376 = vadd.f32 %v4145, %v4375
    %4377 = vmatmul.bf16.gmra.mxu0 %v4039
    %v4378 = vpop.f32.mrf.mxu0
    %v4379 = vadd.f32 %v4145, %v4378
    %v4380 = vpop.f32.mrf.mxu0
    %v4381 = vadd.f32 %v4145, %v4380
    %4382 = vmatmul.bf16.gmra.mxu0 %v4043
    %v4383 = vpop.f32.mrf.mxu0
    %v4384 = vadd.f32 %v4145, %v4383
    %v4385 = vpop.f32.mrf.mxu0
    %v4386 = vadd.f32 %v4145, %v4385
    %4387 = vmatmul.bf16.gmra.mxu0 %v4047
    %v4388 = vpop.f32.mrf.mxu0
    %v4389 = vadd.f32 %v4145, %v4388
    %v4390 = vpop.f32.mrf.mxu0
    %v4391 = vadd.f32 %v4145, %v4390
    %4392 = vmatmul.bf16.gmra.mxu0 %v4051
    %v4393 = vpop.f32.mrf.mxu0
    %v4394 = vadd.f32 %v4145, %v4393
    %v4395 = vpop.f32.mrf.mxu0
    %v4396 = vadd.f32 %v4145, %v4395
    %4397 = vmatmul.bf16.gmra.mxu0 %v4055
    %v4398 = vpop.f32.mrf.mxu0
    %v4399 = vadd.f32 %v4145, %v4398
    %v4400 = vpop.f32.mrf.mxu0
    %v4401 = vadd.f32 %v4145, %v4400
    %4402 = vmatmul.bf16.gmra.mxu0 %v4059
    %v4403 = vpop.f32.mrf.mxu0
    %v4404 = vadd.f32 %v4145, %v4403
    %v4405 = vpop.f32.mrf.mxu0
    %v4406 = vadd.f32 %v4145, %v4405
    %4407 = vmatmul.bf16.gmra.mxu0 %v4063
    %v4408 = vpop.f32.mrf.mxu0
    %v4409 = vadd.f32 %v4145, %v4408
    %v4410 = vpop.f32.mrf.mxu0
    %v4411 = vadd.f32 %v4145, %v4410
    %4412 = vmatmul.bf16.gmra.mxu0 %v4067
    %v4413 = vpop.f32.mrf.mxu0
    %v4414 = vadd.f32 %v4145, %v4413
    %v4415 = vpop.f32.mrf.mxu0
    %v4416 = vadd.f32 %v4145, %v4415
    %4417 = vmatmul.bf16.gmra.mxu0 %v4071
    %v4418 = vpop.f32.mrf.mxu0
    %v4419 = vadd.f32 %v4145, %v4418
    %v4420 = vpop.f32.mrf.mxu0
    %v4421 = vadd.f32 %v4145, %v4420
    %4422 = vmatmul.bf16.gmra.mxu0 %v4075
    %v4423 = vpop.f32.mrf.mxu0
    %v4424 = vadd.f32 %v4145, %v4423
    %v4425 = vpop.f32.mrf.mxu0
    %v4426 = vadd.f32 %v4145, %v4425
    %4427 = vdwg.mxu0
    %4428 = vmatpush.bf16.msra.mxu0 %v4290
    %4429 = vmatpush.bf16.msra.mxu0 %v4289
    %4430 = vmatpush.bf16.msra.mxu0 %v4288
    %4431 = vmatpush.bf16.msra.mxu0 %v4287
    %4432 = vmatpush.bf16.msra.mxu0 %v4286
    %4433 = vmatpush.bf16.msra.mxu0 %v4285
    %4434 = vmatpush.bf16.msra.mxu0 %v4284
    %4435 = vmatpush.bf16.msra.mxu0 %v4283
    %4436 = vmatmul.bf16.gmra.mxu0 %v4016
    %v4437 = vpop.f32.mrf.mxu0
    %v4438 = vadd.f32 %v4349, %v4437
    %v4439 = vpop.f32.mrf.mxu0
    %v4440 = vadd.f32 %v4351, %v4439
    %4441 = vmatmul.bf16.gmra.mxu0 %v4020
    %v4442 = vpop.f32.mrf.mxu0
    %v4443 = vadd.f32 %v4354, %v4442
    %v4444 = vpop.f32.mrf.mxu0
    %v4445 = vadd.f32 %v4356, %v4444
    %4446 = vmatmul.bf16.gmra.mxu0 %v4024
    %v4447 = vpop.f32.mrf.mxu0
    %v4448 = vadd.f32 %v4359, %v4447
    %v4449 = vpop.f32.mrf.mxu0
    %v4450 = vadd.f32 %v4361, %v4449
    %4451 = vmatmul.bf16.gmra.mxu0 %v4028
    %v4452 = vpop.f32.mrf.mxu0
    %v4453 = vadd.f32 %v4364, %v4452
    %v4454 = vpop.f32.mrf.mxu0
    %v4455 = vadd.f32 %v4366, %v4454
    %4456 = vmatmul.bf16.gmra.mxu0 %v4032
    %v4457 = vpop.f32.mrf.mxu0
    %v4458 = vadd.f32 %v4369, %v4457
    %v4459 = vpop.f32.mrf.mxu0
    %v4460 = vadd.f32 %v4371, %v4459
    %4461 = vmatmul.bf16.gmra.mxu0 %v4036
    %v4462 = vpop.f32.mrf.mxu0
    %v4463 = vadd.f32 %v4374, %v4462
    %v4464 = vpop.f32.mrf.mxu0
    %v4465 = vadd.f32 %v4376, %v4464
    %4466 = vmatmul.bf16.gmra.mxu0 %v4040
    %v4467 = vpop.f32.mrf.mxu0
    %v4468 = vadd.f32 %v4379, %v4467
    %v4469 = vpop.f32.mrf.mxu0
    %v4470 = vadd.f32 %v4381, %v4469
    %4471 = vmatmul.bf16.gmra.mxu0 %v4044
    %v4472 = vpop.f32.mrf.mxu0
    %v4473 = vadd.f32 %v4384, %v4472
    %v4474 = vpop.f32.mrf.mxu0
    %v4475 = vadd.f32 %v4386, %v4474
    %4476 = vmatmul.bf16.gmra.mxu0 %v4048
    %v4477 = vpop.f32.mrf.mxu0
    %v4478 = vadd.f32 %v4389, %v4477
    %v4479 = vpop.f32.mrf.mxu0
    %v4480 = vadd.f32 %v4391, %v4479
    %4481 = vmatmul.bf16.gmra.mxu0 %v4052
    %v4482 = vpop.f32.mrf.mxu0
    %v4483 = vadd.f32 %v4394, %v4482
    %v4484 = vpop.f32.mrf.mxu0
    %v4485 = vadd.f32 %v4396, %v4484
    %4486 = vmatmul.bf16.gmra.mxu0 %v4056
    %v4487 = vpop.f32.mrf.mxu0
    %v4488 = vadd.f32 %v4399, %v4487
    %v4489 = vpop.f32.mrf.mxu0
    %v4490 = vadd.f32 %v4401, %v4489
    %4491 = vmatmul.bf16.gmra.mxu0 %v4060
    %v4492 = vpop.f32.mrf.mxu0
    %v4493 = vadd.f32 %v4404, %v4492
    %v4494 = vpop.f32.mrf.mxu0
    %v4495 = vadd.f32 %v4406, %v4494
    %4496 = vmatmul.bf16.gmra.mxu0 %v4064
    %v4497 = vpop.f32.mrf.mxu0
    %v4498 = vadd.f32 %v4409, %v4497
    %v4499 = vpop.f32.mrf.mxu0
    %v4500 = vadd.f32 %v4411, %v4499
    %4501 = vmatmul.bf16.gmra.mxu0 %v4068
    %v4502 = vpop.f32.mrf.mxu0
    %v4503 = vadd.f32 %v4414, %v4502
    %v4504 = vpop.f32.mrf.mxu0
    %v4505 = vadd.f32 %v4416, %v4504
    %4506 = vmatmul.bf16.gmra.mxu0 %v4072
    %v4507 = vpop.f32.mrf.mxu0
    %v4508 = vadd.f32 %v4419, %v4507
    %v4509 = vpop.f32.mrf.mxu0
    %v4510 = vadd.f32 %v4421, %v4509
    %4511 = vmatmul.bf16.gmra.mxu0 %v4076
    %v4512 = vpop.f32.mrf.mxu0
    %v4513 = vadd.f32 %v4424, %v4512
    %v4514 = vpop.f32.mrf.mxu0
    %v4515 = vadd.f32 %v4426, %v4514
    %4516 = vdwg.mxu0
    %4517 = vmatpush.bf16.msra.mxu0 %v4298
    %4518 = vmatpush.bf16.msra.mxu0 %v4297
    %4519 = vmatpush.bf16.msra.mxu0 %v4296
    %4520 = vmatpush.bf16.msra.mxu0 %v4295
    %4521 = vmatpush.bf16.msra.mxu0 %v4294
    %4522 = vmatpush.bf16.msra.mxu0 %v4293
    %4523 = vmatpush.bf16.msra.mxu0 %v4292
    %4524 = vmatpush.bf16.msra.mxu0 %v4291
    %4525 = vmatmul.bf16.gmra.mxu0 %v4017
    %v4526 = vpop.f32.mrf.mxu0
    %v4527 = vadd.f32 %v4438, %v4526
    %v4528 = vpop.f32.mrf.mxu0
    %v4529 = vadd.f32 %v4440, %v4528
    %4530 = vmatmul.bf16.gmra.mxu0 %v4021
    %v4531 = vpop.f32.mrf.mxu0
    %v4532 = vadd.f32 %v4443, %v4531
    %v4533 = vpop.f32.mrf.mxu0
    %v4534 = vadd.f32 %v4445, %v4533
    %4535 = vmatmul.bf16.gmra.mxu0 %v4025
    %v4536 = vpop.f32.mrf.mxu0
    %v4537 = vadd.f32 %v4448, %v4536
    %v4538 = vpop.f32.mrf.mxu0
    %v4539 = vadd.f32 %v4450, %v4538
    %4540 = vmatmul.bf16.gmra.mxu0 %v4029
    %v4541 = vpop.f32.mrf.mxu0
    %v4542 = vadd.f32 %v4453, %v4541
    %v4543 = vpop.f32.mrf.mxu0
    %v4544 = vadd.f32 %v4455, %v4543
    %4545 = vmatmul.bf16.gmra.mxu0 %v4033
    %v4546 = vpop.f32.mrf.mxu0
    %v4547 = vadd.f32 %v4458, %v4546
    %v4548 = vpop.f32.mrf.mxu0
    %v4549 = vadd.f32 %v4460, %v4548
    %4550 = vmatmul.bf16.gmra.mxu0 %v4037
    %v4551 = vpop.f32.mrf.mxu0
    %v4552 = vadd.f32 %v4463, %v4551
    %v4553 = vpop.f32.mrf.mxu0
    %v4554 = vadd.f32 %v4465, %v4553
    %4555 = vmatmul.bf16.gmra.mxu0 %v4041
    %v4556 = vpop.f32.mrf.mxu0
    %v4557 = vadd.f32 %v4468, %v4556
    %v4558 = vpop.f32.mrf.mxu0
    %v4559 = vadd.f32 %v4470, %v4558
    %4560 = vmatmul.bf16.gmra.mxu0 %v4045
    %v4561 = vpop.f32.mrf.mxu0
    %v4562 = vadd.f32 %v4473, %v4561
    %v4563 = vpop.f32.mrf.mxu0
    %v4564 = vadd.f32 %v4475, %v4563
    %4565 = vmatmul.bf16.gmra.mxu0 %v4049
    %v4566 = vpop.f32.mrf.mxu0
    %v4567 = vadd.f32 %v4478, %v4566
    %v4568 = vpop.f32.mrf.mxu0
    %v4569 = vadd.f32 %v4480, %v4568
    %4570 = vmatmul.bf16.gmra.mxu0 %v4053
    %v4571 = vpop.f32.mrf.mxu0
    %v4572 = vadd.f32 %v4483, %v4571
    %v4573 = vpop.f32.mrf.mxu0
    %v4574 = vadd.f32 %v4485, %v4573
    %4575 = vmatmul.bf16.gmra.mxu0 %v4057
    %v4576 = vpop.f32.mrf.mxu0
    %v4577 = vadd.f32 %v4488, %v4576
    %v4578 = vpop.f32.mrf.mxu0
    %v4579 = vadd.f32 %v4490, %v4578
    %4580 = vmatmul.bf16.gmra.mxu0 %v4061
    %v4581 = vpop.f32.mrf.mxu0
    %v4582 = vadd.f32 %v4493, %v4581
    %v4583 = vpop.f32.mrf.mxu0
    %v4584 = vadd.f32 %v4495, %v4583
    %4585 = vmatmul.bf16.gmra.mxu0 %v4065
    %v4586 = vpop.f32.mrf.mxu0
    %v4587 = vadd.f32 %v4498, %v4586
    %v4588 = vpop.f32.mrf.mxu0
    %v4589 = vadd.f32 %v4500, %v4588
    %4590 = vmatmul.bf16.gmra.mxu0 %v4069
    %v4591 = vpop.f32.mrf.mxu0
    %v4592 = vadd.f32 %v4503, %v4591
    %v4593 = vpop.f32.mrf.mxu0
    %v4594 = vadd.f32 %v4505, %v4593
    %4595 = vmatmul.bf16.gmra.mxu0 %v4073
    %v4596 = vpop.f32.mrf.mxu0
    %v4597 = vadd.f32 %v4508, %v4596
    %v4598 = vpop.f32.mrf.mxu0
    %v4599 = vadd.f32 %v4510, %v4598
    %4600 = vmatmul.bf16.gmra.mxu0 %v4077
    %v4601 = vpop.f32.mrf.mxu0
    %v4602 = vadd.f32 %v4513, %v4601
    %v4603 = vpop.f32.mrf.mxu0
    %v4604 = vadd.f32 %v4515, %v4603
    %4605 = vdwg.mxu0
    %4606 = vmatpush.bf16.msra.mxu0 %v4306
    %4607 = vmatpush.bf16.msra.mxu0 %v4305
    %4608 = vmatpush.bf16.msra.mxu0 %v4304
    %4609 = vmatpush.bf16.msra.mxu0 %v4303
    %4610 = vmatpush.bf16.msra.mxu0 %v4302
    %4611 = vmatpush.bf16.msra.mxu0 %v4301
    %4612 = vmatpush.bf16.msra.mxu0 %v4300
    %4613 = vmatpush.bf16.msra.mxu0 %v4299
    %4614 = vmatmul.bf16.gmra.mxu0 %v4018
    %v4615 = vpop.f32.mrf.mxu0
    %v4616 = vadd.f32 %v4527, %v4615
    %v4617 = vpop.f32.mrf.mxu0
    %v4618 = vadd.f32 %v4529, %v4617
    %4619 = vmatmul.bf16.gmra.mxu0 %v4022
    %v4620 = vpop.f32.mrf.mxu0
    %v4621 = vadd.f32 %v4532, %v4620
    %v4622 = vpop.f32.mrf.mxu0
    %v4623 = vadd.f32 %v4534, %v4622
    %4624 = vmatmul.bf16.gmra.mxu0 %v4026
    %v4625 = vpop.f32.mrf.mxu0
    %v4626 = vadd.f32 %v4537, %v4625
    %v4627 = vpop.f32.mrf.mxu0
    %v4628 = vadd.f32 %v4539, %v4627
    %4629 = vmatmul.bf16.gmra.mxu0 %v4030
    %v4630 = vpop.f32.mrf.mxu0
    %v4631 = vadd.f32 %v4542, %v4630
    %v4632 = vpop.f32.mrf.mxu0
    %v4633 = vadd.f32 %v4544, %v4632
    %4634 = vmatmul.bf16.gmra.mxu0 %v4034
    %v4635 = vpop.f32.mrf.mxu0
    %v4636 = vadd.f32 %v4547, %v4635
    %v4637 = vpop.f32.mrf.mxu0
    %v4638 = vadd.f32 %v4549, %v4637
    %4639 = vmatmul.bf16.gmra.mxu0 %v4038
    %v4640 = vpop.f32.mrf.mxu0
    %v4641 = vadd.f32 %v4552, %v4640
    %v4642 = vpop.f32.mrf.mxu0
    %v4643 = vadd.f32 %v4554, %v4642
    %4644 = vmatmul.bf16.gmra.mxu0 %v4042
    %v4645 = vpop.f32.mrf.mxu0
    %v4646 = vadd.f32 %v4557, %v4645
    %v4647 = vpop.f32.mrf.mxu0
    %v4648 = vadd.f32 %v4559, %v4647
    %4649 = vmatmul.bf16.gmra.mxu0 %v4046
    %v4650 = vpop.f32.mrf.mxu0
    %v4651 = vadd.f32 %v4562, %v4650
    %v4652 = vpop.f32.mrf.mxu0
    %v4653 = vadd.f32 %v4564, %v4652
    %4654 = vmatmul.bf16.gmra.mxu0 %v4050
    %v4655 = vpop.f32.mrf.mxu0
    %v4656 = vadd.f32 %v4567, %v4655
    %v4657 = vpop.f32.mrf.mxu0
    %v4658 = vadd.f32 %v4569, %v4657
    %4659 = vmatmul.bf16.gmra.mxu0 %v4054
    %v4660 = vpop.f32.mrf.mxu0
    %v4661 = vadd.f32 %v4572, %v4660
    %v4662 = vpop.f32.mrf.mxu0
    %v4663 = vadd.f32 %v4574, %v4662
    %4664 = vmatmul.bf16.gmra.mxu0 %v4058
    %v4665 = vpop.f32.mrf.mxu0
    %v4666 = vadd.f32 %v4577, %v4665
    %v4667 = vpop.f32.mrf.mxu0
    %v4668 = vadd.f32 %v4579, %v4667
    %4669 = vmatmul.bf16.gmra.mxu0 %v4062
    %v4670 = vpop.f32.mrf.mxu0
    %v4671 = vadd.f32 %v4582, %v4670
    %v4672 = vpop.f32.mrf.mxu0
    %v4673 = vadd.f32 %v4584, %v4672
    %4674 = vmatmul.bf16.gmra.mxu0 %v4066
    %v4675 = vpop.f32.mrf.mxu0
    %v4676 = vadd.f32 %v4587, %v4675
    %v4677 = vpop.f32.mrf.mxu0
    %v4678 = vadd.f32 %v4589, %v4677
    %4679 = vmatmul.bf16.gmra.mxu0 %v4070
    %v4680 = vpop.f32.mrf.mxu0
    %v4681 = vadd.f32 %v4592, %v4680
    %v4682 = vpop.f32.mrf.mxu0
    %v4683 = vadd.f32 %v4594, %v4682
    %4684 = vmatmul.bf16.gmra.mxu0 %v4074
    %v4685 = vpop.f32.mrf.mxu0
    %v4686 = vadd.f32 %v4597, %v4685
    %v4687 = vpop.f32.mrf.mxu0
    %v4688 = vadd.f32 %v4599, %v4687
    %4689 = vmatmul.bf16.gmra.mxu0 %v4078
    %v4690 = vpop.f32.mrf.mxu0
    %v4691 = vadd.f32 %v4602, %v4690
    %v4692 = vpop.f32.mrf.mxu0
    %v4693 = vadd.f32 %v4604, %v4692
    %4694 = vdwg.mxu0
    %v4695 = vtanh.pop %v4616
    %v4696 = vtanh.pop %v4618
    %v4697 = vtanh.pop %v4621
    %v4698 = vtanh.pop %v4623
    %v4699 = vtanh.pop %v4626
    %v4700 = vtanh.pop %v4628
    %v4701 = vtanh.pop %v4631
    %v4702 = vtanh.pop %v4633
    %v4703 = vtanh.pop %v4636
    %v4704 = vtanh.pop %v4638
    %v4705 = vtanh.pop %v4641
    %v4706 = vtanh.pop %v4643
    %v4707 = vtanh.pop %v4646
    %v4708 = vtanh.pop %v4648
    %v4709 = vtanh.pop %v4651
    %v4710 = vtanh.pop %v4653
    %v4711 = vtanh.pop %v4656
    %v4712 = vtanh.pop %v4658
    %v4713 = vtanh.pop %v4661
    %v4714 = vtanh.pop %v4663
    %v4715 = vtanh.pop %v4666
    %v4716 = vtanh.pop %v4668
    %v4717 = vtanh.pop %v4671
    %v4718 = vtanh.pop %v4673
    %v4719 = vtanh.pop %v4676
    %v4720 = vtanh.pop %v4678
    %v4721 = vtanh.pop %v4681
    %v4722 = vtanh.pop %v4683
    %v4723 = vtanh.pop %v4686
    %v4724 = vtanh.pop %v4688
    %v4725 = vtanh.pop %v4691
    %v4726 = vtanh.pop %v4693
    %4727 = vst [vmem:[%s13] sm:$0xff] %v4695
    %4728 = vst [vmem:[%s13 + $0x8] sm:$0xff] %v4696
    %4729 = vst [vmem:[%s13 + $0x10] sm:$0xff] %v4697
    %4730 = vst [vmem:[%s13 + $0x18] sm:$0xff] %v4698
    %4731 = vst [vmem:[%s13 + $0x20] sm:$0xff] %v4699
    %4732 = vst [vmem:[%s13 + $0x28] sm:$0xff] %v4700
    %4733 = vst [vmem:[%s13 + $0x30] sm:$0xff] %v4701
    %4734 = vst [vmem:[%s13 + $0x38] sm:$0xff] %v4702
    %4735 = vst [vmem:[%s13 + $0x40] sm:$0xff] %v4703
    %4736 = vst [vmem:[%s13 + $0x48] sm:$0xff] %v4704
    %4737 = vst [vmem:[%s13 + $0x50] sm:$0xff] %v4705
    %4738 = vst [vmem:[%s13 + $0x58] sm:$0xff] %v4706
    %4739 = vst [vmem:[%s13 + $0x60] sm:$0xff] %v4707
    %4740 = vst [vmem:[%s13 + $0x68] sm:$0xff] %v4708
    %4741 = vst [vmem:[%s13 + $0x70] sm:$0xff] %v4709
    %4742 = vst [vmem:[%s13 + $0x78] sm:$0xff] %v4710
    %4743 = vst [vmem:[%s13 + $0x80] sm:$0xff] %v4711
    %4744 = vst [vmem:[%s13 + $0x88] sm:$0xff] %v4712
    %4745 = vst [vmem:[%s13 + $0x90] sm:$0xff] %v4713
    %4746 = vst [vmem:[%s13 + $0x98] sm:$0xff] %v4714
    %4747 = vst [vmem:[%s13 + $0xa0] sm:$0xff] %v4715
    %4748 = vst [vmem:[%s13 + $0xa8] sm:$0xff] %v4716
    %4749 = vst [vmem:[%s13 + $0xb0] sm:$0xff] %v4717
    %4750 = vst [vmem:[%s13 + $0xb8] sm:$0xff] %v4718
    %4751 = vst [vmem:[%s13 + $0xc0] sm:$0xff] %v4719
    %4752 = vst [vmem:[%s13 + $0xc8] sm:$0xff] %v4720
    %4753 = vst [vmem:[%s13 + $0xd0] sm:$0xff] %v4721
    %4754 = vst [vmem:[%s13 + $0xd8] sm:$0xff] %v4722
    %4755 = vst [vmem:[%s13 + $0xe0] sm:$0xff] %v4723
    %4756 = vst [vmem:[%s13 + $0xe8] sm:$0xff] %v4724
    %4757 = vst [vmem:[%s13 + $0xf0] sm:$0xff] %v4725
    %4758 = vst [vmem:[%s13 + $0xf8] sm:$0xff] %v4726
    // Predicated region
    $region66: #{generator_forward.1} parent=1 // pred_check
      _
    $region67: #{generator_forward.1} parent=1 // pred_check_branch
      %4760 = sbr.rel (0) target = $region69
    $region68: #{generator_forward.1} parent=1 // pred_region
      _
    $region69: #{generator_forward.1} parent=1 // pred_fallthru
      _
    // Predicated region
    $region70: #{generator_forward.1} parent=1 // pred_check
      _
    $region71: #{generator_forward.1} parent=1 // pred_check_branch
      %4762 = sbr.rel (0) target = $region73
    $region72: #{generator_forward.1} parent=1 // pred_region
      _
    $region73: #{generator_forward.1} parent=1 // pred_fallthru
      _
    %4763 = vsyncpa [#allocation3], 1
    %4764 = vsyncpa [#allocation5], 1

</llo_original>
